<compile_context>
chip_gen: v7x
topology: tpu7x:2x2x1
jax: 0.10.0
libtpu: 0.0.40
codegen_flags: <defaults>
</compile_context>

<pallas_src>
import numpy as np
import jax
import jax.numpy as jnp
from jax.experimental import pallas as pl
from jax.experimental.pallas import tpu as pltpu


def _sigmoid_f32(x):
    # exp and the approximate reciprocal both route to the EUP slot (VALU-free);
    # ~1-2 ULP error, absorbed by the verification tolerance.
    return pl.reciprocal(1.0 + jnp.exp(-x), approx=True)


def _row_norm_unbiased(v):
    """(v - mean) / std with torch-style unbiased std (ddof=1), f32 math."""
    feat = v.shape[-1]
    mean = jnp.mean(v, axis=-1, keepdims=True)
    c = v - mean
    var = jnp.sum(c * c, axis=-1, keepdims=True) * (1.0 / (feat - 1))
    return c * jax.lax.rsqrt(var)           # rsqrt -> EUP, no divide


def _fusion_kernel(x_ref, y_ref, in_ref,
                   w1_ref, w2_ref, w3_ref,
                   w4x_ref, w4y_ref, b4_ref,
                   w5_ref, b5_ref, w6_ref, b6_ref,
                   out_ref):
    wdt = w1_ref.dtype          # MXU input dtype (bf16 weights -> full rate)
    f32 = jnp.float32

    # --- squeeze / excite branch -------------------------------------------
    xy1 = jnp.dot(in_ref[...].astype(wdt), w1_ref[...],
                  preferred_element_type=f32)
    xy1 = jnp.maximum(xy1, 0.0).astype(wdt)                      # relu
    xy2 = _sigmoid_f32(jnp.dot(xy1, w2_ref[...], preferred_element_type=f32))
    xy3 = _sigmoid_f32(jnp.dot(xy1, w3_ref[...], preferred_element_type=f32))

    # --- gated + row-normalized features (f32 elementwise) ------------------
    xl = _row_norm_unbiased(x_ref[...].astype(f32) * xy2)
    yl = _row_norm_unbiased(y_ref[...].astype(f32) * xy3)

    # --- MLP head: concat removed by splitting W4 row-wise ------------------
    h = jnp.dot(xl.astype(wdt), w4x_ref[...], preferred_element_type=f32)
    h = h + jnp.dot(yl.astype(wdt), w4y_ref[...], preferred_element_type=f32)
    h = jnp.maximum(h + b4_ref[...].astype(f32), 0.0)

    h = jnp.dot(h.astype(wdt), w5_ref[...], preferred_element_type=f32)
    h = jnp.maximum(h + b5_ref[...].astype(f32), 0.0)

    o = jnp.dot(h.astype(wdt), w6_ref[...], preferred_element_type=f32)
    out_ref[...] = _sigmoid_f32(o + b6_ref[...].astype(f32)).astype(out_ref.dtype)


def fusion_forward(x, y, inputs, params, *, block_b=512,
                   compute_dtype=jnp.bfloat16, out_dtype=None):
    """Fused forward pass.

    params (all weights pre-transposed to [in_features, out_features]):
      w1: (2F, 2F//red)        fc1, no bias
      w2: (2F//red, F)         fc2, no bias
      w3: (2F//red, F)         fc3, no bias
      w4: (2F, H), b4: (H,)    mlp layer 0
      w5: (H,  H), b5: (H,)    mlp layer 2
      w6: (H, out), b6: (out,) mlp layer 4
    """
    w1, w2, w3 = params["w1"], params["w2"], params["w3"]
    w4, b4 = params["w4"], params["b4"]
    w5, b5 = params["w5"], params["b5"]
    w6, b6 = params["w6"], params["b6"]

    B, F = x.shape
    assert y.shape == (B, F) and inputs.shape == (B, 2 * F)
    assert w1.shape[0] == 2 * F and w4.shape[0] == 2 * F
    out_feat = w6.shape[1]
    out_dtype = out_dtype or x.dtype

    # --- bandwidth: stream batch tensors / weights in compute_dtype ---------
    x_c, y_c, in_c = (a.astype(compute_dtype) for a in (x, y, inputs))
    w1, w2, w3, w4, w5, w6 = (w.astype(compute_dtype)
                              for w in (w1, w2, w3, w4, w5, w6))
    b4, b5, b6 = (b.astype(jnp.float32) for b in (b4, b5, b6))  # tiny: keep f32

    # --- concat elimination: split the first MLP weight row-wise ------------
    w4x, w4y = w4[:F, :], w4[F:, :]

    # --- lane-dense xy1: zero-pad R = 2F/red up to a multiple of 128 --------
    # (zero W1 columns are exact through relu; zero W2/W3 rows add nothing)
    R = w1.shape[1]
    r_p = max(128, ((R + 127) // 128) * 128)
    if r_p != R:
        w1 = jnp.pad(w1, ((0, 0), (0, r_p - R)))
        w2 = jnp.pad(w2, ((0, r_p - R), (0, 0)))
        w3 = jnp.pad(w3, ((0, r_p - R), (0, 0)))

    # --- lane-dense output stores: pad out_feat up to a multiple of 128 -----
    out_p = max(128, ((out_feat + 127) // 128) * 128)
    if out_p != out_feat:
        w6 = jnp.pad(w6, ((0, 0), (0, out_p - out_feat)))
        b6 = jnp.pad(b6, ((0, out_p - out_feat),))

    # Biases as (1, N) rows for clean VMEM broadcast.
    b4r, b5r, b6r = (b.reshape(1, -1) for b in (b4, b5, b6))

    # --- grid: no batch padding; ragged last tile is handled by Pallas ------
    block_b = min(block_b, max(128, ((B + 7) // 8) * 8))
    # v7x megacore: ensure at least 2 batch tiles so both TensorCores get work.
    while block_b > 128 and pl.cdiv(B, block_b) < 2:
        block_b //= 2
    grid = (pl.cdiv(B, block_b),)

    # --- VMEM budget (everything, incl. resident weights, is double-buffered)
    csize = jnp.dtype(compute_dtype).itemsize
    osize = jnp.dtype(out_dtype).itemsize
    weight_bytes = sum(int(np.prod(a.shape)) * a.dtype.itemsize
                       for a in (w1, w2, w3, w4x, w4y, b4r, w5, b5r, w6, b6r))
    stream_bytes = block_b * (4 * F) * csize + block_b * out_p * osize
    vmem_needed = 2 * (weight_bytes + stream_bytes)
    vmem_limit = int(min(max(2 * vmem_needed, 32 << 20), 64 << 20))

    resident = lambda i: (0, 0)                      # weights: DMA'd once
    batch_tiled = lambda nfeat: pl.BlockSpec((block_b, nfeat), lambda i: (i, 0))

    out = pl.pallas_call(
        _fusion_kernel,
        out_shape=jax.ShapeDtypeStruct((B, out_p), out_dtype),
        grid=grid,
        in_specs=[
            batch_tiled(F),                        # x
            batch_tiled(F),                        # y
            batch_tiled(2 * F),                    # inputs
            pl.BlockSpec(w1.shape, resident),      # W1 (R lane-padded)
            pl.BlockSpec(w2.shape, resident),      # W2
            pl.BlockSpec(w3.shape, resident),      # W3
            pl.BlockSpec(w4x.shape, resident),     # W4x
            pl.BlockSpec(w4y.shape, resident),     # W4y
            pl.BlockSpec(b4r.shape, resident),     # b4
            pl.BlockSpec(w5.shape, resident),      # W5
            pl.BlockSpec(b5r.shape, resident),     # b5
            pl.BlockSpec(w6.shape, resident),      # W6 (lane-padded)
            pl.BlockSpec(b6r.shape, resident),     # b6 (lane-padded)
        ],
        out_specs=batch_tiled(out_p),
        compiler_params=pltpu.CompilerParams(
            dimension_semantics=("parallel",),     # v7x megacore split
            vmem_limit_bytes=vmem_limit),
    )(x_c, y_c, in_c, w1, w2, w3, w4x, w4y, b4r, w5, b5r, w6, b6r)

    # Only the lane padding remains to strip (no batch padding any more).
    return out if out_p == out_feat else out[:, :out_feat]


def fusion_reference(x, y, inputs, params):
    """Pure-JAX reference matching the PyTorch module semantics (f32)."""
    w1, w2, w3 = params["w1"], params["w2"], params["w3"]
    w4, b4, w5, b5, w6, b6 = (params[k] for k in
                              ("w4", "b4", "w5", "b5", "w6", "b6"))
    xy1 = jax.nn.relu(inputs @ w1)
    xy2 = jax.nn.sigmoid(xy1 @ w2)
    xy3 = jax.nn.sigmoid(xy1 @ w3)

    def norm(v):
        m = jnp.mean(v, axis=1, keepdims=True)
        s = jnp.std(v, axis=1, keepdims=True, ddof=1)   # torch std is unbiased
        return (v - m) / s

    xl = norm(x * xy2)
    yl = norm(y * xy3)
    xyl = jnp.concatenate([xl, yl], axis=1)
    h = jax.nn.relu(xyl @ w4 + b4)
    h = jax.nn.relu(h @ w5 + b5)
    return jax.nn.sigmoid(h @ w6 + b6)


if __name__ == "__main__":
    # Small but tile-friendly shapes consistent with fusion(infeats, hid, out).
    B, F, H, OUT, RED = 256, 256, 128, 64, 16
    R = 2 * F // RED      # = 32, lane-padded to 128 inside the wrapper

    key = jax.random.PRNGKey(0)
    ks = jax.random.split(key, 12)
    f32 = jnp.float32

    x = jax.random.normal(ks[0], (B, F), f32)
    y = jax.random.normal(ks[1], (B, F), f32)
    inputs = jax.random.normal(ks[2], (B, 2 * F), f32)

    def w(k, shape):
        return jax.random.normal(k, shape, f32) * 0.05

    params = dict(
        w1=w(ks[3], (2 * F, R)),
        w2=w(ks[4], (R, F)),
        w3=w(ks[5], (R, F)),
        w4=w(ks[6], (2 * F, H)), b4=w(ks[7], (H,)),
        w5=w(ks[8], (H, H)),     b5=w(ks[9], (H,)),
        w6=w(ks[10], (H, OUT)),  b6=w(ks[11], (OUT,)),
    )

    # Demo: block_b=128 so the B=256 batch splits into 2 tiles (one per v7x
    # TensorCore); use the default block_b=512 (or 1024) at production sizes.
    out = fusion_forward(x, y, inputs, params, block_b=128)
    out = jax.block_until_ready(out)

    ref = fusion_reference(x, y, inputs, params)
    # bf16 input/weight streams (f32 accumulate) -> slightly looser tolerance.
    np.testing.assert_allclose(np.asarray(out, dtype=np.float32),
                               np.asarray(ref), rtol=2e-2, atol=2e-2)
    print("KERNEL_OK")
</pallas_src>

<mosaic_0001>
module attributes {stable_mosaic.version = 11 : i64} {
  func.func @_fusion_kernel(%arg0: i32, %arg1: memref<128x256xbf16, #tpu.memory_space<vmem>>, %arg2: memref<128x256xbf16, #tpu.memory_space<vmem>>, %arg3: memref<128x512xbf16, #tpu.memory_space<vmem>>, %arg4: memref<512x128xbf16, #tpu.memory_space<vmem>>, %arg5: memref<128x256xbf16, #tpu.memory_space<vmem>>, %arg6: memref<128x256xbf16, #tpu.memory_space<vmem>>, %arg7: memref<256x128xbf16, #tpu.memory_space<vmem>>, %arg8: memref<256x128xbf16, #tpu.memory_space<vmem>>, %arg9: memref<1x128xf32, #tpu.memory_space<vmem>>, %arg10: memref<128x128xbf16, #tpu.memory_space<vmem>>, %arg11: memref<1x128xf32, #tpu.memory_space<vmem>>, %arg12: memref<128x128xbf16, #tpu.memory_space<vmem>>, %arg13: memref<1x128xf32, #tpu.memory_space<vmem>>, %arg14: memref<128x128xf32, #tpu.memory_space<vmem>>) attributes {dimension_semantics = [#tpu.dimension_semantics<parallel>], iteration_bounds = array<i64: 2>, scalar_prefetch = 0 : i64, scratch_operands = 0 : i64, tpu.core_type = #tpu.core_type<tc>, window_params = [{transform_indices = @transform_0, window_bounds = array<i64: 128, 256>}, {transform_indices = @transform_1, window_bounds = array<i64: 128, 256>}, {transform_indices = @transform_2, window_bounds = array<i64: 128, 512>}, {pipeline_mode = #tpu.pipeline_mode<synchronous>, transform_indices = @transform_3, window_bounds = array<i64: 512, 128>}, {pipeline_mode = #tpu.pipeline_mode<synchronous>, transform_indices = @transform_4, window_bounds = array<i64: 128, 256>}, {pipeline_mode = #tpu.pipeline_mode<synchronous>, transform_indices = @transform_5, window_bounds = array<i64: 128, 256>}, {pipeline_mode = #tpu.pipeline_mode<synchronous>, transform_indices = @transform_6, window_bounds = array<i64: 256, 128>}, {pipeline_mode = #tpu.pipeline_mode<synchronous>, transform_indices = @transform_7, window_bounds = array<i64: 256, 128>}, {pipeline_mode = #tpu.pipeline_mode<synchronous>, transform_indices = @transform_8, window_bounds = array<i64: 1, 128>}, {pipeline_mode = #tpu.pipeline_mode<synchronous>, transform_indices = @transform_9, window_bounds = array<i64: 128, 128>}, {pipeline_mode = #tpu.pipeline_mode<synchronous>, transform_indices = @transform_10, window_bounds = array<i64: 1, 128>}, {pipeline_mode = #tpu.pipeline_mode<synchronous>, transform_indices = @transform_11, window_bounds = array<i64: 128, 128>}, {pipeline_mode = #tpu.pipeline_mode<synchronous>, transform_indices = @transform_12, window_bounds = array<i64: 1, 128>}, {transform_indices = @transform_13, window_bounds = array<i64: 128, 128>}]} {
    %c0 = arith.constant 0 : index
    %c0_0 = arith.constant 0 : index
    %0 = vector.load %arg3[%c0, %c0_0] : memref<128x512xbf16, #tpu.memory_space<vmem>>, vector<128x512xbf16>
    %c0_1 = arith.constant 0 : index
    %c0_2 = arith.constant 0 : index
    %1 = vector.load %arg4[%c0_1, %c0_2] : memref<512x128xbf16, #tpu.memory_space<vmem>>, vector<512x128xbf16>
    %cst = arith.constant dense<0.000000e+00> : vector<128x128xf32>
    %2 = tpu.matmul %0, %1, %cst {dimension_numbers = #tpu.dot_dimension_numbers<[1], [0], [0], [1], [0, 0, 1, 1], [], []>} : vector<128x512xbf16>, vector<512x128xbf16>, vector<128x128xf32> -> vector<128x128xf32>
    %cst_3 = arith.constant 0.000000e+00 : f32
    %3 = vector.broadcast %cst_3 : f32 to vector<128x128xf32>
    %4 = arith.maximumf %2, %3 : vector<128x128xf32>
    %5 = arith.truncf %4 : vector<128x128xf32> to vector<128x128xbf16>
    %c0_4 = arith.constant 0 : index
    %c0_5 = arith.constant 0 : index
    %6 = vector.load %arg5[%c0_4, %c0_5] : memref<128x256xbf16, #tpu.memory_space<vmem>>, vector<128x256xbf16>
    %cst_6 = arith.constant dense<0.000000e+00> : vector<128x256xf32>
    %7 = tpu.matmul %5, %6, %cst_6 {dimension_numbers = #tpu.dot_dimension_numbers<[1], [0], [0], [1], [0, 0, 1, 1], [], []>} : vector<128x128xbf16>, vector<128x256xbf16>, vector<128x256xf32> -> vector<128x256xf32>
    %cst_7 = arith.constant 0.000000e+00 : f32
    %8 = vector.broadcast %cst_7 : f32 to vector<128x256xf32>
    %9 = arith.subf %8, %7 : vector<128x256xf32>
    %10 = math.exp %9 : vector<128x256xf32>
    %cst_8 = arith.constant 1.000000e+00 : f32
    %11 = vector.broadcast %cst_8 : f32 to vector<128x256xf32>
    %12 = arith.addf %11, %10 : vector<128x256xf32>
    %13 = tpu.reciprocal %12 {approx = true} : vector<128x256xf32> -> vector<128x256xf32>
    %c0_9 = arith.constant 0 : index
    %c0_10 = arith.constant 0 : index
    %14 = vector.load %arg6[%c0_9, %c0_10] : memref<128x256xbf16, #tpu.memory_space<vmem>>, vector<128x256xbf16>
    %cst_11 = arith.constant dense<0.000000e+00> : vector<128x256xf32>
    %15 = tpu.matmul %5, %14, %cst_11 {dimension_numbers = #tpu.dot_dimension_numbers<[1], [0], [0], [1], [0, 0, 1, 1], [], []>} : vector<128x128xbf16>, vector<128x256xbf16>, vector<128x256xf32> -> vector<128x256xf32>
    %cst_12 = arith.constant 0.000000e+00 : f32
    %16 = vector.broadcast %cst_12 : f32 to vector<128x256xf32>
    %17 = arith.subf %16, %15 : vector<128x256xf32>
    %18 = math.exp %17 : vector<128x256xf32>
    %cst_13 = arith.constant 1.000000e+00 : f32
    %19 = vector.broadcast %cst_13 : f32 to vector<128x256xf32>
    %20 = arith.addf %19, %18 : vector<128x256xf32>
    %21 = tpu.reciprocal %20 {approx = true} : vector<128x256xf32> -> vector<128x256xf32>
    %c0_14 = arith.constant 0 : index
    %c0_15 = arith.constant 0 : index
    %22 = vector.load %arg1[%c0_14, %c0_15] : memref<128x256xbf16, #tpu.memory_space<vmem>>, vector<128x256xbf16>
    %23 = arith.extf %22 : vector<128x256xbf16> to vector<128x256xf32>
    %24 = arith.mulf %23, %13 : vector<128x256xf32>
    %cst_16 = arith.constant dense<0.000000e+00> : vector<128xf32>
    %25 = vector.multi_reduction <add>, %24, %cst_16 [1] : vector<128x256xf32> to vector<128xf32>
    %26 = vector.shape_cast %25 : vector<128xf32> to vector<128x1xf32>
    %cst_17 = arith.constant 2.560000e+02 : f32
    %27 = vector.broadcast %cst_17 : f32 to vector<128x1xf32>
    %28 = arith.divf %26, %27 : vector<128x1xf32>
    %29 = vector.broadcast %28 : vector<128x1xf32> to vector<128x256xf32>
    %30 = arith.subf %24, %29 : vector<128x256xf32>
    %31 = arith.mulf %30, %30 : vector<128x256xf32>
    %cst_18 = arith.constant dense<0.000000e+00> : vector<128xf32>
    %32 = vector.multi_reduction <add>, %31, %cst_18 [1] : vector<128x256xf32> to vector<128xf32>
    %33 = vector.shape_cast %32 : vector<128xf32> to vector<128x1xf32>
    %cst_19 = arith.constant 0.00392156886 : f32
    %34 = vector.broadcast %cst_19 : f32 to vector<128x1xf32>
    %35 = arith.mulf %33, %34 : vector<128x1xf32>
    %36 = math.rsqrt %35 : vector<128x1xf32>
    %37 = vector.broadcast %36 : vector<128x1xf32> to vector<128x256xf32>
    %38 = arith.mulf %30, %37 : vector<128x256xf32>
    %c0_20 = arith.constant 0 : index
    %c0_21 = arith.constant 0 : index
    %39 = vector.load %arg2[%c0_20, %c0_21] : memref<128x256xbf16, #tpu.memory_space<vmem>>, vector<128x256xbf16>
    %40 = arith.extf %39 : vector<128x256xbf16> to vector<128x256xf32>
    %41 = arith.mulf %40, %21 : vector<128x256xf32>
    %cst_22 = arith.constant dense<0.000000e+00> : vector<128xf32>
    %42 = vector.multi_reduction <add>, %41, %cst_22 [1] : vector<128x256xf32> to vector<128xf32>
    %43 = vector.shape_cast %42 : vector<128xf32> to vector<128x1xf32>
    %cst_23 = arith.constant 2.560000e+02 : f32
    %44 = vector.broadcast %cst_23 : f32 to vector<128x1xf32>
    %45 = arith.divf %43, %44 : vector<128x1xf32>
    %46 = vector.broadcast %45 : vector<128x1xf32> to vector<128x256xf32>
    %47 = arith.subf %41, %46 : vector<128x256xf32>
    %48 = arith.mulf %47, %47 : vector<128x256xf32>
    %cst_24 = arith.constant dense<0.000000e+00> : vector<128xf32>
    %49 = vector.multi_reduction <add>, %48, %cst_24 [1] : vector<128x256xf32> to vector<128xf32>
    %50 = vector.shape_cast %49 : vector<128xf32> to vector<128x1xf32>
    %cst_25 = arith.constant 0.00392156886 : f32
    %51 = vector.broadcast %cst_25 : f32 to vector<128x1xf32>
    %52 = arith.mulf %50, %51 : vector<128x1xf32>
    %53 = math.rsqrt %52 : vector<128x1xf32>
    %54 = vector.broadcast %53 : vector<128x1xf32> to vector<128x256xf32>
    %55 = arith.mulf %47, %54 : vector<128x256xf32>
    %56 = arith.truncf %38 : vector<128x256xf32> to vector<128x256xbf16>
    %c0_26 = arith.constant 0 : index
    %c0_27 = arith.constant 0 : index
    %57 = vector.load %arg7[%c0_26, %c0_27] : memref<256x128xbf16, #tpu.memory_space<vmem>>, vector<256x128xbf16>
    %cst_28 = arith.constant dense<0.000000e+00> : vector<128x128xf32>
    %58 = tpu.matmul %56, %57, %cst_28 {dimension_numbers = #tpu.dot_dimension_numbers<[1], [0], [0], [1], [0, 0, 1, 1], [], []>} : vector<128x256xbf16>, vector<256x128xbf16>, vector<128x128xf32> -> vector<128x128xf32>
    %59 = arith.truncf %55 : vector<128x256xf32> to vector<128x256xbf16>
    %c0_29 = arith.constant 0 : index
    %c0_30 = arith.constant 0 : index
    %60 = vector.load %arg8[%c0_29, %c0_30] : memref<256x128xbf16, #tpu.memory_space<vmem>>, vector<256x128xbf16>
    %cst_31 = arith.constant dense<0.000000e+00> : vector<128x128xf32>
    %61 = tpu.matmul %59, %60, %cst_31 {dimension_numbers = #tpu.dot_dimension_numbers<[1], [0], [0], [1], [0, 0, 1, 1], [], []>} : vector<128x256xbf16>, vector<256x128xbf16>, vector<128x128xf32> -> vector<128x128xf32>
    %62 = arith.addf %58, %61 : vector<128x128xf32>
    %c0_32 = arith.constant 0 : index
    %c0_33 = arith.constant 0 : index
    %63 = vector.load %arg9[%c0_32, %c0_33] : memref<1x128xf32, #tpu.memory_space<vmem>>, vector<1x128xf32>
    %64 = vector.broadcast %63 : vector<1x128xf32> to vector<128x128xf32>
    %65 = arith.addf %62, %64 : vector<128x128xf32>
    %cst_34 = arith.constant 0.000000e+00 : f32
    %66 = vector.broadcast %cst_34 : f32 to vector<128x128xf32>
    %67 = arith.maximumf %65, %66 : vector<128x128xf32>
    %68 = arith.truncf %67 : vector<128x128xf32> to vector<128x128xbf16>
    %c0_35 = arith.constant 0 : index
    %c0_36 = arith.constant 0 : index
    %69 = vector.load %arg10[%c0_35, %c0_36] : memref<128x128xbf16, #tpu.memory_space<vmem>>, vector<128x128xbf16>
    %cst_37 = arith.constant dense<0.000000e+00> : vector<128x128xf32>
    %70 = tpu.matmul %68, %69, %cst_37 {dimension_numbers = #tpu.dot_dimension_numbers<[1], [0], [0], [1], [0, 0, 1, 1], [], []>} : vector<128x128xbf16>, vector<128x128xbf16>, vector<128x128xf32> -> vector<128x128xf32>
    %c0_38 = arith.constant 0 : index
    %c0_39 = arith.constant 0 : index
    %71 = vector.load %arg11[%c0_38, %c0_39] : memref<1x128xf32, #tpu.memory_space<vmem>>, vector<1x128xf32>
    %72 = vector.broadcast %71 : vector<1x128xf32> to vector<128x128xf32>
    %73 = arith.addf %70, %72 : vector<128x128xf32>
    %cst_40 = arith.constant 0.000000e+00 : f32
    %74 = vector.broadcast %cst_40 : f32 to vector<128x128xf32>
    %75 = arith.maximumf %73, %74 : vector<128x128xf32>
    %76 = arith.truncf %75 : vector<128x128xf32> to vector<128x128xbf16>
    %c0_41 = arith.constant 0 : index
    %c0_42 = arith.constant 0 : index
    %77 = vector.load %arg12[%c0_41, %c0_42] : memref<128x128xbf16, #tpu.memory_space<vmem>>, vector<128x128xbf16>
    %cst_43 = arith.constant dense<0.000000e+00> : vector<128x128xf32>
    %78 = tpu.matmul %76, %77, %cst_43 {dimension_numbers = #tpu.dot_dimension_numbers<[1], [0], [0], [1], [0, 0, 1, 1], [], []>} : vector<128x128xbf16>, vector<128x128xbf16>, vector<128x128xf32> -> vector<128x128xf32>
    %c0_44 = arith.constant 0 : index
    %c0_45 = arith.constant 0 : index
    %79 = vector.load %arg13[%c0_44, %c0_45] : memref<1x128xf32, #tpu.memory_space<vmem>>, vector<1x128xf32>
    %80 = vector.broadcast %79 : vector<1x128xf32> to vector<128x128xf32>
    %81 = arith.addf %78, %80 : vector<128x128xf32>
    %cst_46 = arith.constant 0.000000e+00 : f32
    %82 = vector.broadcast %cst_46 : f32 to vector<128x128xf32>
    %83 = arith.subf %82, %81 : vector<128x128xf32>
    %84 = math.exp %83 : vector<128x128xf32>
    %cst_47 = arith.constant 1.000000e+00 : f32
    %85 = vector.broadcast %cst_47 : f32 to vector<128x128xf32>
    %86 = arith.addf %85, %84 : vector<128x128xf32>
    %87 = tpu.reciprocal %86 {approx = true} : vector<128x128xf32> -> vector<128x128xf32>
    %c0_48 = arith.constant 0 : index
    %c0_49 = arith.constant 0 : index
    %88 = vector.load %arg14[%c0_48, %c0_49] : memref<128x128xf32, #tpu.memory_space<vmem>>, vector<128x128xf32>
    tpu.vector_store %arg14[%c0_48, %c0_49], %87 {strides = array<i32>} : memref<128x128xf32, #tpu.memory_space<vmem>>, vector<128x128xf32>,
    return
  }
  func.func @transform_0(%arg0: i32) -> (i32, i32) {
    %c0_i32 = arith.constant 0 : i32
    %c0_i32_0 = arith.constant 0 : i32
    return %arg0, %c0_i32 : i32, i32
  }
  func.func @transform_1(%arg0: i32) -> (i32, i32) {
    %c0_i32 = arith.constant 0 : i32
    %c0_i32_0 = arith.constant 0 : i32
    return %arg0, %c0_i32 : i32, i32
  }
  func.func @transform_2(%arg0: i32) -> (i32, i32) {
    %c0_i32 = arith.constant 0 : i32
    %c0_i32_0 = arith.constant 0 : i32
    return %arg0, %c0_i32 : i32, i32
  }
  func.func @transform_3(%arg0: i32) -> (i32, i32) {
    %c0_i32 = arith.constant 0 : i32
    %c0_i32_0 = arith.constant 0 : i32
    %c0_i32_1 = arith.constant 0 : i32
    return %c0_i32, %c0_i32_0 : i32, i32
  }
  func.func @transform_4(%arg0: i32) -> (i32, i32) {
    %c0_i32 = arith.constant 0 : i32
    %c0_i32_0 = arith.constant 0 : i32
    %c0_i32_1 = arith.constant 0 : i32
    return %c0_i32, %c0_i32_0 : i32, i32
  }
  func.func @transform_5(%arg0: i32) -> (i32, i32) {
    %c0_i32 = arith.constant 0 : i32
    %c0_i32_0 = arith.constant 0 : i32
    %c0_i32_1 = arith.constant 0 : i32
    return %c0_i32, %c0_i32_0 : i32, i32
  }
  func.func @transform_6(%arg0: i32) -> (i32, i32) {
    %c0_i32 = arith.constant 0 : i32
    %c0_i32_0 = arith.constant 0 : i32
    %c0_i32_1 = arith.constant 0 : i32
    return %c0_i32, %c0_i32_0 : i32, i32
  }
  func.func @transform_7(%arg0: i32) -> (i32, i32) {
    %c0_i32 = arith.constant 0 : i32
    %c0_i32_0 = arith.constant 0 : i32
    %c0_i32_1 = arith.constant 0 : i32
    return %c0_i32, %c0_i32_0 : i32, i32
  }
  func.func @transform_8(%arg0: i32) -> (i32, i32) {
    %c0_i32 = arith.constant 0 : i32
    %c0_i32_0 = arith.constant 0 : i32
    %c0_i32_1 = arith.constant 0 : i32
    return %c0_i32, %c0_i32_0 : i32, i32
  }
  func.func @transform_9(%arg0: i32) -> (i32, i32) {
    %c0_i32 = arith.constant 0 : i32
    %c0_i32_0 = arith.constant 0 : i32
    %c0_i32_1 = arith.constant 0 : i32
    return %c0_i32, %c0_i32_0 : i32, i32
  }
  func.func @transform_10(%arg0: i32) -> (i32, i32) {
    %c0_i32 = arith.constant 0 : i32
    %c0_i32_0 = arith.constant 0 : i32
    %c0_i32_1 = arith.constant 0 : i32
    return %c0_i32, %c0_i32_0 : i32, i32
  }
  func.func @transform_11(%arg0: i32) -> (i32, i32) {
    %c0_i32 = arith.constant 0 : i32
    %c0_i32_0 = arith.constant 0 : i32
    %c0_i32_1 = arith.constant 0 : i32
    return %c0_i32, %c0_i32_0 : i32, i32
  }
  func.func @transform_12(%arg0: i32) -> (i32, i32) {
    %c0_i32 = arith.constant 0 : i32
    %c0_i32_0 = arith.constant 0 : i32
    %c0_i32_1 = arith.constant 0 : i32
    return %c0_i32, %c0_i32_0 : i32, i32
  }
  func.func @transform_13(%arg0: i32) -> (i32, i32) {
    %c0_i32 = arith.constant 0 : i32
    %c0_i32_0 = arith.constant 0 : i32
    return %arg0, %c0_i32 : i32, i32
  }
}

</mosaic_0001>

<llo_original>
// kernel: tpu_custom_call.1
$region0: #{tpu_custom_call.1}
  #allocation0 [shape = 'u32[]', space=smem, size = 0x4, offset = 0x4, fixed_abs, tag = 'smem constant byte address 0x4 - core index']
  #allocation1 [shape = 'u32[144,128]{1,0:T(1,128)}', space=vmem, size = 0x12000, scoped, tag = 'internal scratch']
  %s0 = inlined_call_operand.hbm [shape: bf16[256,256], index: 0, kind: input, shape index: {}]
  %s1 = inlined_call_operand.hbm [shape: bf16[256,256], index: 1, kind: input, shape index: {}]
  %s2 = inlined_call_operand.hbm [shape: bf16[256,512], index: 2, kind: input, shape index: {}]
  %s3 = inlined_call_operand.hbm [shape: bf16[512,128], index: 3, kind: input, shape index: {}]
  %s4 = inlined_call_operand.hbm [shape: bf16[128,256], index: 4, kind: input, shape index: {}]
  %s5 = inlined_call_operand.hbm [shape: bf16[128,256], index: 5, kind: input, shape index: {}]
  %s6 = inlined_call_operand.hbm [shape: bf16[256,128], index: 6, kind: input, shape index: {}]
  %s7 = inlined_call_operand.hbm [shape: bf16[256,128], index: 7, kind: input, shape index: {}]
  %s8 = inlined_call_operand.vmem [shape: f32[1,128], index: 8, kind: input, shape index: {}]
  %s9 = inlined_call_operand.hbm [shape: bf16[128,128], index: 9, kind: input, shape index: {}]
  %s10 = inlined_call_operand.vmem [shape: f32[1,128], index: 10, kind: input, shape index: {}]
  %s11 = inlined_call_operand.hbm [shape: bf16[128,128], index: 11, kind: input, shape index: {}]
  %s12 = inlined_call_operand.vmem [shape: f32[1,128], index: 12, kind: input, shape index: {}]
  %s13 = inlined_call_operand.hbm [shape: f32[256,128], index: 13, kind: output, shape index: {}]
  %s14 = sld [smem:[#allocation0]]
  $region125: #{tpu_custom_call.1} parent=0
    _
  %s16 = ssub.s32 1, %s14
  %s17 = scalar_select 0, %s16, %s14
  $region1: #{tpu_custom_call.1} parent=0
    #allocation2 [shape = 'u8[131072]{0}', space=vmem, size = 0x20000, scoped, tag = 'input window, operand 0']
    #allocation3 [shape = 's32[2]{0}', space=sflag, size = 0x8, scoped, tag = 'scoped memory for tpu_custom_call.1']
    #allocation4 [shape = 's32[2]{0}', space=sflag, size = 0x8, scoped, tag = 'scoped memory for tpu_custom_call.1']
    #allocation5 [shape = 'u8[131072]{0}', space=vmem, size = 0x20000, scoped, tag = 'input window, operand 1']
    #allocation6 [shape = 's32[2]{0}', space=sflag, size = 0x8, scoped, tag = 'scoped memory for tpu_custom_call.1']
    #allocation7 [shape = 'u8[262144]{0}', space=vmem, size = 0x40000, scoped, tag = 'input window, operand 2']
    #allocation8 [shape = 'u8[131072]{0}', space=vmem, size = 0x20000, scoped, tag = 'input window, operand 3, single buffered']
    #allocation9 [shape = 's32[1]{0}', space=sflag, size = 0x4, scoped, tag = 'scoped memory for tpu_custom_call.1']
    #allocation10 [shape = 'u8[65536]{0}', space=vmem, size = 0x10000, scoped, tag = 'input window, operand 4, single buffered']
    #allocation11 [shape = 'u8[65536]{0}', space=vmem, size = 0x10000, scoped, tag = 'input window, operand 5, single buffered']
    #allocation12 [shape = 's32[1]{0}', space=sflag, size = 0x4, scoped, tag = 'scoped memory for tpu_custom_call.1']
    #allocation13 [shape = 'u8[65536]{0}', space=vmem, size = 0x10000, scoped, tag = 'input window, operand 6, single buffered']
    #allocation14 [shape = 'u8[65536]{0}', space=vmem, size = 0x10000, scoped, tag = 'input window, operand 7, single buffered']
    #allocation15 [shape = 's32[1]{0}', space=sflag, size = 0x4, scoped, tag = 'scoped memory for tpu_custom_call.1']
    #allocation16 [shape = 'u8[32768]{0}', space=vmem, size = 0x8000, scoped, tag = 'input window, operand 9, single buffered']
    #allocation17 [shape = 'u8[32768]{0}', space=vmem, size = 0x8000, scoped, tag = 'input window, operand 11, single buffered']
    #allocation18 [shape = 's32[1]{0}', space=sflag, size = 0x4, scoped, tag = 'scoped memory for tpu_custom_call.1']
    #allocation19 [shape = 'u8[131072]{0}', space=vmem, size = 0x20000, scoped, tag = 'output window, operand 0']
    %18 = vsyncpa [#allocation3], 0
    %s19 = scalar_lea.sflag [#allocation3], 1
    %20 = vsyncpa %s19, 0
    %21 = vsyncpa [#allocation6], 0
    %s22 = scalar_lea.sflag [#allocation6], 1
    %23 = vsyncpa %s22, 0
    %24 = vsyncpa [#allocation9], 0
    %25 = vsyncpa [#allocation12], 0
    %26 = vsyncpa [#allocation15], 0
    %27 = vsyncpa [#allocation18], 0
    %28 = vsyncpa [#allocation4], 0
    %s29 = scalar_lea.sflag [#allocation4], 1
    %30 = vsyncpa %s29, 0
    loop: start=0, step=1, limit=4
    $region2: #{tpu_custom_call.1} parent=1 // loop_pre_header
      _
    $region3: #{tpu_custom_call.1} parent=1 // loop_header
      %s32 = sphi 0, %s36
      %p33 = scmp.ge.s32.totalorder %s32, 4
      %s42 = sphi 0, %s44
      %s45 = sphi 0, %s42
      %s46 = sphi 0, %s45
      %s62 = sphi 0, %s46
      %s68 = sphi 0, %s70
      %s71 = sphi 0, %s68
      %s72 = sphi 0, %s71
      %s88 = sphi 0, %s72
      %s94 = sphi 0, %s96
      %s97 = sphi 0, %s94
      %s98 = sphi 0, %s97
      %s114 = sphi 0, %s98
      %s118 = sphi 0, %s118
      %s120 = sphi 0, %s118
      %s121 = sphi 0, %s120
      %s135 = sphi 0, %s121
      %s139 = sphi 0, %s139
      %s141 = sphi 0, %s139
      %s142 = sphi 0, %s141
      %s156 = sphi 0, %s142
      %s160 = sphi 0, %s160
      %s162 = sphi 0, %s160
      %s163 = sphi 0, %s162
      %s177 = sphi 0, %s163
      %s181 = sphi 0, %s181
      %s183 = sphi 0, %s181
      %s184 = sphi 0, %s183
      %s198 = sphi 0, %s184
      %s202 = sphi 0, %s202
      %s204 = sphi 0, %s202
      %s205 = sphi 0, %s204
      %s219 = sphi 0, %s205
      %s223 = sphi 0, %s223
      %s225 = sphi 0, %s223
      %s226 = sphi 0, %s225
      %s240 = sphi 0, %s226
      %s244 = sphi 0, %s244
      %s246 = sphi 0, %s244
      %s247 = sphi 0, %s246
      %s261 = sphi 0, %s247
      %s265 = sphi 0, %s265
      %s267 = sphi 0, %s265
      %s268 = sphi 0, %s267
      %s282 = sphi 0, %s268
      %s286 = sphi 0, %s286
      %s288 = sphi 0, %s286
      %s289 = sphi 0, %s288
      %s303 = sphi 0, %s289
      %s307 = sphi 0, %s307
      %s309 = sphi 0, %s307
      %s310 = sphi 0, %s309
      %s324 = sphi 0, %s310
      %s330 = sphi 0, %s332
      %s333 = sphi 0, %s330
      %s334 = sphi 0, %s333
      %s350 = sphi 0, %s334
    $region4: #{tpu_custom_call.1} parent=1 // loop_header_branch
      %35 = sbr.rel (%p33) target = $region8
    $region5: #{tpu_custom_call.1} parent=1 // loop_body
      %s37 = ssub.s32 %s32, 1
      %s38 = ssub.s32 %s32, 2
      %s39 = sadd.s32 %s32, 1
      %s40 = ssub.s32 %s32, %s39
      %p41 = scmp.eq.s32.totalorder %s40, 0
      %s43 = sadd.s32 %s42, 1
      %s44 = scalar_select %p41, %s42, %s43
      %p47 = pneg %p41
      %p48 = scmp.eq.s32.totalorder %s32, 1
      %p49 = por %p47, %p48
      %p50 = scmp.ne.s32.totalorder %s42, %s45
      %p51 = scmp.eq.s32.totalorder %s32, 0
      %p52 = por %p50, %p51
      %p53 = scmp.ne.s32.totalorder %s42, %s45
      %p54 = scmp.eq.s32.totalorder %s37, 1
      %p55 = por %p53, %p54
      %p56 = scmp.ne.s32.totalorder %s45, %s46
      %p57 = scmp.eq.s32.totalorder %s37, 0
      %p58 = por %p56, %p57
      %p59 = scmp.ne.s32.totalorder %s45, %s46
      %p60 = scmp.eq.s32.totalorder %s38, 1
      %p61 = por %p59, %p60
      %p63 = scmp.ne.s32.totalorder %s46, %s62
      %p64 = scmp.eq.s32.totalorder %s38, 0
      %p65 = por %p63, %p64
      %s66 = ssub.s32 %s32, %s39
      %p67 = scmp.eq.s32.totalorder %s66, 0
      %s69 = sadd.s32 %s68, 1
      %s70 = scalar_select %p67, %s68, %s69
      %p73 = pneg %p67
      %p74 = scmp.eq.s32.totalorder %s32, 1
      %p75 = por %p73, %p74
      %p76 = scmp.ne.s32.totalorder %s68, %s71
      %p77 = scmp.eq.s32.totalorder %s32, 0
      %p78 = por %p76, %p77
      %p79 = scmp.ne.s32.totalorder %s68, %s71
      %p80 = scmp.eq.s32.totalorder %s37, 1
      %p81 = por %p79, %p80
      %p82 = scmp.ne.s32.totalorder %s71, %s72
      %p83 = scmp.eq.s32.totalorder %s37, 0
      %p84 = por %p82, %p83
      %p85 = scmp.ne.s32.totalorder %s71, %s72
      %p86 = scmp.eq.s32.totalorder %s38, 1
      %p87 = por %p85, %p86
      %p89 = scmp.ne.s32.totalorder %s72, %s88
      %p90 = scmp.eq.s32.totalorder %s38, 0
      %p91 = por %p89, %p90
      %s92 = ssub.s32 %s32, %s39
      %p93 = scmp.eq.s32.totalorder %s92, 0
      %s95 = sadd.s32 %s94, 1
      %s96 = scalar_select %p93, %s94, %s95
      %p99 = pneg %p93
      %p100 = scmp.eq.s32.totalorder %s32, 1
      %p101 = por %p99, %p100
      %p102 = scmp.ne.s32.totalorder %s94, %s97
      %p103 = scmp.eq.s32.totalorder %s32, 0
      %p104 = por %p102, %p103
      %p105 = scmp.ne.s32.totalorder %s94, %s97
      %p106 = scmp.eq.s32.totalorder %s37, 1
      %p107 = por %p105, %p106
      %p108 = scmp.ne.s32.totalorder %s97, %s98
      %p109 = scmp.eq.s32.totalorder %s37, 0
      %p110 = por %p108, %p109
      %p111 = scmp.ne.s32.totalorder %s97, %s98
      %p112 = scmp.eq.s32.totalorder %s38, 1
      %p113 = por %p111, %p112
      %p115 = scmp.ne.s32.totalorder %s98, %s114
      %p116 = scmp.eq.s32.totalorder %s38, 0
      %p117 = por %p115, %p116
      %s119 = sadd.s32 %s118, 1
      %p122 = scmp.eq.s32.totalorder %s32, 1
      %p123 = scmp.ne.s32.totalorder %s118, %s120
      %p124 = scmp.eq.s32.totalorder %s32, 0
      %p125 = por %p123, %p124
      %p126 = scmp.ne.s32.totalorder %s118, %s120
      %p127 = scmp.eq.s32.totalorder %s37, 1
      %p128 = por %p126, %p127
      %p129 = scmp.ne.s32.totalorder %s120, %s121
      %p130 = scmp.eq.s32.totalorder %s37, 0
      %p131 = por %p129, %p130
      %p132 = scmp.ne.s32.totalorder %s120, %s121
      %p133 = scmp.eq.s32.totalorder %s38, 1
      %p134 = por %p132, %p133
      %p136 = scmp.ne.s32.totalorder %s121, %s135
      %p137 = scmp.eq.s32.totalorder %s38, 0
      %p138 = por %p136, %p137
      %s140 = sadd.s32 %s139, 1
      %p143 = scmp.eq.s32.totalorder %s32, 1
      %p144 = scmp.ne.s32.totalorder %s139, %s141
      %p145 = scmp.eq.s32.totalorder %s32, 0
      %p146 = por %p144, %p145
      %p147 = scmp.ne.s32.totalorder %s139, %s141
      %p148 = scmp.eq.s32.totalorder %s37, 1
      %p149 = por %p147, %p148
      %p150 = scmp.ne.s32.totalorder %s141, %s142
      %p151 = scmp.eq.s32.totalorder %s37, 0
      %p152 = por %p150, %p151
      %p153 = scmp.ne.s32.totalorder %s141, %s142
      %p154 = scmp.eq.s32.totalorder %s38, 1
      %p155 = por %p153, %p154
      %p157 = scmp.ne.s32.totalorder %s142, %s156
      %p158 = scmp.eq.s32.totalorder %s38, 0
      %p159 = por %p157, %p158
      %s161 = sadd.s32 %s160, 1
      %p164 = scmp.eq.s32.totalorder %s32, 1
      %p165 = scmp.ne.s32.totalorder %s160, %s162
      %p166 = scmp.eq.s32.totalorder %s32, 0
      %p167 = por %p165, %p166
      %p168 = scmp.ne.s32.totalorder %s160, %s162
      %p169 = scmp.eq.s32.totalorder %s37, 1
      %p170 = por %p168, %p169
      %p171 = scmp.ne.s32.totalorder %s162, %s163
      %p172 = scmp.eq.s32.totalorder %s37, 0
      %p173 = por %p171, %p172
      %p174 = scmp.ne.s32.totalorder %s162, %s163
      %p175 = scmp.eq.s32.totalorder %s38, 1
      %p176 = por %p174, %p175
      %p178 = scmp.ne.s32.totalorder %s163, %s177
      %p179 = scmp.eq.s32.totalorder %s38, 0
      %p180 = por %p178, %p179
      %s182 = sadd.s32 %s181, 1
      %p185 = scmp.eq.s32.totalorder %s32, 1
      %p186 = scmp.ne.s32.totalorder %s181, %s183
      %p187 = scmp.eq.s32.totalorder %s32, 0
      %p188 = por %p186, %p187
      %p189 = scmp.ne.s32.totalorder %s181, %s183
      %p190 = scmp.eq.s32.totalorder %s37, 1
      %p191 = por %p189, %p190
      %p192 = scmp.ne.s32.totalorder %s183, %s184
      %p193 = scmp.eq.s32.totalorder %s37, 0
      %p194 = por %p192, %p193
      %p195 = scmp.ne.s32.totalorder %s183, %s184
      %p196 = scmp.eq.s32.totalorder %s38, 1
      %p197 = por %p195, %p196
      %p199 = scmp.ne.s32.totalorder %s184, %s198
      %p200 = scmp.eq.s32.totalorder %s38, 0
      %p201 = por %p199, %p200
      %s203 = sadd.s32 %s202, 1
      %p206 = scmp.eq.s32.totalorder %s32, 1
      %p207 = scmp.ne.s32.totalorder %s202, %s204
      %p208 = scmp.eq.s32.totalorder %s32, 0
      %p209 = por %p207, %p208
      %p210 = scmp.ne.s32.totalorder %s202, %s204
      %p211 = scmp.eq.s32.totalorder %s37, 1
      %p212 = por %p210, %p211
      %p213 = scmp.ne.s32.totalorder %s204, %s205
      %p214 = scmp.eq.s32.totalorder %s37, 0
      %p215 = por %p213, %p214
      %p216 = scmp.ne.s32.totalorder %s204, %s205
      %p217 = scmp.eq.s32.totalorder %s38, 1
      %p218 = por %p216, %p217
      %p220 = scmp.ne.s32.totalorder %s205, %s219
      %p221 = scmp.eq.s32.totalorder %s38, 0
      %p222 = por %p220, %p221
      %s224 = sadd.s32 %s223, 1
      %p227 = scmp.eq.s32.totalorder %s32, 1
      %p228 = scmp.ne.s32.totalorder %s223, %s225
      %p229 = scmp.eq.s32.totalorder %s32, 0
      %p230 = por %p228, %p229
      %p231 = scmp.ne.s32.totalorder %s223, %s225
      %p232 = scmp.eq.s32.totalorder %s37, 1
      %p233 = por %p231, %p232
      %p234 = scmp.ne.s32.totalorder %s225, %s226
      %p235 = scmp.eq.s32.totalorder %s37, 0
      %p236 = por %p234, %p235
      %p237 = scmp.ne.s32.totalorder %s225, %s226
      %p238 = scmp.eq.s32.totalorder %s38, 1
      %p239 = por %p237, %p238
      %p241 = scmp.ne.s32.totalorder %s226, %s240
      %p242 = scmp.eq.s32.totalorder %s38, 0
      %p243 = por %p241, %p242
      %s245 = sadd.s32 %s244, 1
      %p248 = scmp.eq.s32.totalorder %s32, 1
      %p249 = scmp.ne.s32.totalorder %s244, %s246
      %p250 = scmp.eq.s32.totalorder %s32, 0
      %p251 = por %p249, %p250
      %p252 = scmp.ne.s32.totalorder %s244, %s246
      %p253 = scmp.eq.s32.totalorder %s37, 1
      %p254 = por %p252, %p253
      %p255 = scmp.ne.s32.totalorder %s246, %s247
      %p256 = scmp.eq.s32.totalorder %s37, 0
      %p257 = por %p255, %p256
      %p258 = scmp.ne.s32.totalorder %s246, %s247
      %p259 = scmp.eq.s32.totalorder %s38, 1
      %p260 = por %p258, %p259
      %p262 = scmp.ne.s32.totalorder %s247, %s261
      %p263 = scmp.eq.s32.totalorder %s38, 0
      %p264 = por %p262, %p263
      %s266 = sadd.s32 %s265, 1
      %p269 = scmp.eq.s32.totalorder %s32, 1
      %p270 = scmp.ne.s32.totalorder %s265, %s267
      %p271 = scmp.eq.s32.totalorder %s32, 0
      %p272 = por %p270, %p271
      %p273 = scmp.ne.s32.totalorder %s265, %s267
      %p274 = scmp.eq.s32.totalorder %s37, 1
      %p275 = por %p273, %p274
      %p276 = scmp.ne.s32.totalorder %s267, %s268
      %p277 = scmp.eq.s32.totalorder %s37, 0
      %p278 = por %p276, %p277
      %p279 = scmp.ne.s32.totalorder %s267, %s268
      %p280 = scmp.eq.s32.totalorder %s38, 1
      %p281 = por %p279, %p280
      %p283 = scmp.ne.s32.totalorder %s268, %s282
      %p284 = scmp.eq.s32.totalorder %s38, 0
      %p285 = por %p283, %p284
      %s287 = sadd.s32 %s286, 1
      %p290 = scmp.eq.s32.totalorder %s32, 1
      %p291 = scmp.ne.s32.totalorder %s286, %s288
      %p292 = scmp.eq.s32.totalorder %s32, 0
      %p293 = por %p291, %p292
      %p294 = scmp.ne.s32.totalorder %s286, %s288
      %p295 = scmp.eq.s32.totalorder %s37, 1
      %p296 = por %p294, %p295
      %p297 = scmp.ne.s32.totalorder %s288, %s289
      %p298 = scmp.eq.s32.totalorder %s37, 0
      %p299 = por %p297, %p298
      %p300 = scmp.ne.s32.totalorder %s288, %s289
      %p301 = scmp.eq.s32.totalorder %s38, 1
      %p302 = por %p300, %p301
      %p304 = scmp.ne.s32.totalorder %s289, %s303
      %p305 = scmp.eq.s32.totalorder %s38, 0
      %p306 = por %p304, %p305
      %s308 = sadd.s32 %s307, 1
      %p311 = scmp.eq.s32.totalorder %s32, 1
      %p312 = scmp.ne.s32.totalorder %s307, %s309
      %p313 = scmp.eq.s32.totalorder %s32, 0
      %p314 = por %p312, %p313
      %p315 = scmp.ne.s32.totalorder %s307, %s309
      %p316 = scmp.eq.s32.totalorder %s37, 1
      %p317 = por %p315, %p316
      %p318 = scmp.ne.s32.totalorder %s309, %s310
      %p319 = scmp.eq.s32.totalorder %s37, 0
      %p320 = por %p318, %p319
      %p321 = scmp.ne.s32.totalorder %s309, %s310
      %p322 = scmp.eq.s32.totalorder %s38, 1
      %p323 = por %p321, %p322
      %p325 = scmp.ne.s32.totalorder %s310, %s324
      %p326 = scmp.eq.s32.totalorder %s38, 0
      %p327 = por %p325, %p326
      %s328 = ssub.s32 %s32, %s39
      %p329 = scmp.eq.s32.totalorder %s328, 0
      %s331 = sadd.s32 %s330, 1
      %s332 = scalar_select %p329, %s330, %s331
      %p335 = pneg %p329
      %p336 = scmp.eq.s32.totalorder %s32, 1
      %p337 = por %p335, %p336
      %p338 = scmp.ne.s32.totalorder %s330, %s333
      %p339 = scmp.eq.s32.totalorder %s32, 0
      %p340 = por %p338, %p339
      %p341 = scmp.ne.s32.totalorder %s330, %s333
      %p342 = scmp.eq.s32.totalorder %s37, 1
      %p343 = por %p341, %p342
      %p344 = scmp.ne.s32.totalorder %s333, %s334
      %p345 = scmp.eq.s32.totalorder %s37, 0
      %p346 = por %p344, %p345
      %p347 = scmp.ne.s32.totalorder %s333, %s334
      %p348 = scmp.eq.s32.totalorder %s38, 1
      %p349 = por %p347, %p348
      %p351 = scmp.ne.s32.totalorder %s334, %s350
      %p352 = scmp.eq.s32.totalorder %s38, 0
      %p353 = por %p351, %p352
      %p354 = scmp.le.s32.totalorder 1, %s32
      %p355 = scmp.lt.s32.totalorder %s32, 3
      %p356 = pnand %p354, %p355
      %p357 = pneg %p356
      // Predicated region
      $region9: #{tpu_custom_call.1} parent=5 // pred_check
        _
      $region10: #{tpu_custom_call.1} parent=5 // pred_check_branch
        %359 = sbr.rel (%p356) target = $region12
      $region11: #{tpu_custom_call.1} parent=5 // pred_region
        %s360 = ssub.s32 %s32, 1
        // Predicated region
        $region13: #{tpu_custom_call.1} parent=11 // pred_check
          %p361 = pneg %p131
        $region14: #{tpu_custom_call.1} parent=11 // pred_check_branch
          %363 = sbr.rel (%p361) target = $region16
        $region15: #{tpu_custom_call.1} parent=11 // pred_region
          %s365 = ssub.s32 4096, 4096
          %366 = vsyncadd [#allocation9], %s365
          %s367 = sshll.u32 [#allocation8], 4
          %s368 = int_to_ptr.vmem [resolvable:$true] %s367
          %373 = dma.hbm_to_vmem [thread:$0]  %s3, 4096, %s368, [#allocation9], 64, 64, 4
        $region16: #{tpu_custom_call.1} parent=11 // pred_fallthru
          _
        // Predicated region
        $region17: #{tpu_custom_call.1} parent=11 // pred_check
          %p374 = pneg %p152
        $region18: #{tpu_custom_call.1} parent=11 // pred_check_branch
          %376 = sbr.rel (%p374) target = $region20
        $region19: #{tpu_custom_call.1} parent=11 // pred_region
          %s378 = ssub.s32 2048, 2048
          %379 = vsyncadd [#allocation9], %s378
          %s380 = sshll.u32 [#allocation10], 4
          %s381 = int_to_ptr.vmem [resolvable:$true] %s380
          %386 = dma.hbm_to_vmem [thread:$0]  %s4, 2048, %s381, [#allocation9], 128, 128, 8
        $region20: #{tpu_custom_call.1} parent=11 // pred_fallthru
          _
        // Predicated region
        $region21: #{tpu_custom_call.1} parent=11 // pred_check
          %p387 = pneg %p173
        $region22: #{tpu_custom_call.1} parent=11 // pred_check_branch
          %389 = sbr.rel (%p387) target = $region24
        $region23: #{tpu_custom_call.1} parent=11 // pred_region
          %s391 = ssub.s32 2048, 2048
          %392 = vsyncadd [#allocation12], %s391
          %s393 = sshll.u32 [#allocation11], 4
          %s394 = int_to_ptr.vmem [resolvable:$true] %s393
          %399 = dma.hbm_to_vmem [thread:$0]  %s5, 2048, %s394, [#allocation12], 128, 128, 8
        $region24: #{tpu_custom_call.1} parent=11 // pred_fallthru
          _
        // Predicated region
        $region25: #{tpu_custom_call.1} parent=11 // pred_check
          %p400 = pneg %p194
        $region26: #{tpu_custom_call.1} parent=11 // pred_check_branch
          %402 = sbr.rel (%p400) target = $region28
        $region27: #{tpu_custom_call.1} parent=11 // pred_region
          %s404 = ssub.s32 2048, 2048
          %405 = vsyncadd [#allocation12], %s404
          %s406 = sshll.u32 [#allocation13], 4
          %s407 = int_to_ptr.vmem [resolvable:$true] %s406
          %412 = dma.hbm_to_vmem [thread:$0]  %s6, 2048, %s407, [#allocation12], 64, 64, 4
        $region28: #{tpu_custom_call.1} parent=11 // pred_fallthru
          _
        // Predicated region
        $region29: #{tpu_custom_call.1} parent=11 // pred_check
          %p413 = pneg %p215
        $region30: #{tpu_custom_call.1} parent=11 // pred_check_branch
          %415 = sbr.rel (%p413) target = $region32
        $region31: #{tpu_custom_call.1} parent=11 // pred_region
          %s417 = ssub.s32 2048, 2048
          %418 = vsyncadd [#allocation15], %s417
          %s419 = sshll.u32 [#allocation14], 4
          %s420 = int_to_ptr.vmem [resolvable:$true] %s419
          %425 = dma.hbm_to_vmem [thread:$0]  %s7, 2048, %s420, [#allocation15], 64, 64, 4
        $region32: #{tpu_custom_call.1} parent=11 // pred_fallthru
          _
        // Predicated region
        $region33: #{tpu_custom_call.1} parent=11 // pred_check
          %p426 = pneg %p236
        $region34: #{tpu_custom_call.1} parent=11 // pred_check_branch
          %428 = sbr.rel (%p426) target = $region36
        $region35: #{tpu_custom_call.1} parent=11 // pred_region
          _
        $region36: #{tpu_custom_call.1} parent=11 // pred_fallthru
          _
        // Predicated region
        $region37: #{tpu_custom_call.1} parent=11 // pred_check
          %p429 = pneg %p257
        $region38: #{tpu_custom_call.1} parent=11 // pred_check_branch
          %431 = sbr.rel (%p429) target = $region40
        $region39: #{tpu_custom_call.1} parent=11 // pred_region
          %s433 = ssub.s32 1024, 1024
          %434 = vsyncadd [#allocation15], %s433
          %s435 = sshll.u32 [#allocation16], 4
          %s436 = int_to_ptr.vmem [resolvable:$true] %s435
          %441 = dma.hbm_to_vmem [thread:$0]  %s9, 1024, %s436, [#allocation15], 64, 64, 4
        $region40: #{tpu_custom_call.1} parent=11 // pred_fallthru
          _
        // Predicated region
        $region41: #{tpu_custom_call.1} parent=11 // pred_check
          %p442 = pneg %p278
        $region42: #{tpu_custom_call.1} parent=11 // pred_check_branch
          %444 = sbr.rel (%p442) target = $region44
        $region43: #{tpu_custom_call.1} parent=11 // pred_region
          _
        $region44: #{tpu_custom_call.1} parent=11 // pred_fallthru
          _
        // Predicated region
        $region45: #{tpu_custom_call.1} parent=11 // pred_check
          %p445 = pneg %p299
        $region46: #{tpu_custom_call.1} parent=11 // pred_check_branch
          %447 = sbr.rel (%p445) target = $region48
        $region47: #{tpu_custom_call.1} parent=11 // pred_region
          %s449 = ssub.s32 1024, 1024
          %450 = vsyncadd [#allocation18], %s449
          %s451 = sshll.u32 [#allocation17], 4
          %s452 = int_to_ptr.vmem [resolvable:$true] %s451
          %457 = dma.hbm_to_vmem [thread:$0]  %s11, 1024, %s452, [#allocation18], 64, 64, 4
        $region48: #{tpu_custom_call.1} parent=11 // pred_fallthru
          _
        // Predicated region
        $region49: #{tpu_custom_call.1} parent=11 // pred_check
          %p458 = pneg %p320
        $region50: #{tpu_custom_call.1} parent=11 // pred_check_branch
          %460 = sbr.rel (%p458) target = $region52
        $region51: #{tpu_custom_call.1} parent=11 // pred_region
          _
        $region52: #{tpu_custom_call.1} parent=11 // pred_fallthru
          _
      $region12: #{tpu_custom_call.1} parent=5 // pred_fallthru
        _
      %p461 = scmp.lt.s32.totalorder %s32, 2
      // Predicated region
      $region53: #{tpu_custom_call.1} parent=5 // pred_check
        %p462 = pneg %p461
      $region54: #{tpu_custom_call.1} parent=5 // pred_check_branch
        %464 = sbr.rel (%p462) target = $region56
      $region55: #{tpu_custom_call.1} parent=5 // pred_region
        // Predicated region
        $region57: #{tpu_custom_call.1} parent=55 // pred_check
          %p465 = pneg %p52
        $region58: #{tpu_custom_call.1} parent=55 // pred_check_branch
          %467 = sbr.rel (%p465) target = $region60
        $region59: #{tpu_custom_call.1} parent=55 // pred_region
          %s468 = sand.u32 %s42, 1
          %s469 = scalar_lea.sflag [#allocation3], %s468
          %s470 = sand.u32 %s42, 1
          %s471 = smul.addr %s470, 128
          %s472 = scalar_lea.vmem [#allocation2], %s471
          %s473 = smul.u32 16, %s32
          %s475 = ssub.s32 2048, 2048
          %476 = vsyncadd %s469, %s475
          %s477 = smul.addr %s473, 2
          %s478 = smul.addr %s477, 64
          %s479 = scalar_lea.hbm %s0, %s478
          %s480 = sshll.u32 %s472, 4
          %s481 = int_to_ptr.vmem [resolvable:$true] %s480
          %486 = dma.hbm_to_vmem [thread:$0]  %s479, 2048, %s481, %s469, 128, 128, 8
        $region60: #{tpu_custom_call.1} parent=55 // pred_fallthru
          _
        // Predicated region
        $region61: #{tpu_custom_call.1} parent=55 // pred_check
          %p487 = pneg %p78
        $region62: #{tpu_custom_call.1} parent=55 // pred_check_branch
          %489 = sbr.rel (%p487) target = $region64
        $region63: #{tpu_custom_call.1} parent=55 // pred_region
          %s490 = sand.u32 %s32, 1
          %s491 = scalar_lea.sflag [#allocation6], %s490
          %s492 = sand.u32 %s68, 1
          %s493 = smul.addr %s492, 128
          %s494 = scalar_lea.vmem [#allocation5], %s493
          %s495 = smul.u32 16, %s32
          %s497 = ssub.s32 2048, 2048
          %498 = vsyncadd %s491, %s497
          %s499 = smul.addr %s495, 2
          %s500 = smul.addr %s499, 64
          %s501 = scalar_lea.hbm %s1, %s500
          %s502 = sshll.u32 %s494, 4
          %s503 = int_to_ptr.vmem [resolvable:$true] %s502
          %508 = dma.hbm_to_vmem [thread:$0]  %s501, 2048, %s503, %s491, 128, 128, 8
        $region64: #{tpu_custom_call.1} parent=55 // pred_fallthru
          _
        // Predicated region
        $region65: #{tpu_custom_call.1} parent=55 // pred_check
          %p509 = pneg %p104
        $region66: #{tpu_custom_call.1} parent=55 // pred_check_branch
          %511 = sbr.rel (%p509) target = $region68
        $region67: #{tpu_custom_call.1} parent=55 // pred_region
          %s512 = sand.u32 %s32, 1
          %s513 = scalar_lea.sflag [#allocation6], %s512
          %s514 = sand.u32 %s94, 1
          %s515 = smul.addr %s514, 256
          %s516 = scalar_lea.vmem [#allocation7], %s515
          %s517 = smul.u32 16, %s32
          %s519 = ssub.s32 4096, 4096
          %520 = vsyncadd %s513, %s519
          %s521 = smul.addr %s517, 4
          %s522 = smul.addr %s521, 64
          %s523 = scalar_lea.hbm %s2, %s522
          %s524 = sshll.u32 %s516, 4
          %s525 = int_to_ptr.vmem [resolvable:$true] %s524
          %530 = dma.hbm_to_vmem [thread:$0]  %s523, 4096, %s525, %s513, 256, 256, 16
        $region68: #{tpu_custom_call.1} parent=55 // pred_fallthru
          _
      $region56: #{tpu_custom_call.1} parent=5 // pred_fallthru
        _
      %p531 = scmp.le.s32.totalorder 1, %s32
      %p532 = scmp.lt.s32.totalorder %s32, 3
      %p533 = pnand %p531, %p532
      %p534 = pneg %p533
      // Predicated region
      $region69: #{tpu_custom_call.1} parent=5 // pred_check
        _
      $region70: #{tpu_custom_call.1} parent=5 // pred_check_branch
        %536 = sbr.rel (%p533) target = $region72
      $region71: #{tpu_custom_call.1} parent=5 // pred_region
        %s537 = ssub.s32 %s32, 1
        %s538 = sand.u32 %s45, 1
        %s539 = scalar_lea.sflag [#allocation3], %s538
        %s540 = sand.u32 %s45, 1
        %s541 = smul.addr %s540, 128
        %s542 = scalar_lea.vmem [#allocation2], %s541
        // Predicated region
        $region73: #{tpu_custom_call.1} parent=71 // pred_check
          %p543 = pneg %p58
        $region74: #{tpu_custom_call.1} parent=71 // pred_check_branch
          %545 = sbr.rel (%p543) target = $region76
        $region75: #{tpu_custom_call.1} parent=71 // pred_region
          %546 = dma.done %s539, 2048
        $region76: #{tpu_custom_call.1} parent=71 // pred_fallthru
          _
        %s547 = sand.u32 %s37, 1
        %s548 = scalar_lea.sflag [#allocation6], %s547
        %s549 = sand.u32 %s71, 1
        %s550 = smul.addr %s549, 128
        %s551 = scalar_lea.vmem [#allocation5], %s550
        // Predicated region
        $region77: #{tpu_custom_call.1} parent=71 // pred_check
          %p552 = pneg %p84
        $region78: #{tpu_custom_call.1} parent=71 // pred_check_branch
          %554 = sbr.rel (%p552) target = $region80
        $region79: #{tpu_custom_call.1} parent=71 // pred_region
          %555 = dma.done %s548, 2048
        $region80: #{tpu_custom_call.1} parent=71 // pred_fallthru
          _
        %s556 = sand.u32 %s37, 1
        %s557 = scalar_lea.sflag [#allocation6], %s556
        %s558 = sand.u32 %s97, 1
        %s559 = smul.addr %s558, 256
        %s560 = scalar_lea.vmem [#allocation7], %s559
        // Predicated region
        $region81: #{tpu_custom_call.1} parent=71 // pred_check
          %p561 = pneg %p110
        $region82: #{tpu_custom_call.1} parent=71 // pred_check_branch
          %563 = sbr.rel (%p561) target = $region84
        $region83: #{tpu_custom_call.1} parent=71 // pred_region
          %564 = dma.done %s557, 4096
        $region84: #{tpu_custom_call.1} parent=71 // pred_fallthru
          _
        // Predicated region
        $region85: #{tpu_custom_call.1} parent=71 // pred_check
          %p565 = pneg %p131
        $region86: #{tpu_custom_call.1} parent=71 // pred_check_branch
          %567 = sbr.rel (%p565) target = $region88
        $region87: #{tpu_custom_call.1} parent=71 // pred_region
          %568 = dma.done [#allocation9], 4096
        $region88: #{tpu_custom_call.1} parent=71 // pred_fallthru
          _
        // Predicated region
        $region89: #{tpu_custom_call.1} parent=71 // pred_check
          %p569 = pneg %p152
        $region90: #{tpu_custom_call.1} parent=71 // pred_check_branch
          %571 = sbr.rel (%p569) target = $region92
        $region91: #{tpu_custom_call.1} parent=71 // pred_region
          %572 = dma.done [#allocation9], 2048
        $region92: #{tpu_custom_call.1} parent=71 // pred_fallthru
          _
        // Predicated region
        $region93: #{tpu_custom_call.1} parent=71 // pred_check
          %p573 = pneg %p173
        $region94: #{tpu_custom_call.1} parent=71 // pred_check_branch
          %575 = sbr.rel (%p573) target = $region96
        $region95: #{tpu_custom_call.1} parent=71 // pred_region
          %576 = dma.done [#allocation12], 2048
        $region96: #{tpu_custom_call.1} parent=71 // pred_fallthru
          _
        // Predicated region
        $region97: #{tpu_custom_call.1} parent=71 // pred_check
          %p577 = pneg %p194
        $region98: #{tpu_custom_call.1} parent=71 // pred_check_branch
          %579 = sbr.rel (%p577) target = $region100
        $region99: #{tpu_custom_call.1} parent=71 // pred_region
          %580 = dma.done [#allocation12], 2048
        $region100: #{tpu_custom_call.1} parent=71 // pred_fallthru
          _
        // Predicated region
        $region101: #{tpu_custom_call.1} parent=71 // pred_check
          %p581 = pneg %p215
        $region102: #{tpu_custom_call.1} parent=71 // pred_check_branch
          %583 = sbr.rel (%p581) target = $region104
        $region103: #{tpu_custom_call.1} parent=71 // pred_region
          %584 = dma.done [#allocation15], 2048
        $region104: #{tpu_custom_call.1} parent=71 // pred_fallthru
          _
        // Predicated region
        $region105: #{tpu_custom_call.1} parent=71 // pred_check
          %p585 = pneg %p257
        $region106: #{tpu_custom_call.1} parent=71 // pred_check_branch
          %587 = sbr.rel (%p585) target = $region108
        $region107: #{tpu_custom_call.1} parent=71 // pred_region
          %588 = dma.done [#allocation15], 1024
        $region108: #{tpu_custom_call.1} parent=71 // pred_fallthru
          _
        // Predicated region
        $region109: #{tpu_custom_call.1} parent=71 // pred_check
          %p589 = pneg %p299
        $region110: #{tpu_custom_call.1} parent=71 // pred_check_branch
          %591 = sbr.rel (%p589) target = $region112
        $region111: #{tpu_custom_call.1} parent=71 // pred_region
          %592 = dma.done [#allocation18], 1024
        $region112: #{tpu_custom_call.1} parent=71 // pred_fallthru
          _
        %s593 = sand.u32 %s45, 1
        %s594 = scalar_lea.sflag [#allocation3], %s593
        %s595 = sand.u32 %s45, 1
        %s596 = smul.addr %s595, 128
        %s597 = scalar_lea.vmem [#allocation2], %s596
        %p598 = pneg %p58
        %p599 = pneg %p55
        %s600 = sand.u32 %s37, 1
        %s601 = scalar_lea.sflag [#allocation6], %s600
        %s602 = sand.u32 %s71, 1
        %s603 = smul.addr %s602, 128
        %s604 = scalar_lea.vmem [#allocation5], %s603
        %p605 = pneg %p84
        %p606 = pneg %p81
        %s607 = sand.u32 %s37, 1
        %s608 = scalar_lea.sflag [#allocation6], %s607
        %s609 = sand.u32 %s97, 1
        %s610 = smul.addr %s609, 256
        %s611 = scalar_lea.vmem [#allocation7], %s610
        %p612 = pneg %p110
        %p613 = pneg %p107
        %p614 = pneg %p131
        %p615 = pneg %p128
        %p616 = pneg %p152
        %p617 = pneg %p149
        %p618 = pneg %p173
        %p619 = pneg %p170
        %p620 = pneg %p194
        %p621 = pneg %p191
        %p622 = pneg %p215
        %p623 = pneg %p212
        %p624 = pneg %p236
        %p625 = pneg %p233
        %p626 = pneg %p257
        %p627 = pneg %p254
        %p628 = pneg %p278
        %p629 = pneg %p275
        %p630 = pneg %p299
        %p631 = pneg %p296
        %p632 = pneg %p320
        %p633 = pneg %p317
        %p634 = pneg %p346
        %p635 = pneg %p343
        %s636 = sand.u32 %s333, 1
        %s637 = scalar_lea.sflag [#allocation4], %s636
        %s638 = sand.u32 %s333, 1
        %s639 = smul.addr %s638, 128
        %s640 = scalar_lea.vmem [#allocation19], %s639
        %s641 = smul.u32 16, %s37
        %s642 = smul.u32 16, %s37
        %s643 = smul.u32 16, %s37
        %s644 = smul.u32 16, %s37
        %v646 = vld [vmem:[%s560] sm:$0xff]
        %v647 = vld [vmem:[%s560 + $0x8] sm:$0xff]
        %v648 = vld [vmem:[%s560 + $0x10] sm:$0xff]
        %v649 = vld [vmem:[%s560 + $0x18] sm:$0xff]
        %v650 = vld [vmem:[%s560 + $0x20] sm:$0xff]
        %v651 = vld [vmem:[%s560 + $0x28] sm:$0xff]
        %v652 = vld [vmem:[%s560 + $0x30] sm:$0xff]
        %v653 = vld [vmem:[%s560 + $0x38] sm:$0xff]
        %v654 = vld [vmem:[%s560 + $0x40] sm:$0xff]
        %v655 = vld [vmem:[%s560 + $0x48] sm:$0xff]
        %v656 = vld [vmem:[%s560 + $0x50] sm:$0xff]
        %v657 = vld [vmem:[%s560 + $0x58] sm:$0xff]
        %v658 = vld [vmem:[%s560 + $0x60] sm:$0xff]
        %v659 = vld [vmem:[%s560 + $0x68] sm:$0xff]
        %v660 = vld [vmem:[%s560 + $0x70] sm:$0xff]
        %v661 = vld [vmem:[%s560 + $0x78] sm:$0xff]
        %v662 = vld [vmem:[%s560 + $0x80] sm:$0xff]
        %v663 = vld [vmem:[%s560 + $0x88] sm:$0xff]
        %v664 = vld [vmem:[%s560 + $0x90] sm:$0xff]
        %v665 = vld [vmem:[%s560 + $0x98] sm:$0xff]
        %v666 = vld [vmem:[%s560 + $0xa0] sm:$0xff]
        %v667 = vld [vmem:[%s560 + $0xa8] sm:$0xff]
        %v668 = vld [vmem:[%s560 + $0xb0] sm:$0xff]
        %v669 = vld [vmem:[%s560 + $0xb8] sm:$0xff]
        %v670 = vld [vmem:[%s560 + $0xc0] sm:$0xff]
        %v671 = vld [vmem:[%s560 + $0xc8] sm:$0xff]
        %v672 = vld [vmem:[%s560 + $0xd0] sm:$0xff]
        %v673 = vld [vmem:[%s560 + $0xd8] sm:$0xff]
        %v674 = vld [vmem:[%s560 + $0xe0] sm:$0xff]
        %v675 = vld [vmem:[%s560 + $0xe8] sm:$0xff]
        %v676 = vld [vmem:[%s560 + $0xf0] sm:$0xff]
        %v677 = vld [vmem:[%s560 + $0xf8] sm:$0xff]
        %v678 = vld [vmem:[#allocation8] sm:$0xf]
        %v679 = vld [vmem:[#allocation8 + $0x4] sm:$0xf]
        %v680 = vld [vmem:[#allocation8 + $0x8] sm:$0xf]
        %v681 = vld [vmem:[#allocation8 + $0xc] sm:$0xf]
        %v682 = vld [vmem:[#allocation8 + $0x10] sm:$0xf]
        %v683 = vld [vmem:[#allocation8 + $0x14] sm:$0xf]
        %v684 = vld [vmem:[#allocation8 + $0x18] sm:$0xf]
        %v685 = vld [vmem:[#allocation8 + $0x1c] sm:$0xf]
        %v686 = vld [vmem:[#allocation8 + $0x20] sm:$0xf]
        %v687 = vld [vmem:[#allocation8 + $0x24] sm:$0xf]
        %v688 = vld [vmem:[#allocation8 + $0x28] sm:$0xf]
        %v689 = vld [vmem:[#allocation8 + $0x2c] sm:$0xf]
        %v690 = vld [vmem:[#allocation8 + $0x30] sm:$0xf]
        %v691 = vld [vmem:[#allocation8 + $0x34] sm:$0xf]
        %v692 = vld [vmem:[#allocation8 + $0x38] sm:$0xf]
        %v693 = vld [vmem:[#allocation8 + $0x3c] sm:$0xf]
        %v694 = vld [vmem:[#allocation8 + $0x40] sm:$0xf]
        %v695 = vld [vmem:[#allocation8 + $0x44] sm:$0xf]
        %v696 = vld [vmem:[#allocation8 + $0x48] sm:$0xf]
        %v697 = vld [vmem:[#allocation8 + $0x4c] sm:$0xf]
        %v698 = vld [vmem:[#allocation8 + $0x50] sm:$0xf]
        %v699 = vld [vmem:[#allocation8 + $0x54] sm:$0xf]
        %v700 = vld [vmem:[#allocation8 + $0x58] sm:$0xf]
        %v701 = vld [vmem:[#allocation8 + $0x5c] sm:$0xf]
        %v702 = vld [vmem:[#allocation8 + $0x60] sm:$0xf]
        %v703 = vld [vmem:[#allocation8 + $0x64] sm:$0xf]
        %v704 = vld [vmem:[#allocation8 + $0x68] sm:$0xf]
        %v705 = vld [vmem:[#allocation8 + $0x6c] sm:$0xf]
        %v706 = vld [vmem:[#allocation8 + $0x70] sm:$0xf]
        %v707 = vld [vmem:[#allocation8 + $0x74] sm:$0xf]
        %v708 = vld [vmem:[#allocation8 + $0x78] sm:$0xf]
        %v709 = vld [vmem:[#allocation8 + $0x7c] sm:$0xf]
        %v710 = vld [vmem:[#allocation8 + $0x80] sm:$0xf]
        %v711 = vld [vmem:[#allocation8 + $0x84] sm:$0xf]
        %v712 = vld [vmem:[#allocation8 + $0x88] sm:$0xf]
        %v713 = vld [vmem:[#allocation8 + $0x8c] sm:$0xf]
        %v714 = vld [vmem:[#allocation8 + $0x90] sm:$0xf]
        %v715 = vld [vmem:[#allocation8 + $0x94] sm:$0xf]
        %v716 = vld [vmem:[#allocation8 + $0x98] sm:$0xf]
        %v717 = vld [vmem:[#allocation8 + $0x9c] sm:$0xf]
        %v718 = vld [vmem:[#allocation8 + $0xa0] sm:$0xf]
        %v719 = vld [vmem:[#allocation8 + $0xa4] sm:$0xf]
        %v720 = vld [vmem:[#allocation8 + $0xa8] sm:$0xf]
        %v721 = vld [vmem:[#allocation8 + $0xac] sm:$0xf]
        %v722 = vld [vmem:[#allocation8 + $0xb0] sm:$0xf]
        %v723 = vld [vmem:[#allocation8 + $0xb4] sm:$0xf]
        %v724 = vld [vmem:[#allocation8 + $0xb8] sm:$0xf]
        %v725 = vld [vmem:[#allocation8 + $0xbc] sm:$0xf]
        %v726 = vld [vmem:[#allocation8 + $0xc0] sm:$0xf]
        %v727 = vld [vmem:[#allocation8 + $0xc4] sm:$0xf]
        %v728 = vld [vmem:[#allocation8 + $0xc8] sm:$0xf]
        %v729 = vld [vmem:[#allocation8 + $0xcc] sm:$0xf]
        %v730 = vld [vmem:[#allocation8 + $0xd0] sm:$0xf]
        %v731 = vld [vmem:[#allocation8 + $0xd4] sm:$0xf]
        %v732 = vld [vmem:[#allocation8 + $0xd8] sm:$0xf]
        %v733 = vld [vmem:[#allocation8 + $0xdc] sm:$0xf]
        %v734 = vld [vmem:[#allocation8 + $0xe0] sm:$0xf]
        %v735 = vld [vmem:[#allocation8 + $0xe4] sm:$0xf]
        %v736 = vld [vmem:[#allocation8 + $0xe8] sm:$0xf]
        %v737 = vld [vmem:[#allocation8 + $0xec] sm:$0xf]
        %v738 = vld [vmem:[#allocation8 + $0xf0] sm:$0xf]
        %v739 = vld [vmem:[#allocation8 + $0xf4] sm:$0xf]
        %v740 = vld [vmem:[#allocation8 + $0xf8] sm:$0xf]
        %v741 = vld [vmem:[#allocation8 + $0xfc] sm:$0xf]
        %v774 = vunpack.c.l.b16 %v646
        %v775 = vunpack.c.h.b16 %v646
        %v776 = vunpack.c.l.b16 %v647
        %v777 = vunpack.c.h.b16 %v647
        %v778 = vunpack.c.l.b16 %v648
        %v779 = vunpack.c.h.b16 %v648
        %v780 = vunpack.c.l.b16 %v649
        %v781 = vunpack.c.h.b16 %v649
        %v782 = vunpack.c.l.b16 %v650
        %v783 = vunpack.c.h.b16 %v650
        %v784 = vunpack.c.l.b16 %v651
        %v785 = vunpack.c.h.b16 %v651
        %v786 = vunpack.c.l.b16 %v652
        %v787 = vunpack.c.h.b16 %v652
        %v788 = vunpack.c.l.b16 %v653
        %v789 = vunpack.c.h.b16 %v653
        %v790 = vunpack.c.l.b16 %v654
        %v791 = vunpack.c.h.b16 %v654
        %v792 = vunpack.c.l.b16 %v655
        %v793 = vunpack.c.h.b16 %v655
        %v794 = vunpack.c.l.b16 %v656
        %v795 = vunpack.c.h.b16 %v656
        %v796 = vunpack.c.l.b16 %v657
        %v797 = vunpack.c.h.b16 %v657
        %v798 = vunpack.c.l.b16 %v658
        %v799 = vunpack.c.h.b16 %v658
        %v800 = vunpack.c.l.b16 %v659
        %v801 = vunpack.c.h.b16 %v659
        %v802 = vunpack.c.l.b16 %v660
        %v803 = vunpack.c.h.b16 %v660
        %v804 = vunpack.c.l.b16 %v661
        %v805 = vunpack.c.h.b16 %v661
        %v806 = vunpack.c.l.b16 %v662
        %v807 = vunpack.c.h.b16 %v662
        %v808 = vunpack.c.l.b16 %v663
        %v809 = vunpack.c.h.b16 %v663
        %v810 = vunpack.c.l.b16 %v664
        %v811 = vunpack.c.h.b16 %v664
        %v812 = vunpack.c.l.b16 %v665
        %v813 = vunpack.c.h.b16 %v665
        %v814 = vunpack.c.l.b16 %v666
        %v815 = vunpack.c.h.b16 %v666
        %v816 = vunpack.c.l.b16 %v667
        %v817 = vunpack.c.h.b16 %v667
        %v818 = vunpack.c.l.b16 %v668
        %v819 = vunpack.c.h.b16 %v668
        %v820 = vunpack.c.l.b16 %v669
        %v821 = vunpack.c.h.b16 %v669
        %v822 = vunpack.c.l.b16 %v670
        %v823 = vunpack.c.h.b16 %v670
        %v824 = vunpack.c.l.b16 %v671
        %v825 = vunpack.c.h.b16 %v671
        %v826 = vunpack.c.l.b16 %v672
        %v827 = vunpack.c.h.b16 %v672
        %v828 = vunpack.c.l.b16 %v673
        %v829 = vunpack.c.h.b16 %v673
        %v830 = vunpack.c.l.b16 %v674
        %v831 = vunpack.c.h.b16 %v674
        %v832 = vunpack.c.l.b16 %v675
        %v833 = vunpack.c.h.b16 %v675
        %v834 = vunpack.c.l.b16 %v676
        %v835 = vunpack.c.h.b16 %v676
        %v836 = vunpack.c.l.b16 %v677
        %v837 = vunpack.c.h.b16 %v677
        %v838 = vpack.c.b16 %v778, %v774
        %v839 = vpack.c.b16 %v779, %v775
        %v840 = vpack.c.b16 %v780, %v776
        %v841 = vpack.c.b16 %v781, %v777
        %v842 = vpack.c.b16 %v786, %v782
        %v843 = vpack.c.b16 %v787, %v783
        %v844 = vpack.c.b16 %v788, %v784
        %v845 = vpack.c.b16 %v789, %v785
        %v846 = vpack.c.b16 %v794, %v790
        %v847 = vpack.c.b16 %v795, %v791
        %v848 = vpack.c.b16 %v796, %v792
        %v849 = vpack.c.b16 %v797, %v793
        %v850 = vpack.c.b16 %v802, %v798
        %v851 = vpack.c.b16 %v803, %v799
        %v852 = vpack.c.b16 %v804, %v800
        %v853 = vpack.c.b16 %v805, %v801
        %v854 = vpack.c.b16 %v810, %v806
        %v855 = vpack.c.b16 %v811, %v807
        %v856 = vpack.c.b16 %v812, %v808
        %v857 = vpack.c.b16 %v813, %v809
        %v858 = vpack.c.b16 %v818, %v814
        %v859 = vpack.c.b16 %v819, %v815
        %v860 = vpack.c.b16 %v820, %v816
        %v861 = vpack.c.b16 %v821, %v817
        %v862 = vpack.c.b16 %v826, %v822
        %v863 = vpack.c.b16 %v827, %v823
        %v864 = vpack.c.b16 %v828, %v824
        %v865 = vpack.c.b16 %v829, %v825
        %v866 = vpack.c.b16 %v834, %v830
        %v867 = vpack.c.b16 %v835, %v831
        %v868 = vpack.c.b16 %v836, %v832
        %v869 = vpack.c.b16 %v837, %v833
        %v966 = vunpack.c.l.b16 %v678
        %v967 = vunpack.c.l.b16 %v679
        %v968 = vunpack.c.l.b16 %v680
        %v969 = vunpack.c.l.b16 %v681
        %v970 = vunpack.c.l.b16 %v682
        %v971 = vunpack.c.l.b16 %v683
        %v972 = vunpack.c.l.b16 %v684
        %v973 = vunpack.c.l.b16 %v685
        %v974 = vunpack.c.l.b16 %v686
        %v975 = vunpack.c.l.b16 %v687
        %v976 = vunpack.c.l.b16 %v688
        %v977 = vunpack.c.l.b16 %v689
        %v978 = vunpack.c.l.b16 %v690
        %v979 = vunpack.c.l.b16 %v691
        %v980 = vunpack.c.l.b16 %v692
        %v981 = vunpack.c.l.b16 %v693
        %v982 = vunpack.c.l.b16 %v694
        %v983 = vunpack.c.l.b16 %v695
        %v984 = vunpack.c.l.b16 %v696
        %v985 = vunpack.c.l.b16 %v697
        %v986 = vunpack.c.l.b16 %v698
        %v987 = vunpack.c.l.b16 %v699
        %v988 = vunpack.c.l.b16 %v700
        %v989 = vunpack.c.l.b16 %v701
        %v990 = vunpack.c.l.b16 %v702
        %v991 = vunpack.c.l.b16 %v703
        %v992 = vunpack.c.l.b16 %v704
        %v993 = vunpack.c.l.b16 %v705
        %v994 = vunpack.c.l.b16 %v706
        %v995 = vunpack.c.l.b16 %v707
        %v996 = vunpack.c.l.b16 %v708
        %v997 = vunpack.c.l.b16 %v709
        %v998 = vunpack.c.l.b16 %v710
        %v999 = vunpack.c.l.b16 %v711
        %v1000 = vunpack.c.l.b16 %v712
        %v1001 = vunpack.c.l.b16 %v713
        %v1002 = vunpack.c.l.b16 %v714
        %v1003 = vunpack.c.l.b16 %v715
        %v1004 = vunpack.c.l.b16 %v716
        %v1005 = vunpack.c.l.b16 %v717
        %v1006 = vunpack.c.l.b16 %v718
        %v1007 = vunpack.c.l.b16 %v719
        %v1008 = vunpack.c.l.b16 %v720
        %v1009 = vunpack.c.l.b16 %v721
        %v1010 = vunpack.c.l.b16 %v722
        %v1011 = vunpack.c.l.b16 %v723
        %v1012 = vunpack.c.l.b16 %v724
        %v1013 = vunpack.c.l.b16 %v725
        %v1014 = vunpack.c.l.b16 %v726
        %v1015 = vunpack.c.l.b16 %v727
        %v1016 = vunpack.c.l.b16 %v728
        %v1017 = vunpack.c.l.b16 %v729
        %v1018 = vunpack.c.l.b16 %v730
        %v1019 = vunpack.c.l.b16 %v731
        %v1020 = vunpack.c.l.b16 %v732
        %v1021 = vunpack.c.l.b16 %v733
        %v1022 = vunpack.c.l.b16 %v734
        %v1023 = vunpack.c.l.b16 %v735
        %v1024 = vunpack.c.l.b16 %v736
        %v1025 = vunpack.c.l.b16 %v737
        %v1026 = vunpack.c.l.b16 %v738
        %v1027 = vunpack.c.l.b16 %v739
        %v1028 = vunpack.c.l.b16 %v740
        %v1029 = vunpack.c.l.b16 %v741
        %v1030 = vpack.c.b16 %v967, %v966
        %v1031 = vpack.c.b16 %v969, %v968
        %v1032 = vpack.c.b16 %v971, %v970
        %v1033 = vpack.c.b16 %v973, %v972
        %v1034 = vpack.c.b16 %v975, %v974
        %v1035 = vpack.c.b16 %v977, %v976
        %v1036 = vpack.c.b16 %v979, %v978
        %v1037 = vpack.c.b16 %v981, %v980
        %v1038 = vpack.c.b16 %v983, %v982
        %v1039 = vpack.c.b16 %v985, %v984
        %v1040 = vpack.c.b16 %v987, %v986
        %v1041 = vpack.c.b16 %v989, %v988
        %v1042 = vpack.c.b16 %v991, %v990
        %v1043 = vpack.c.b16 %v993, %v992
        %v1044 = vpack.c.b16 %v995, %v994
        %v1045 = vpack.c.b16 %v997, %v996
        %v1046 = vpack.c.b16 %v999, %v998
        %v1047 = vpack.c.b16 %v1001, %v1000
        %v1048 = vpack.c.b16 %v1003, %v1002
        %v1049 = vpack.c.b16 %v1005, %v1004
        %v1050 = vpack.c.b16 %v1007, %v1006
        %v1051 = vpack.c.b16 %v1009, %v1008
        %v1052 = vpack.c.b16 %v1011, %v1010
        %v1053 = vpack.c.b16 %v1013, %v1012
        %v1054 = vpack.c.b16 %v1015, %v1014
        %v1055 = vpack.c.b16 %v1017, %v1016
        %v1056 = vpack.c.b16 %v1019, %v1018
        %v1057 = vpack.c.b16 %v1021, %v1020
        %v1058 = vpack.c.b16 %v1023, %v1022
        %v1059 = vpack.c.b16 %v1025, %v1024
        %v1060 = vpack.c.b16 %v1027, %v1026
        %v1061 = vpack.c.b16 %v1029, %v1028
        %1094 = vmatprep.subr.bf16.mxu0 0
        %1095 = vmatpush1.bf16.msra.mxu0 %v1030
        %1096 = vmatprep.subr.bf16.mxu0 0
        %1097 = vmatpush1.bf16.msra.mxu0 %v1031
        %1098 = vmatprep.subr.bf16.mxu0 0
        %1099 = vmatpush1.bf16.msra.mxu0 %v1032
        %1100 = vmatprep.subr.bf16.mxu0 0
        %1101 = vmatpush1.bf16.msra.mxu0 %v1033
        %1102 = vmatprep.subr.bf16.mxu0 0
        %1103 = vmatpush1.bf16.msra.mxu0 %v1034
        %1104 = vmatprep.subr.bf16.mxu0 0
        %1105 = vmatpush1.bf16.msra.mxu0 %v1035
        %1106 = vmatprep.subr.bf16.mxu0 0
        %1107 = vmatpush1.bf16.msra.mxu0 %v1036
        %1108 = vmatprep.subr.bf16.mxu0 0
        %1109 = vmatpush1.bf16.msra.mxu0 %v1037
        %1110 = vmatprep.subr.bf16.mxu0 0
        %1111 = vmatpush1.bf16.msra.mxu0 %v1038
        %1112 = vmatprep.subr.bf16.mxu0 0
        %1113 = vmatpush1.bf16.msra.mxu0 %v1039
        %1114 = vmatprep.subr.bf16.mxu0 0
        %1115 = vmatpush1.bf16.msra.mxu0 %v1040
        %1116 = vmatprep.subr.bf16.mxu0 0
        %1117 = vmatpush1.bf16.msra.mxu0 %v1041
        %1118 = vmatprep.subr.bf16.mxu0 0
        %1119 = vmatpush1.bf16.msra.mxu0 %v1042
        %1120 = vmatprep.subr.bf16.mxu0 0
        %1121 = vmatpush1.bf16.msra.mxu0 %v1043
        %1122 = vmatprep.subr.bf16.mxu0 0
        %1123 = vmatpush1.bf16.msra.mxu0 %v1044
        %1124 = vmatprep.subr.bf16.mxu0 0
        %1125 = vmatpush1.bf16.msra.mxu0 %v1045
        %1126 = vmatprep.mubr.bf16.mxu0 %v839
        %1127 = vmatmul.mubr.bf16.gmra.mrb[0].mxu0 %v838
        %v1128 = vpop.f32.mrb[0].mxu0
        %v1129 = vadd.f32 0.0, %v1128
        %v1130 = vpop.f32.mrb[0].mxu0
        %v1131 = vpop.f32.mrb[0].mxu0
        %v1132 = vadd.f32 0.0, %v1131
        %v1133 = vpop.f32.mrb[0].mxu0
        %1134 = vmatprep.mubr.bf16.mxu0 %v843
        %1135 = vmatmul.mubr.bf16.gmra.mrb[0].mxu0 %v842
        %v1136 = vpop.f32.mrb[0].mxu0
        %v1137 = vadd.f32 0.0, %v1136
        %v1138 = vpop.f32.mrb[0].mxu0
        %v1139 = vpop.f32.mrb[0].mxu0
        %v1140 = vadd.f32 0.0, %v1139
        %v1141 = vpop.f32.mrb[0].mxu0
        %1142 = vmatprep.mubr.bf16.mxu0 %v847
        %1143 = vmatmul.mubr.bf16.gmra.mrb[0].mxu0 %v846
        %v1144 = vpop.f32.mrb[0].mxu0
        %v1145 = vadd.f32 0.0, %v1144
        %v1146 = vpop.f32.mrb[0].mxu0
        %v1147 = vpop.f32.mrb[0].mxu0
        %v1148 = vadd.f32 0.0, %v1147
        %v1149 = vpop.f32.mrb[0].mxu0
        %1150 = vmatprep.mubr.bf16.mxu0 %v851
        %1151 = vmatmul.mubr.bf16.gmra.mrb[0].mxu0 %v850
        %v1152 = vpop.f32.mrb[0].mxu0
        %v1153 = vadd.f32 0.0, %v1152
        %v1154 = vpop.f32.mrb[0].mxu0
        %v1155 = vpop.f32.mrb[0].mxu0
        %v1156 = vadd.f32 0.0, %v1155
        %v1157 = vpop.f32.mrb[0].mxu0
        %1158 = vmatprep.mubr.bf16.mxu0 %v855
        %1159 = vmatmul.mubr.bf16.gmra.mrb[0].mxu0 %v854
        %v1160 = vpop.f32.mrb[0].mxu0
        %v1161 = vadd.f32 0.0, %v1160
        %v1162 = vpop.f32.mrb[0].mxu0
        %v1163 = vpop.f32.mrb[0].mxu0
        %v1164 = vadd.f32 0.0, %v1163
        %v1165 = vpop.f32.mrb[0].mxu0
        %1166 = vmatprep.mubr.bf16.mxu0 %v859
        %1167 = vmatmul.mubr.bf16.gmra.mrb[0].mxu0 %v858
        %v1168 = vpop.f32.mrb[0].mxu0
        %v1169 = vadd.f32 0.0, %v1168
        %v1170 = vpop.f32.mrb[0].mxu0
        %v1171 = vpop.f32.mrb[0].mxu0
        %v1172 = vadd.f32 0.0, %v1171
        %v1173 = vpop.f32.mrb[0].mxu0
        %1174 = vmatprep.mubr.bf16.mxu0 %v863
        %1175 = vmatmul.mubr.bf16.gmra.mrb[0].mxu0 %v862
        %v1176 = vpop.f32.mrb[0].mxu0
        %v1177 = vadd.f32 0.0, %v1176
        %v1178 = vpop.f32.mrb[0].mxu0
        %v1179 = vpop.f32.mrb[0].mxu0
        %v1180 = vadd.f32 0.0, %v1179
        %v1181 = vpop.f32.mrb[0].mxu0
        %1182 = vmatprep.mubr.bf16.mxu0 %v867
        %1183 = vmatmul.mubr.bf16.gmra.mrb[0].mxu0 %v866
        %v1184 = vpop.f32.mrb[0].mxu0
        %v1185 = vadd.f32 0.0, %v1184
        %v1186 = vpop.f32.mrb[0].mxu0
        %v1187 = vpop.f32.mrb[0].mxu0
        %v1188 = vadd.f32 0.0, %v1187
        %v1189 = vpop.f32.mrb[0].mxu0
        %1190 = vdwg.mxu0
        %1191 = vmatprep.subr.bf16.mxu0 0
        %1192 = vmatpush1.bf16.msra.mxu0 %v1046
        %1193 = vmatprep.subr.bf16.mxu0 0
        %1194 = vmatpush1.bf16.msra.mxu0 %v1047
        %1195 = vmatprep.subr.bf16.mxu0 0
        %1196 = vmatpush1.bf16.msra.mxu0 %v1048
        %1197 = vmatprep.subr.bf16.mxu0 0
        %1198 = vmatpush1.bf16.msra.mxu0 %v1049
        %1199 = vmatprep.subr.bf16.mxu0 0
        %1200 = vmatpush1.bf16.msra.mxu0 %v1050
        %1201 = vmatprep.subr.bf16.mxu0 0
        %1202 = vmatpush1.bf16.msra.mxu0 %v1051
        %1203 = vmatprep.subr.bf16.mxu0 0
        %1204 = vmatpush1.bf16.msra.mxu0 %v1052
        %1205 = vmatprep.subr.bf16.mxu0 0
        %1206 = vmatpush1.bf16.msra.mxu0 %v1053
        %1207 = vmatprep.subr.bf16.mxu0 0
        %1208 = vmatpush1.bf16.msra.mxu0 %v1054
        %1209 = vmatprep.subr.bf16.mxu0 0
        %1210 = vmatpush1.bf16.msra.mxu0 %v1055
        %1211 = vmatprep.subr.bf16.mxu0 0
        %1212 = vmatpush1.bf16.msra.mxu0 %v1056
        %1213 = vmatprep.subr.bf16.mxu0 0
        %1214 = vmatpush1.bf16.msra.mxu0 %v1057
        %1215 = vmatprep.subr.bf16.mxu0 0
        %1216 = vmatpush1.bf16.msra.mxu0 %v1058
        %1217 = vmatprep.subr.bf16.mxu0 0
        %1218 = vmatpush1.bf16.msra.mxu0 %v1059
        %1219 = vmatprep.subr.bf16.mxu0 0
        %1220 = vmatpush1.bf16.msra.mxu0 %v1060
        %1221 = vmatprep.subr.bf16.mxu0 0
        %1222 = vmatpush1.bf16.msra.mxu0 %v1061
        %1223 = vmatprep.mubr.bf16.mxu0 %v841
        %1224 = vmatmul.mubr.bf16.gmra.mrb[0].mxu0 %v840
        %v1225 = vpop.f32.mrb[0].mxu0
        %v1226 = vadd.f32 %v1129, %v1225
        %v1227 = vpop.f32.mrb[0].mxu0
        %v1228 = vpop.f32.mrb[0].mxu0
        %v1229 = vadd.f32 %v1132, %v1228
        %v1230 = vpop.f32.mrb[0].mxu0
        %1231 = vmatprep.mubr.bf16.mxu0 %v845
        %1232 = vmatmul.mubr.bf16.gmra.mrb[0].mxu0 %v844
        %v1233 = vpop.f32.mrb[0].mxu0
        %v1234 = vadd.f32 %v1137, %v1233
        %v1235 = vpop.f32.mrb[0].mxu0
        %v1236 = vpop.f32.mrb[0].mxu0
        %v1237 = vadd.f32 %v1140, %v1236
        %v1238 = vpop.f32.mrb[0].mxu0
        %1239 = vmatprep.mubr.bf16.mxu0 %v849
        %1240 = vmatmul.mubr.bf16.gmra.mrb[0].mxu0 %v848
        %v1241 = vpop.f32.mrb[0].mxu0
        %v1242 = vadd.f32 %v1145, %v1241
        %v1243 = vpop.f32.mrb[0].mxu0
        %v1244 = vpop.f32.mrb[0].mxu0
        %v1245 = vadd.f32 %v1148, %v1244
        %v1246 = vpop.f32.mrb[0].mxu0
        %1247 = vmatprep.mubr.bf16.mxu0 %v853
        %1248 = vmatmul.mubr.bf16.gmra.mrb[0].mxu0 %v852
        %v1249 = vpop.f32.mrb[0].mxu0
        %v1250 = vadd.f32 %v1153, %v1249
        %v1251 = vpop.f32.mrb[0].mxu0
        %v1252 = vpop.f32.mrb[0].mxu0
        %v1253 = vadd.f32 %v1156, %v1252
        %v1254 = vpop.f32.mrb[0].mxu0
        %1255 = vmatprep.mubr.bf16.mxu0 %v857
        %1256 = vmatmul.mubr.bf16.gmra.mrb[0].mxu0 %v856
        %v1257 = vpop.f32.mrb[0].mxu0
        %v1258 = vadd.f32 %v1161, %v1257
        %v1259 = vpop.f32.mrb[0].mxu0
        %v1260 = vpop.f32.mrb[0].mxu0
        %v1261 = vadd.f32 %v1164, %v1260
        %v1262 = vpop.f32.mrb[0].mxu0
        %1263 = vmatprep.mubr.bf16.mxu0 %v861
        %1264 = vmatmul.mubr.bf16.gmra.mrb[0].mxu0 %v860
        %v1265 = vpop.f32.mrb[0].mxu0
        %v1266 = vadd.f32 %v1169, %v1265
        %v1267 = vpop.f32.mrb[0].mxu0
        %v1268 = vpop.f32.mrb[0].mxu0
        %v1269 = vadd.f32 %v1172, %v1268
        %v1270 = vpop.f32.mrb[0].mxu0
        %1271 = vmatprep.mubr.bf16.mxu0 %v865
        %1272 = vmatmul.mubr.bf16.gmra.mrb[0].mxu0 %v864
        %v1273 = vpop.f32.mrb[0].mxu0
        %v1274 = vadd.f32 %v1177, %v1273
        %v1275 = vpop.f32.mrb[0].mxu0
        %v1276 = vpop.f32.mrb[0].mxu0
        %v1277 = vadd.f32 %v1180, %v1276
        %v1278 = vpop.f32.mrb[0].mxu0
        %1279 = vmatprep.mubr.bf16.mxu0 %v869
        %1280 = vmatmul.mubr.bf16.gmra.mrb[0].mxu0 %v868
        %v1281 = vpop.f32.mrb[0].mxu0
        %v1282 = vadd.f32 %v1185, %v1281
        %v1283 = vpop.f32.mrb[0].mxu0
        %v1284 = vpop.f32.mrb[0].mxu0
        %v1285 = vadd.f32 %v1188, %v1284
        %v1286 = vpop.f32.mrb[0].mxu0
        %1287 = vdwg.mxu0
        %v1288 = vmax.f32 %v1226, 0.0
        %v1289 = vmax.f32 %v1229, 0.0
        %v1290 = vmax.f32 %v1234, 0.0
        %v1291 = vmax.f32 %v1237, 0.0
        %v1292 = vmax.f32 %v1242, 0.0
        %v1293 = vmax.f32 %v1245, 0.0
        %v1294 = vmax.f32 %v1250, 0.0
        %v1295 = vmax.f32 %v1253, 0.0
        %v1296 = vmax.f32 %v1258, 0.0
        %v1297 = vmax.f32 %v1261, 0.0
        %v1298 = vmax.f32 %v1266, 0.0
        %v1299 = vmax.f32 %v1269, 0.0
        %v1300 = vmax.f32 %v1274, 0.0
        %v1301 = vmax.f32 %v1277, 0.0
        %v1302 = vmax.f32 %v1282, 0.0
        %v1303 = vmax.f32 %v1285, 0.0
        %v1304 = vpack.c.bf16 %v1289, %v1288
        %v1305 = vpack.c.bf16 %v1291, %v1290
        %v1306 = vpack.c.bf16 %v1293, %v1292
        %v1307 = vpack.c.bf16 %v1295, %v1294
        %v1308 = vpack.c.bf16 %v1297, %v1296
        %v1309 = vpack.c.bf16 %v1299, %v1298
        %v1310 = vpack.c.bf16 %v1301, %v1300
        %v1311 = vpack.c.bf16 %v1303, %v1302
        %v1312 = vld [vmem:[#allocation10] sm:$0xff]
        %v1313 = vld [vmem:[#allocation10 + $0x8] sm:$0xff]
        %v1314 = vld [vmem:[#allocation10 + $0x10] sm:$0xff]
        %v1315 = vld [vmem:[#allocation10 + $0x18] sm:$0xff]
        %v1316 = vld [vmem:[#allocation10 + $0x20] sm:$0xff]
        %v1317 = vld [vmem:[#allocation10 + $0x28] sm:$0xff]
        %v1318 = vld [vmem:[#allocation10 + $0x30] sm:$0xff]
        %v1319 = vld [vmem:[#allocation10 + $0x38] sm:$0xff]
        %v1320 = vld [vmem:[#allocation10 + $0x40] sm:$0xff]
        %v1321 = vld [vmem:[#allocation10 + $0x48] sm:$0xff]
        %v1322 = vld [vmem:[#allocation10 + $0x50] sm:$0xff]
        %v1323 = vld [vmem:[#allocation10 + $0x58] sm:$0xff]
        %v1324 = vld [vmem:[#allocation10 + $0x60] sm:$0xff]
        %v1325 = vld [vmem:[#allocation10 + $0x68] sm:$0xff]
        %v1326 = vld [vmem:[#allocation10 + $0x70] sm:$0xff]
        %v1327 = vld [vmem:[#allocation10 + $0x78] sm:$0xff]
        %v1344 = vunpack.c.l.b16 %v1312
        %v1345 = vunpack.c.h.b16 %v1312
        %v1346 = vunpack.c.l.b16 %v1313
        %v1347 = vunpack.c.h.b16 %v1313
        %v1348 = vunpack.c.l.b16 %v1314
        %v1349 = vunpack.c.h.b16 %v1314
        %v1350 = vunpack.c.l.b16 %v1315
        %v1351 = vunpack.c.h.b16 %v1315
        %v1352 = vunpack.c.l.b16 %v1316
        %v1353 = vunpack.c.h.b16 %v1316
        %v1354 = vunpack.c.l.b16 %v1317
        %v1355 = vunpack.c.h.b16 %v1317
        %v1356 = vunpack.c.l.b16 %v1318
        %v1357 = vunpack.c.h.b16 %v1318
        %v1358 = vunpack.c.l.b16 %v1319
        %v1359 = vunpack.c.h.b16 %v1319
        %v1360 = vunpack.c.l.b16 %v1320
        %v1361 = vunpack.c.h.b16 %v1320
        %v1362 = vunpack.c.l.b16 %v1321
        %v1363 = vunpack.c.h.b16 %v1321
        %v1364 = vunpack.c.l.b16 %v1322
        %v1365 = vunpack.c.h.b16 %v1322
        %v1366 = vunpack.c.l.b16 %v1323
        %v1367 = vunpack.c.h.b16 %v1323
        %v1368 = vunpack.c.l.b16 %v1324
        %v1369 = vunpack.c.h.b16 %v1324
        %v1370 = vunpack.c.l.b16 %v1325
        %v1371 = vunpack.c.h.b16 %v1325
        %v1372 = vunpack.c.l.b16 %v1326
        %v1373 = vunpack.c.h.b16 %v1326
        %v1374 = vunpack.c.l.b16 %v1327
        %v1375 = vunpack.c.h.b16 %v1327
        %v1376 = vpack.c.b16 %v1346, %v1344
        %v1377 = vpack.c.b16 %v1347, %v1345
        %v1378 = vpack.c.b16 %v1350, %v1348
        %v1379 = vpack.c.b16 %v1351, %v1349
        %v1380 = vpack.c.b16 %v1354, %v1352
        %v1381 = vpack.c.b16 %v1355, %v1353
        %v1382 = vpack.c.b16 %v1358, %v1356
        %v1383 = vpack.c.b16 %v1359, %v1357
        %v1384 = vpack.c.b16 %v1362, %v1360
        %v1385 = vpack.c.b16 %v1363, %v1361
        %v1386 = vpack.c.b16 %v1366, %v1364
        %v1387 = vpack.c.b16 %v1367, %v1365
        %v1388 = vpack.c.b16 %v1370, %v1368
        %v1389 = vpack.c.b16 %v1371, %v1369
        %v1390 = vpack.c.b16 %v1374, %v1372
        %v1391 = vpack.c.b16 %v1375, %v1373
        %1408 = vmatprep.subr.bf16.mxu0 %v1377
        %1409 = vmatpush1.bf16.msra.mxu0 %v1376
        %1410 = vmatprep.subr.bf16.mxu0 %v1379
        %1411 = vmatpush1.bf16.msra.mxu0 %v1378
        %1412 = vmatprep.subr.bf16.mxu0 %v1381
        %1413 = vmatpush1.bf16.msra.mxu0 %v1380
        %1414 = vmatprep.subr.bf16.mxu0 %v1383
        %1415 = vmatpush1.bf16.msra.mxu0 %v1382
        %1416 = vmatprep.subr.bf16.mxu0 %v1385
        %1417 = vmatpush1.bf16.msra.mxu0 %v1384
        %1418 = vmatprep.subr.bf16.mxu0 %v1387
        %1419 = vmatpush1.bf16.msra.mxu0 %v1386
        %1420 = vmatprep.subr.bf16.mxu0 %v1389
        %1421 = vmatpush1.bf16.msra.mxu0 %v1388
        %1422 = vmatprep.subr.bf16.mxu0 %v1391
        %1423 = vmatpush1.bf16.msra.mxu0 %v1390
        %1424 = vmatprep.subr.bf16.mxu0 0
        %1425 = vmatpush1.bf16.msra.mxu0 0
        %1426 = vmatprep.subr.bf16.mxu0 0
        %1427 = vmatpush1.bf16.msra.mxu0 0
        %1428 = vmatprep.subr.bf16.mxu0 0
        %1429 = vmatpush1.bf16.msra.mxu0 0
        %1430 = vmatprep.subr.bf16.mxu0 0
        %1431 = vmatpush1.bf16.msra.mxu0 0
        %1432 = vmatprep.subr.bf16.mxu0 0
        %1433 = vmatpush1.bf16.msra.mxu0 0
        %1434 = vmatprep.subr.bf16.mxu0 0
        %1435 = vmatpush1.bf16.msra.mxu0 0
        %1436 = vmatprep.subr.bf16.mxu0 0
        %1437 = vmatpush1.bf16.msra.mxu0 0
        %1438 = vmatprep.subr.bf16.mxu0 0
        %1439 = vmatpush1.bf16.msra.mxu0 0
        %1440 = vmatprep.mubr.bf16.mxu0 0
        %1441 = vmatmul.mubr.bf16.gmra.mrb[0].mxu0 %v1304
        %v1442 = vpop.f32.mrb[0].mxu0
        %v1443 = vadd.f32 0.0, %v1442
        %v1444 = vpop.f32.mrb[0].mxu0
        %v1445 = vadd.f32 0.0, %v1444
        %v1446 = vpop.f32.mrb[0].mxu0
        %v1447 = vadd.f32 0.0, %v1446
        %v1448 = vpop.f32.mrb[0].mxu0
        %v1449 = vadd.f32 0.0, %v1448
        %1450 = vmatprep.mubr.bf16.mxu0 0
        %1451 = vmatmul.mubr.bf16.gmra.mrb[0].mxu0 %v1305
        %v1452 = vpop.f32.mrb[0].mxu0
        %v1453 = vadd.f32 0.0, %v1452
        %v1454 = vpop.f32.mrb[0].mxu0
        %v1455 = vadd.f32 0.0, %v1454
        %v1456 = vpop.f32.mrb[0].mxu0
        %v1457 = vadd.f32 0.0, %v1456
        %v1458 = vpop.f32.mrb[0].mxu0
        %v1459 = vadd.f32 0.0, %v1458
        %1460 = vmatprep.mubr.bf16.mxu0 0
        %1461 = vmatmul.mubr.bf16.gmra.mrb[0].mxu0 %v1306
        %v1462 = vpop.f32.mrb[0].mxu0
        %v1463 = vadd.f32 0.0, %v1462
        %v1464 = vpop.f32.mrb[0].mxu0
        %v1465 = vadd.f32 0.0, %v1464
        %v1466 = vpop.f32.mrb[0].mxu0
        %v1467 = vadd.f32 0.0, %v1466
        %v1468 = vpop.f32.mrb[0].mxu0
        %v1469 = vadd.f32 0.0, %v1468
        %1470 = vmatprep.mubr.bf16.mxu0 0
        %1471 = vmatmul.mubr.bf16.gmra.mrb[0].mxu0 %v1307
        %v1472 = vpop.f32.mrb[0].mxu0
        %v1473 = vadd.f32 0.0, %v1472
        %v1474 = vpop.f32.mrb[0].mxu0
        %v1475 = vadd.f32 0.0, %v1474
        %v1476 = vpop.f32.mrb[0].mxu0
        %v1477 = vadd.f32 0.0, %v1476
        %v1478 = vpop.f32.mrb[0].mxu0
        %v1479 = vadd.f32 0.0, %v1478
        %1480 = vmatprep.mubr.bf16.mxu0 0
        %1481 = vmatmul.mubr.bf16.gmra.mrb[0].mxu0 %v1308
        %v1482 = vpop.f32.mrb[0].mxu0
        %v1483 = vadd.f32 0.0, %v1482
        %v1484 = vpop.f32.mrb[0].mxu0
        %v1485 = vadd.f32 0.0, %v1484
        %v1486 = vpop.f32.mrb[0].mxu0
        %v1487 = vadd.f32 0.0, %v1486
        %v1488 = vpop.f32.mrb[0].mxu0
        %v1489 = vadd.f32 0.0, %v1488
        %1490 = vmatprep.mubr.bf16.mxu0 0
        %1491 = vmatmul.mubr.bf16.gmra.mrb[0].mxu0 %v1309
        %v1492 = vpop.f32.mrb[0].mxu0
        %v1493 = vadd.f32 0.0, %v1492
        %v1494 = vpop.f32.mrb[0].mxu0
        %v1495 = vadd.f32 0.0, %v1494
        %v1496 = vpop.f32.mrb[0].mxu0
        %v1497 = vadd.f32 0.0, %v1496
        %v1498 = vpop.f32.mrb[0].mxu0
        %v1499 = vadd.f32 0.0, %v1498
        %1500 = vmatprep.mubr.bf16.mxu0 0
        %1501 = vmatmul.mubr.bf16.gmra.mrb[0].mxu0 %v1310
        %v1502 = vpop.f32.mrb[0].mxu0
        %v1503 = vadd.f32 0.0, %v1502
        %v1504 = vpop.f32.mrb[0].mxu0
        %v1505 = vadd.f32 0.0, %v1504
        %v1506 = vpop.f32.mrb[0].mxu0
        %v1507 = vadd.f32 0.0, %v1506
        %v1508 = vpop.f32.mrb[0].mxu0
        %v1509 = vadd.f32 0.0, %v1508
        %1510 = vmatprep.mubr.bf16.mxu0 0
        %1511 = vmatmul.mubr.bf16.gmra.mrb[0].mxu0 %v1311
        %v1512 = vpop.f32.mrb[0].mxu0
        %v1513 = vadd.f32 0.0, %v1512
        %v1514 = vpop.f32.mrb[0].mxu0
        %v1515 = vadd.f32 0.0, %v1514
        %v1516 = vpop.f32.mrb[0].mxu0
        %v1517 = vadd.f32 0.0, %v1516
        %v1518 = vpop.f32.mrb[0].mxu0
        %v1519 = vadd.f32 0.0, %v1518
        %1520 = vdwg.mxu0
        %v1521 = vsub.f32 0.0, %v1443
        %v1522 = vsub.f32 0.0, %v1445
        %v1523 = vsub.f32 0.0, %v1447
        %v1524 = vsub.f32 0.0, %v1449
        %v1525 = vsub.f32 0.0, %v1453
        %v1526 = vsub.f32 0.0, %v1455
        %v1527 = vsub.f32 0.0, %v1457
        %v1528 = vsub.f32 0.0, %v1459
        %v1529 = vsub.f32 0.0, %v1463
        %v1530 = vsub.f32 0.0, %v1465
        %v1531 = vsub.f32 0.0, %v1467
        %v1532 = vsub.f32 0.0, %v1469
        %v1533 = vsub.f32 0.0, %v1473
        %v1534 = vsub.f32 0.0, %v1475
        %v1535 = vsub.f32 0.0, %v1477
        %v1536 = vsub.f32 0.0, %v1479
        %v1537 = vsub.f32 0.0, %v1483
        %v1538 = vsub.f32 0.0, %v1485
        %v1539 = vsub.f32 0.0, %v1487
        %v1540 = vsub.f32 0.0, %v1489
        %v1541 = vsub.f32 0.0, %v1493
        %v1542 = vsub.f32 0.0, %v1495
        %v1543 = vsub.f32 0.0, %v1497
        %v1544 = vsub.f32 0.0, %v1499
        %v1545 = vsub.f32 0.0, %v1503
        %v1546 = vsub.f32 0.0, %v1505
        %v1547 = vsub.f32 0.0, %v1507
        %v1548 = vsub.f32 0.0, %v1509
        %v1549 = vsub.f32 0.0, %v1513
        %v1550 = vsub.f32 0.0, %v1515
        %v1551 = vsub.f32 0.0, %v1517
        %v1552 = vsub.f32 0.0, %v1519
        %v1553 = vmul.f32 %v1521, 1.442695
        %v1554 = vpow.pop %v1553
        %v1555 = vmul.f32 %v1522, 1.442695
        %v1556 = vpow.pop %v1555
        %v1557 = vmul.f32 %v1523, 1.442695
        %v1558 = vpow.pop %v1557
        %v1559 = vmul.f32 %v1524, 1.442695
        %v1560 = vpow.pop %v1559
        %v1561 = vmul.f32 %v1525, 1.442695
        %v1562 = vpow.pop %v1561
        %v1563 = vmul.f32 %v1526, 1.442695
        %v1564 = vpow.pop %v1563
        %v1565 = vmul.f32 %v1527, 1.442695
        %v1566 = vpow.pop %v1565
        %v1567 = vmul.f32 %v1528, 1.442695
        %v1568 = vpow.pop %v1567
        %v1569 = vmul.f32 %v1529, 1.442695
        %v1570 = vpow.pop %v1569
        %v1571 = vmul.f32 %v1530, 1.442695
        %v1572 = vpow.pop %v1571
        %v1573 = vmul.f32 %v1531, 1.442695
        %v1574 = vpow.pop %v1573
        %v1575 = vmul.f32 %v1532, 1.442695
        %v1576 = vpow.pop %v1575
        %v1577 = vmul.f32 %v1533, 1.442695
        %v1578 = vpow.pop %v1577
        %v1579 = vmul.f32 %v1534, 1.442695
        %v1580 = vpow.pop %v1579
        %v1581 = vmul.f32 %v1535, 1.442695
        %v1582 = vpow.pop %v1581
        %v1583 = vmul.f32 %v1536, 1.442695
        %v1584 = vpow.pop %v1583
        %v1585 = vmul.f32 %v1537, 1.442695
        %v1586 = vpow.pop %v1585
        %v1587 = vmul.f32 %v1538, 1.442695
        %v1588 = vpow.pop %v1587
        %v1589 = vmul.f32 %v1539, 1.442695
        %v1590 = vpow.pop %v1589
        %v1591 = vmul.f32 %v1540, 1.442695
        %v1592 = vpow.pop %v1591
        %v1593 = vmul.f32 %v1541, 1.442695
        %v1594 = vpow.pop %v1593
        %v1595 = vmul.f32 %v1542, 1.442695
        %v1596 = vpow.pop %v1595
        %v1597 = vmul.f32 %v1543, 1.442695
        %v1598 = vpow.pop %v1597
        %v1599 = vmul.f32 %v1544, 1.442695
        %v1600 = vpow.pop %v1599
        %v1601 = vmul.f32 %v1545, 1.442695
        %v1602 = vpow.pop %v1601
        %v1603 = vmul.f32 %v1546, 1.442695
        %v1604 = vpow.pop %v1603
        %v1605 = vmul.f32 %v1547, 1.442695
        %v1606 = vpow.pop %v1605
        %v1607 = vmul.f32 %v1548, 1.442695
        %v1608 = vpow.pop %v1607
        %v1609 = vmul.f32 %v1549, 1.442695
        %v1610 = vpow.pop %v1609
        %v1611 = vmul.f32 %v1550, 1.442695
        %v1612 = vpow.pop %v1611
        %v1613 = vmul.f32 %v1551, 1.442695
        %v1614 = vpow.pop %v1613
        %v1615 = vmul.f32 %v1552, 1.442695
        %v1616 = vpow.pop %v1615
        %v1617 = vadd.f32 %v1554, 1.0
        %v1618 = vadd.f32 %v1556, 1.0
        %v1619 = vadd.f32 %v1558, 1.0
        %v1620 = vadd.f32 %v1560, 1.0
        %v1621 = vadd.f32 %v1562, 1.0
        %v1622 = vadd.f32 %v1564, 1.0
        %v1623 = vadd.f32 %v1566, 1.0
        %v1624 = vadd.f32 %v1568, 1.0
        %v1625 = vadd.f32 %v1570, 1.0
        %v1626 = vadd.f32 %v1572, 1.0
        %v1627 = vadd.f32 %v1574, 1.0
        %v1628 = vadd.f32 %v1576, 1.0
        %v1629 = vadd.f32 %v1578, 1.0
        %v1630 = vadd.f32 %v1580, 1.0
        %v1631 = vadd.f32 %v1582, 1.0
        %v1632 = vadd.f32 %v1584, 1.0
        %v1633 = vadd.f32 %v1586, 1.0
        %v1634 = vadd.f32 %v1588, 1.0
        %v1635 = vadd.f32 %v1590, 1.0
        %v1636 = vadd.f32 %v1592, 1.0
        %v1637 = vadd.f32 %v1594, 1.0
        %v1638 = vadd.f32 %v1596, 1.0
        %v1639 = vadd.f32 %v1598, 1.0
        %v1640 = vadd.f32 %v1600, 1.0
        %v1641 = vadd.f32 %v1602, 1.0
        %v1642 = vadd.f32 %v1604, 1.0
        %v1643 = vadd.f32 %v1606, 1.0
        %v1644 = vadd.f32 %v1608, 1.0
        %v1645 = vadd.f32 %v1610, 1.0
        %v1646 = vadd.f32 %v1612, 1.0
        %v1647 = vadd.f32 %v1614, 1.0
        %v1648 = vadd.f32 %v1616, 1.0
        %v1649 = vrcp.pop %v1617
        %v1650 = vrcp.pop %v1618
        %v1651 = vrcp.pop %v1619
        %v1652 = vrcp.pop %v1620
        %v1653 = vrcp.pop %v1621
        %v1654 = vrcp.pop %v1622
        %v1655 = vrcp.pop %v1623
        %v1656 = vrcp.pop %v1624
        %v1657 = vrcp.pop %v1625
        %v1658 = vrcp.pop %v1626
        %v1659 = vrcp.pop %v1627
        %v1660 = vrcp.pop %v1628
        %v1661 = vrcp.pop %v1629
        %v1662 = vrcp.pop %v1630
        %v1663 = vrcp.pop %v1631
        %v1664 = vrcp.pop %v1632
        %v1665 = vrcp.pop %v1633
        %v1666 = vrcp.pop %v1634
        %v1667 = vrcp.pop %v1635
        %v1668 = vrcp.pop %v1636
        %v1669 = vrcp.pop %v1637
        %v1670 = vrcp.pop %v1638
        %v1671 = vrcp.pop %v1639
        %v1672 = vrcp.pop %v1640
        %v1673 = vrcp.pop %v1641
        %v1674 = vrcp.pop %v1642
        %v1675 = vrcp.pop %v1643
        %v1676 = vrcp.pop %v1644
        %v1677 = vrcp.pop %v1645
        %v1678 = vrcp.pop %v1646
        %v1679 = vrcp.pop %v1647
        %v1680 = vrcp.pop %v1648
        %v1681 = vld [vmem:[#allocation11] sm:$0xff]
        %v1682 = vld [vmem:[#allocation11 + $0x8] sm:$0xff]
        %v1683 = vld [vmem:[#allocation11 + $0x10] sm:$0xff]
        %v1684 = vld [vmem:[#allocation11 + $0x18] sm:$0xff]
        %v1685 = vld [vmem:[#allocation11 + $0x20] sm:$0xff]
        %v1686 = vld [vmem:[#allocation11 + $0x28] sm:$0xff]
        %v1687 = vld [vmem:[#allocation11 + $0x30] sm:$0xff]
        %v1688 = vld [vmem:[#allocation11 + $0x38] sm:$0xff]
        %v1689 = vld [vmem:[#allocation11 + $0x40] sm:$0xff]
        %v1690 = vld [vmem:[#allocation11 + $0x48] sm:$0xff]
        %v1691 = vld [vmem:[#allocation11 + $0x50] sm:$0xff]
        %v1692 = vld [vmem:[#allocation11 + $0x58] sm:$0xff]
        %v1693 = vld [vmem:[#allocation11 + $0x60] sm:$0xff]
        %v1694 = vld [vmem:[#allocation11 + $0x68] sm:$0xff]
        %v1695 = vld [vmem:[#allocation11 + $0x70] sm:$0xff]
        %v1696 = vld [vmem:[#allocation11 + $0x78] sm:$0xff]
        %v1713 = vunpack.c.l.b16 %v1681
        %v1714 = vunpack.c.h.b16 %v1681
        %v1715 = vunpack.c.l.b16 %v1682
        %v1716 = vunpack.c.h.b16 %v1682
        %v1717 = vunpack.c.l.b16 %v1683
        %v1718 = vunpack.c.h.b16 %v1683
        %v1719 = vunpack.c.l.b16 %v1684
        %v1720 = vunpack.c.h.b16 %v1684
        %v1721 = vunpack.c.l.b16 %v1685
        %v1722 = vunpack.c.h.b16 %v1685
        %v1723 = vunpack.c.l.b16 %v1686
        %v1724 = vunpack.c.h.b16 %v1686
        %v1725 = vunpack.c.l.b16 %v1687
        %v1726 = vunpack.c.h.b16 %v1687
        %v1727 = vunpack.c.l.b16 %v1688
        %v1728 = vunpack.c.h.b16 %v1688
        %v1729 = vunpack.c.l.b16 %v1689
        %v1730 = vunpack.c.h.b16 %v1689
        %v1731 = vunpack.c.l.b16 %v1690
        %v1732 = vunpack.c.h.b16 %v1690
        %v1733 = vunpack.c.l.b16 %v1691
        %v1734 = vunpack.c.h.b16 %v1691
        %v1735 = vunpack.c.l.b16 %v1692
        %v1736 = vunpack.c.h.b16 %v1692
        %v1737 = vunpack.c.l.b16 %v1693
        %v1738 = vunpack.c.h.b16 %v1693
        %v1739 = vunpack.c.l.b16 %v1694
        %v1740 = vunpack.c.h.b16 %v1694
        %v1741 = vunpack.c.l.b16 %v1695
        %v1742 = vunpack.c.h.b16 %v1695
        %v1743 = vunpack.c.l.b16 %v1696
        %v1744 = vunpack.c.h.b16 %v1696
        %v1745 = vpack.c.b16 %v1715, %v1713
        %v1746 = vpack.c.b16 %v1716, %v1714
        %v1747 = vpack.c.b16 %v1719, %v1717
        %v1748 = vpack.c.b16 %v1720, %v1718
        %v1749 = vpack.c.b16 %v1723, %v1721
        %v1750 = vpack.c.b16 %v1724, %v1722
        %v1751 = vpack.c.b16 %v1727, %v1725
        %v1752 = vpack.c.b16 %v1728, %v1726
        %v1753 = vpack.c.b16 %v1731, %v1729
        %v1754 = vpack.c.b16 %v1732, %v1730
        %v1755 = vpack.c.b16 %v1735, %v1733
        %v1756 = vpack.c.b16 %v1736, %v1734
        %v1757 = vpack.c.b16 %v1739, %v1737
        %v1758 = vpack.c.b16 %v1740, %v1738
        %v1759 = vpack.c.b16 %v1743, %v1741
        %v1760 = vpack.c.b16 %v1744, %v1742
        %1777 = vmatprep.subr.bf16.mxu0 %v1746
        %1778 = vmatpush1.bf16.msra.mxu0 %v1745
        %1779 = vmatprep.subr.bf16.mxu0 %v1748
        %1780 = vmatpush1.bf16.msra.mxu0 %v1747
        %1781 = vmatprep.subr.bf16.mxu0 %v1750
        %1782 = vmatpush1.bf16.msra.mxu0 %v1749
        %1783 = vmatprep.subr.bf16.mxu0 %v1752
        %1784 = vmatpush1.bf16.msra.mxu0 %v1751
        %1785 = vmatprep.subr.bf16.mxu0 %v1754
        %1786 = vmatpush1.bf16.msra.mxu0 %v1753
        %1787 = vmatprep.subr.bf16.mxu0 %v1756
        %1788 = vmatpush1.bf16.msra.mxu0 %v1755
        %1789 = vmatprep.subr.bf16.mxu0 %v1758
        %1790 = vmatpush1.bf16.msra.mxu0 %v1757
        %1791 = vmatprep.subr.bf16.mxu0 %v1760
        %1792 = vmatpush1.bf16.msra.mxu0 %v1759
        %1793 = vmatprep.subr.bf16.mxu0 0
        %1794 = vmatpush1.bf16.msra.mxu0 0
        %1795 = vmatprep.subr.bf16.mxu0 0
        %1796 = vmatpush1.bf16.msra.mxu0 0
        %1797 = vmatprep.subr.bf16.mxu0 0
        %1798 = vmatpush1.bf16.msra.mxu0 0
        %1799 = vmatprep.subr.bf16.mxu0 0
        %1800 = vmatpush1.bf16.msra.mxu0 0
        %1801 = vmatprep.subr.bf16.mxu0 0
        %1802 = vmatpush1.bf16.msra.mxu0 0
        %1803 = vmatprep.subr.bf16.mxu0 0
        %1804 = vmatpush1.bf16.msra.mxu0 0
        %1805 = vmatprep.subr.bf16.mxu0 0
        %1806 = vmatpush1.bf16.msra.mxu0 0
        %1807 = vmatprep.subr.bf16.mxu0 0
        %1808 = vmatpush1.bf16.msra.mxu0 0
        %1809 = vmatprep.mubr.bf16.mxu0 0
        %1810 = vmatmul.mubr.bf16.gmra.mrb[0].mxu0 %v1304
        %v1811 = vpop.f32.mrb[0].mxu0
        %v1812 = vadd.f32 0.0, %v1811
        %v1813 = vpop.f32.mrb[0].mxu0
        %v1814 = vadd.f32 0.0, %v1813
        %v1815 = vpop.f32.mrb[0].mxu0
        %v1816 = vadd.f32 0.0, %v1815
        %v1817 = vpop.f32.mrb[0].mxu0
        %v1818 = vadd.f32 0.0, %v1817
        %1819 = vmatprep.mubr.bf16.mxu0 0
        %1820 = vmatmul.mubr.bf16.gmra.mrb[0].mxu0 %v1305
        %v1821 = vpop.f32.mrb[0].mxu0
        %v1822 = vadd.f32 0.0, %v1821
        %v1823 = vpop.f32.mrb[0].mxu0
        %v1824 = vadd.f32 0.0, %v1823
        %v1825 = vpop.f32.mrb[0].mxu0
        %v1826 = vadd.f32 0.0, %v1825
        %v1827 = vpop.f32.mrb[0].mxu0
        %v1828 = vadd.f32 0.0, %v1827
        %1829 = vmatprep.mubr.bf16.mxu0 0
        %1830 = vmatmul.mubr.bf16.gmra.mrb[0].mxu0 %v1306
        %v1831 = vpop.f32.mrb[0].mxu0
        %v1832 = vadd.f32 0.0, %v1831
        %v1833 = vpop.f32.mrb[0].mxu0
        %v1834 = vadd.f32 0.0, %v1833
        %v1835 = vpop.f32.mrb[0].mxu0
        %v1836 = vadd.f32 0.0, %v1835
        %v1837 = vpop.f32.mrb[0].mxu0
        %v1838 = vadd.f32 0.0, %v1837
        %1839 = vmatprep.mubr.bf16.mxu0 0
        %1840 = vmatmul.mubr.bf16.gmra.mrb[0].mxu0 %v1307
        %v1841 = vpop.f32.mrb[0].mxu0
        %v1842 = vadd.f32 0.0, %v1841
        %v1843 = vpop.f32.mrb[0].mxu0
        %v1844 = vadd.f32 0.0, %v1843
        %v1845 = vpop.f32.mrb[0].mxu0
        %v1846 = vadd.f32 0.0, %v1845
        %v1847 = vpop.f32.mrb[0].mxu0
        %v1848 = vadd.f32 0.0, %v1847
        %1849 = vmatprep.mubr.bf16.mxu0 0
        %1850 = vmatmul.mubr.bf16.gmra.mrb[0].mxu0 %v1308
        %v1851 = vpop.f32.mrb[0].mxu0
        %v1852 = vadd.f32 0.0, %v1851
        %v1853 = vpop.f32.mrb[0].mxu0
        %v1854 = vadd.f32 0.0, %v1853
        %v1855 = vpop.f32.mrb[0].mxu0
        %v1856 = vadd.f32 0.0, %v1855
        %v1857 = vpop.f32.mrb[0].mxu0
        %v1858 = vadd.f32 0.0, %v1857
        %1859 = vmatprep.mubr.bf16.mxu0 0
        %1860 = vmatmul.mubr.bf16.gmra.mrb[0].mxu0 %v1309
        %v1861 = vpop.f32.mrb[0].mxu0
        %v1862 = vadd.f32 0.0, %v1861
        %v1863 = vpop.f32.mrb[0].mxu0
        %v1864 = vadd.f32 0.0, %v1863
        %v1865 = vpop.f32.mrb[0].mxu0
        %v1866 = vadd.f32 0.0, %v1865
        %v1867 = vpop.f32.mrb[0].mxu0
        %v1868 = vadd.f32 0.0, %v1867
        %1869 = vmatprep.mubr.bf16.mxu0 0
        %1870 = vmatmul.mubr.bf16.gmra.mrb[0].mxu0 %v1310
        %v1871 = vpop.f32.mrb[0].mxu0
        %v1872 = vadd.f32 0.0, %v1871
        %v1873 = vpop.f32.mrb[0].mxu0
        %v1874 = vadd.f32 0.0, %v1873
        %v1875 = vpop.f32.mrb[0].mxu0
        %v1876 = vadd.f32 0.0, %v1875
        %v1877 = vpop.f32.mrb[0].mxu0
        %v1878 = vadd.f32 0.0, %v1877
        %1879 = vmatprep.mubr.bf16.mxu0 0
        %1880 = vmatmul.mubr.bf16.gmra.mrb[0].mxu0 %v1311
        %v1881 = vpop.f32.mrb[0].mxu0
        %v1882 = vadd.f32 0.0, %v1881
        %v1883 = vpop.f32.mrb[0].mxu0
        %v1884 = vadd.f32 0.0, %v1883
        %v1885 = vpop.f32.mrb[0].mxu0
        %v1886 = vadd.f32 0.0, %v1885
        %v1887 = vpop.f32.mrb[0].mxu0
        %v1888 = vadd.f32 0.0, %v1887
        %1889 = vdwg.mxu0
        %v1890 = vsub.f32 0.0, %v1812
        %v1891 = vsub.f32 0.0, %v1814
        %v1892 = vsub.f32 0.0, %v1816
        %v1893 = vsub.f32 0.0, %v1818
        %v1894 = vsub.f32 0.0, %v1822
        %v1895 = vsub.f32 0.0, %v1824
        %v1896 = vsub.f32 0.0, %v1826
        %v1897 = vsub.f32 0.0, %v1828
        %v1898 = vsub.f32 0.0, %v1832
        %v1899 = vsub.f32 0.0, %v1834
        %v1900 = vsub.f32 0.0, %v1836
        %v1901 = vsub.f32 0.0, %v1838
        %v1902 = vsub.f32 0.0, %v1842
        %v1903 = vsub.f32 0.0, %v1844
        %v1904 = vsub.f32 0.0, %v1846
        %v1905 = vsub.f32 0.0, %v1848
        %v1906 = vsub.f32 0.0, %v1852
        %v1907 = vsub.f32 0.0, %v1854
        %v1908 = vsub.f32 0.0, %v1856
        %v1909 = vsub.f32 0.0, %v1858
        %v1910 = vsub.f32 0.0, %v1862
        %v1911 = vsub.f32 0.0, %v1864
        %v1912 = vsub.f32 0.0, %v1866
        %v1913 = vsub.f32 0.0, %v1868
        %v1914 = vsub.f32 0.0, %v1872
        %v1915 = vsub.f32 0.0, %v1874
        %v1916 = vsub.f32 0.0, %v1876
        %v1917 = vsub.f32 0.0, %v1878
        %v1918 = vsub.f32 0.0, %v1882
        %v1919 = vsub.f32 0.0, %v1884
        %v1920 = vsub.f32 0.0, %v1886
        %v1921 = vsub.f32 0.0, %v1888
        %v1922 = vmul.f32 %v1890, 1.442695
        %v1923 = vpow.pop %v1922
        %v1924 = vmul.f32 %v1891, 1.442695
        %v1925 = vpow.pop %v1924
        %v1926 = vmul.f32 %v1892, 1.442695
        %v1927 = vpow.pop %v1926
        %v1928 = vmul.f32 %v1893, 1.442695
        %v1929 = vpow.pop %v1928
        %v1930 = vmul.f32 %v1894, 1.442695
        %v1931 = vpow.pop %v1930
        %v1932 = vmul.f32 %v1895, 1.442695
        %v1933 = vpow.pop %v1932
        %v1934 = vmul.f32 %v1896, 1.442695
        %v1935 = vpow.pop %v1934
        %v1936 = vmul.f32 %v1897, 1.442695
        %v1937 = vpow.pop %v1936
        %v1938 = vmul.f32 %v1898, 1.442695
        %v1939 = vpow.pop %v1938
        %v1940 = vmul.f32 %v1899, 1.442695
        %v1941 = vpow.pop %v1940
        %v1942 = vmul.f32 %v1900, 1.442695
        %v1943 = vpow.pop %v1942
        %v1944 = vmul.f32 %v1901, 1.442695
        %v1945 = vpow.pop %v1944
        %v1946 = vmul.f32 %v1902, 1.442695
        %v1947 = vpow.pop %v1946
        %v1948 = vmul.f32 %v1903, 1.442695
        %v1949 = vpow.pop %v1948
        %v1950 = vmul.f32 %v1904, 1.442695
        %v1951 = vpow.pop %v1950
        %v1952 = vmul.f32 %v1905, 1.442695
        %v1953 = vpow.pop %v1952
        %v1954 = vmul.f32 %v1906, 1.442695
        %v1955 = vpow.pop %v1954
        %v1956 = vmul.f32 %v1907, 1.442695
        %v1957 = vpow.pop %v1956
        %v1958 = vmul.f32 %v1908, 1.442695
        %v1959 = vpow.pop %v1958
        %v1960 = vmul.f32 %v1909, 1.442695
        %v1961 = vpow.pop %v1960
        %v1962 = vmul.f32 %v1910, 1.442695
        %v1963 = vpow.pop %v1962
        %v1964 = vmul.f32 %v1911, 1.442695
        %v1965 = vpow.pop %v1964
        %v1966 = vmul.f32 %v1912, 1.442695
        %v1967 = vpow.pop %v1966
        %v1968 = vmul.f32 %v1913, 1.442695
        %v1969 = vpow.pop %v1968
        %v1970 = vmul.f32 %v1914, 1.442695
        %v1971 = vpow.pop %v1970
        %v1972 = vmul.f32 %v1915, 1.442695
        %v1973 = vpow.pop %v1972
        %v1974 = vmul.f32 %v1916, 1.442695
        %v1975 = vpow.pop %v1974
        %v1976 = vmul.f32 %v1917, 1.442695
        %v1977 = vpow.pop %v1976
        %v1978 = vmul.f32 %v1918, 1.442695
        %v1979 = vpow.pop %v1978
        %v1980 = vmul.f32 %v1919, 1.442695
        %v1981 = vpow.pop %v1980
        %v1982 = vmul.f32 %v1920, 1.442695
        %v1983 = vpow.pop %v1982
        %v1984 = vmul.f32 %v1921, 1.442695
        %v1985 = vpow.pop %v1984
        %v1986 = vadd.f32 %v1923, 1.0
        %v1987 = vadd.f32 %v1925, 1.0
        %v1988 = vadd.f32 %v1927, 1.0
        %v1989 = vadd.f32 %v1929, 1.0
        %v1990 = vadd.f32 %v1931, 1.0
        %v1991 = vadd.f32 %v1933, 1.0
        %v1992 = vadd.f32 %v1935, 1.0
        %v1993 = vadd.f32 %v1937, 1.0
        %v1994 = vadd.f32 %v1939, 1.0
        %v1995 = vadd.f32 %v1941, 1.0
        %v1996 = vadd.f32 %v1943, 1.0
        %v1997 = vadd.f32 %v1945, 1.0
        %v1998 = vadd.f32 %v1947, 1.0
        %v1999 = vadd.f32 %v1949, 1.0
        %v2000 = vadd.f32 %v1951, 1.0
        %v2001 = vadd.f32 %v1953, 1.0
        %v2002 = vadd.f32 %v1955, 1.0
        %v2003 = vadd.f32 %v1957, 1.0
        %v2004 = vadd.f32 %v1959, 1.0
        %v2005 = vadd.f32 %v1961, 1.0
        %v2006 = vadd.f32 %v1963, 1.0
        %v2007 = vadd.f32 %v1965, 1.0
        %v2008 = vadd.f32 %v1967, 1.0
        %v2009 = vadd.f32 %v1969, 1.0
        %v2010 = vadd.f32 %v1971, 1.0
        %v2011 = vadd.f32 %v1973, 1.0
        %v2012 = vadd.f32 %v1975, 1.0
        %v2013 = vadd.f32 %v1977, 1.0
        %v2014 = vadd.f32 %v1979, 1.0
        %v2015 = vadd.f32 %v1981, 1.0
        %v2016 = vadd.f32 %v1983, 1.0
        %v2017 = vadd.f32 %v1985, 1.0
        %v2018 = vrcp.pop %v1986
        %v2019 = vrcp.pop %v1987
        %v2020 = vrcp.pop %v1988
        %v2021 = vrcp.pop %v1989
        %v2022 = vrcp.pop %v1990
        %v2023 = vrcp.pop %v1991
        %v2024 = vrcp.pop %v1992
        %v2025 = vrcp.pop %v1993
        %v2026 = vrcp.pop %v1994
        %v2027 = vrcp.pop %v1995
        %v2028 = vrcp.pop %v1996
        %v2029 = vrcp.pop %v1997
        %v2030 = vrcp.pop %v1998
        %v2031 = vrcp.pop %v1999
        %v2032 = vrcp.pop %v2000
        %v2033 = vrcp.pop %v2001
        %v2034 = vrcp.pop %v2002
        %v2035 = vrcp.pop %v2003
        %v2036 = vrcp.pop %v2004
        %v2037 = vrcp.pop %v2005
        %v2038 = vrcp.pop %v2006
        %v2039 = vrcp.pop %v2007
        %v2040 = vrcp.pop %v2008
        %v2041 = vrcp.pop %v2009
        %v2042 = vrcp.pop %v2010
        %v2043 = vrcp.pop %v2011
        %v2044 = vrcp.pop %v2012
        %v2045 = vrcp.pop %v2013
        %v2046 = vrcp.pop %v2014
        %v2047 = vrcp.pop %v2015
        %v2048 = vrcp.pop %v2016
        %v2049 = vrcp.pop %v2017
        %v2050 = vld [vmem:[%s542] sm:$0xff]
        %v2051 = vld [vmem:[%s542 + $0x8] sm:$0xff]
        %v2052 = vld [vmem:[%s542 + $0x10] sm:$0xff]
        %v2053 = vld [vmem:[%s542 + $0x18] sm:$0xff]
        %v2054 = vld [vmem:[%s542 + $0x20] sm:$0xff]
        %v2055 = vld [vmem:[%s542 + $0x28] sm:$0xff]
        %v2056 = vld [vmem:[%s542 + $0x30] sm:$0xff]
        %v2057 = vld [vmem:[%s542 + $0x38] sm:$0xff]
        %v2058 = vld [vmem:[%s542 + $0x40] sm:$0xff]
        %v2059 = vld [vmem:[%s542 + $0x48] sm:$0xff]
        %v2060 = vld [vmem:[%s542 + $0x50] sm:$0xff]
        %v2061 = vld [vmem:[%s542 + $0x58] sm:$0xff]
        %v2062 = vld [vmem:[%s542 + $0x60] sm:$0xff]
        %v2063 = vld [vmem:[%s542 + $0x68] sm:$0xff]
        %v2064 = vld [vmem:[%s542 + $0x70] sm:$0xff]
        %v2065 = vld [vmem:[%s542 + $0x78] sm:$0xff]
        %v2066 = vunpack.c.l.bf16 %v2050
        %v2067 = vunpack.c.h.bf16 %v2050
        %v2068 = vunpack.c.l.bf16 %v2051
        %v2069 = vunpack.c.h.bf16 %v2051
        %v2070 = vunpack.c.l.bf16 %v2052
        %v2071 = vunpack.c.h.bf16 %v2052
        %v2072 = vunpack.c.l.bf16 %v2053
        %v2073 = vunpack.c.h.bf16 %v2053
        %v2074 = vunpack.c.l.bf16 %v2054
        %v2075 = vunpack.c.h.bf16 %v2054
        %v2076 = vunpack.c.l.bf16 %v2055
        %v2077 = vunpack.c.h.bf16 %v2055
        %v2078 = vunpack.c.l.bf16 %v2056
        %v2079 = vunpack.c.h.bf16 %v2056
        %v2080 = vunpack.c.l.bf16 %v2057
        %v2081 = vunpack.c.h.bf16 %v2057
        %v2082 = vunpack.c.l.bf16 %v2058
        %v2083 = vunpack.c.h.bf16 %v2058
        %v2084 = vunpack.c.l.bf16 %v2059
        %v2085 = vunpack.c.h.bf16 %v2059
        %v2086 = vunpack.c.l.bf16 %v2060
        %v2087 = vunpack.c.h.bf16 %v2060
        %v2088 = vunpack.c.l.bf16 %v2061
        %v2089 = vunpack.c.h.bf16 %v2061
        %v2090 = vunpack.c.l.bf16 %v2062
        %v2091 = vunpack.c.h.bf16 %v2062
        %v2092 = vunpack.c.l.bf16 %v2063
        %v2093 = vunpack.c.h.bf16 %v2063
        %v2094 = vunpack.c.l.bf16 %v2064
        %v2095 = vunpack.c.h.bf16 %v2064
        %v2096 = vunpack.c.l.bf16 %v2065
        %v2097 = vunpack.c.h.bf16 %v2065
        %v2098 = vmul.f32 %v2066, %v1649
        %v2099 = vmul.f32 %v2067, %v1650
        %v2100 = vmul.f32 %v2068, %v1651
        %v2101 = vmul.f32 %v2069, %v1652
        %v2102 = vmul.f32 %v2070, %v1653
        %v2103 = vmul.f32 %v2071, %v1654
        %v2104 = vmul.f32 %v2072, %v1655
        %v2105 = vmul.f32 %v2073, %v1656
        %v2106 = vmul.f32 %v2074, %v1657
        %v2107 = vmul.f32 %v2075, %v1658
        %v2108 = vmul.f32 %v2076, %v1659
        %v2109 = vmul.f32 %v2077, %v1660
        %v2110 = vmul.f32 %v2078, %v1661
        %v2111 = vmul.f32 %v2079, %v1662
        %v2112 = vmul.f32 %v2080, %v1663
        %v2113 = vmul.f32 %v2081, %v1664
        %v2114 = vmul.f32 %v2082, %v1665
        %v2115 = vmul.f32 %v2083, %v1666
        %v2116 = vmul.f32 %v2084, %v1667
        %v2117 = vmul.f32 %v2085, %v1668
        %v2118 = vmul.f32 %v2086, %v1669
        %v2119 = vmul.f32 %v2087, %v1670
        %v2120 = vmul.f32 %v2088, %v1671
        %v2121 = vmul.f32 %v2089, %v1672
        %v2122 = vmul.f32 %v2090, %v1673
        %v2123 = vmul.f32 %v2091, %v1674
        %v2124 = vmul.f32 %v2092, %v1675
        %v2125 = vmul.f32 %v2093, %v1676
        %v2126 = vmul.f32 %v2094, %v1677
        %v2127 = vmul.f32 %v2095, %v1678
        %v2128 = vmul.f32 %v2096, %v1679
        %v2129 = vmul.f32 %v2097, %v1680
        %v2130 = vadd.f32 %v2098, %v2099
        %2131 = vadd.xlane.f32.xlu0 %v2130
        %v2132 = vpop.xlane.xlu0 %2131
        %v2133 = vadd.f32 %v2100, %v2101
        %2134 = vadd.xlane.f32.xlu0 %v2133
        %v2135 = vpop.xlane.xlu0 %2134
        %v2136 = vadd.f32 %v2102, %v2103
        %2137 = vadd.xlane.f32.xlu0 %v2136
        %v2138 = vpop.xlane.xlu0 %2137
        %v2139 = vadd.f32 %v2104, %v2105
        %2140 = vadd.xlane.f32.xlu0 %v2139
        %v2141 = vpop.xlane.xlu0 %2140
        %v2142 = vadd.f32 %v2106, %v2107
        %2143 = vadd.xlane.f32.xlu0 %v2142
        %v2144 = vpop.xlane.xlu0 %2143
        %v2145 = vadd.f32 %v2108, %v2109
        %2146 = vadd.xlane.f32.xlu0 %v2145
        %v2147 = vpop.xlane.xlu0 %2146
        %v2148 = vadd.f32 %v2110, %v2111
        %2149 = vadd.xlane.f32.xlu0 %v2148
        %v2150 = vpop.xlane.xlu0 %2149
        %v2151 = vadd.f32 %v2112, %v2113
        %2152 = vadd.xlane.f32.xlu0 %v2151
        %v2153 = vpop.xlane.xlu0 %2152
        %v2154 = vadd.f32 %v2114, %v2115
        %2155 = vadd.xlane.f32.xlu0 %v2154
        %v2156 = vpop.xlane.xlu0 %2155
        %v2157 = vadd.f32 %v2116, %v2117
        %2158 = vadd.xlane.f32.xlu0 %v2157
        %v2159 = vpop.xlane.xlu0 %2158
        %v2160 = vadd.f32 %v2118, %v2119
        %2161 = vadd.xlane.f32.xlu0 %v2160
        %v2162 = vpop.xlane.xlu0 %2161
        %v2163 = vadd.f32 %v2120, %v2121
        %2164 = vadd.xlane.f32.xlu0 %v2163
        %v2165 = vpop.xlane.xlu0 %2164
        %v2166 = vadd.f32 %v2122, %v2123
        %2167 = vadd.xlane.f32.xlu0 %v2166
        %v2168 = vpop.xlane.xlu0 %2167
        %v2169 = vadd.f32 %v2124, %v2125
        %2170 = vadd.xlane.f32.xlu0 %v2169
        %v2171 = vpop.xlane.xlu0 %2170
        %v2172 = vadd.f32 %v2126, %v2127
        %2173 = vadd.xlane.f32.xlu0 %v2172
        %v2174 = vpop.xlane.xlu0 %2173
        %v2175 = vadd.f32 %v2128, %v2129
        %2176 = vadd.xlane.f32.xlu0 %v2175
        %v2177 = vpop.xlane.xlu0 %2176
        %v2178 = vrcp.pop 256.0
        %v2179 = vmul.f32 %v2132, %v2178
        %v2180 = vmul.f32 %v2135, %v2178
        %v2181 = vmul.f32 %v2138, %v2178
        %v2182 = vmul.f32 %v2141, %v2178
        %v2183 = vmul.f32 %v2144, %v2178
        %v2184 = vmul.f32 %v2147, %v2178
        %v2185 = vmul.f32 %v2150, %v2178
        %v2186 = vmul.f32 %v2153, %v2178
        %v2187 = vmul.f32 %v2156, %v2178
        %v2188 = vmul.f32 %v2159, %v2178
        %v2189 = vmul.f32 %v2162, %v2178
        %v2190 = vmul.f32 %v2165, %v2178
        %v2191 = vmul.f32 %v2168, %v2178
        %v2192 = vmul.f32 %v2171, %v2178
        %v2193 = vmul.f32 %v2174, %v2178
        %v2194 = vmul.f32 %v2177, %v2178
        %v2195 = vsub.f32 %v2098, %v2179
        %v2196 = vsub.f32 %v2099, %v2179
        %v2197 = vsub.f32 %v2100, %v2180
        %v2198 = vsub.f32 %v2101, %v2180
        %v2199 = vsub.f32 %v2102, %v2181
        %v2200 = vsub.f32 %v2103, %v2181
        %v2201 = vsub.f32 %v2104, %v2182
        %v2202 = vsub.f32 %v2105, %v2182
        %v2203 = vsub.f32 %v2106, %v2183
        %v2204 = vsub.f32 %v2107, %v2183
        %v2205 = vsub.f32 %v2108, %v2184
        %v2206 = vsub.f32 %v2109, %v2184
        %v2207 = vsub.f32 %v2110, %v2185
        %v2208 = vsub.f32 %v2111, %v2185
        %v2209 = vsub.f32 %v2112, %v2186
        %v2210 = vsub.f32 %v2113, %v2186
        %v2211 = vsub.f32 %v2114, %v2187
        %v2212 = vsub.f32 %v2115, %v2187
        %v2213 = vsub.f32 %v2116, %v2188
        %v2214 = vsub.f32 %v2117, %v2188
        %v2215 = vsub.f32 %v2118, %v2189
        %v2216 = vsub.f32 %v2119, %v2189
        %v2217 = vsub.f32 %v2120, %v2190
        %v2218 = vsub.f32 %v2121, %v2190
        %v2219 = vsub.f32 %v2122, %v2191
        %v2220 = vsub.f32 %v2123, %v2191
        %v2221 = vsub.f32 %v2124, %v2192
        %v2222 = vsub.f32 %v2125, %v2192
        %v2223 = vsub.f32 %v2126, %v2193
        %v2224 = vsub.f32 %v2127, %v2193
        %v2225 = vsub.f32 %v2128, %v2194
        %v2226 = vsub.f32 %v2129, %v2194
        %v2227 = vmul.f32 %v2195, %v2195
        %v2228 = vmul.f32 %v2196, %v2196
        %v2229 = vmul.f32 %v2197, %v2197
        %v2230 = vmul.f32 %v2198, %v2198
        %v2231 = vmul.f32 %v2199, %v2199
        %v2232 = vmul.f32 %v2200, %v2200
        %v2233 = vmul.f32 %v2201, %v2201
        %v2234 = vmul.f32 %v2202, %v2202
        %v2235 = vmul.f32 %v2203, %v2203
        %v2236 = vmul.f32 %v2204, %v2204
        %v2237 = vmul.f32 %v2205, %v2205
        %v2238 = vmul.f32 %v2206, %v2206
        %v2239 = vmul.f32 %v2207, %v2207
        %v2240 = vmul.f32 %v2208, %v2208
        %v2241 = vmul.f32 %v2209, %v2209
        %v2242 = vmul.f32 %v2210, %v2210
        %v2243 = vmul.f32 %v2211, %v2211
        %v2244 = vmul.f32 %v2212, %v2212
        %v2245 = vmul.f32 %v2213, %v2213
        %v2246 = vmul.f32 %v2214, %v2214
        %v2247 = vmul.f32 %v2215, %v2215
        %v2248 = vmul.f32 %v2216, %v2216
        %v2249 = vmul.f32 %v2217, %v2217
        %v2250 = vmul.f32 %v2218, %v2218
        %v2251 = vmul.f32 %v2219, %v2219
        %v2252 = vmul.f32 %v2220, %v2220
        %v2253 = vmul.f32 %v2221, %v2221
        %v2254 = vmul.f32 %v2222, %v2222
        %v2255 = vmul.f32 %v2223, %v2223
        %v2256 = vmul.f32 %v2224, %v2224
        %v2257 = vmul.f32 %v2225, %v2225
        %v2258 = vmul.f32 %v2226, %v2226
        %v2259 = vadd.f32 %v2227, %v2228
        %2260 = vadd.xlane.f32.xlu0 %v2259
        %v2261 = vpop.xlane.xlu0 %2260
        %v2262 = vadd.f32 %v2229, %v2230
        %2263 = vadd.xlane.f32.xlu0 %v2262
        %v2264 = vpop.xlane.xlu0 %2263
        %v2265 = vadd.f32 %v2231, %v2232
        %2266 = vadd.xlane.f32.xlu0 %v2265
        %v2267 = vpop.xlane.xlu0 %2266
        %v2268 = vadd.f32 %v2233, %v2234
        %2269 = vadd.xlane.f32.xlu0 %v2268
        %v2270 = vpop.xlane.xlu0 %2269
        %v2271 = vadd.f32 %v2235, %v2236
        %2272 = vadd.xlane.f32.xlu0 %v2271
        %v2273 = vpop.xlane.xlu0 %2272
        %v2274 = vadd.f32 %v2237, %v2238
        %2275 = vadd.xlane.f32.xlu0 %v2274
        %v2276 = vpop.xlane.xlu0 %2275
        %v2277 = vadd.f32 %v2239, %v2240
        %2278 = vadd.xlane.f32.xlu0 %v2277
        %v2279 = vpop.xlane.xlu0 %2278
        %v2280 = vadd.f32 %v2241, %v2242
        %2281 = vadd.xlane.f32.xlu0 %v2280
        %v2282 = vpop.xlane.xlu0 %2281
        %v2283 = vadd.f32 %v2243, %v2244
        %2284 = vadd.xlane.f32.xlu0 %v2283
        %v2285 = vpop.xlane.xlu0 %2284
        %v2286 = vadd.f32 %v2245, %v2246
        %2287 = vadd.xlane.f32.xlu0 %v2286
        %v2288 = vpop.xlane.xlu0 %2287
        %v2289 = vadd.f32 %v2247, %v2248
        %2290 = vadd.xlane.f32.xlu0 %v2289
        %v2291 = vpop.xlane.xlu0 %2290
        %v2292 = vadd.f32 %v2249, %v2250
        %2293 = vadd.xlane.f32.xlu0 %v2292
        %v2294 = vpop.xlane.xlu0 %2293
        %v2295 = vadd.f32 %v2251, %v2252
        %2296 = vadd.xlane.f32.xlu0 %v2295
        %v2297 = vpop.xlane.xlu0 %2296
        %v2298 = vadd.f32 %v2253, %v2254
        %2299 = vadd.xlane.f32.xlu0 %v2298
        %v2300 = vpop.xlane.xlu0 %2299
        %v2301 = vadd.f32 %v2255, %v2256
        %2302 = vadd.xlane.f32.xlu0 %v2301
        %v2303 = vpop.xlane.xlu0 %2302
        %v2304 = vadd.f32 %v2257, %v2258
        %2305 = vadd.xlane.f32.xlu0 %v2304
        %v2306 = vpop.xlane.xlu0 %2305
        %v2307 = vmul.f32 %v2261, 0.003921569
        %v2308 = vmul.f32 %v2264, 0.003921569
        %v2309 = vmul.f32 %v2267, 0.003921569
        %v2310 = vmul.f32 %v2270, 0.003921569
        %v2311 = vmul.f32 %v2273, 0.003921569
        %v2312 = vmul.f32 %v2276, 0.003921569
        %v2313 = vmul.f32 %v2279, 0.003921569
        %v2314 = vmul.f32 %v2282, 0.003921569
        %v2315 = vmul.f32 %v2285, 0.003921569
        %v2316 = vmul.f32 %v2288, 0.003921569
        %v2317 = vmul.f32 %v2291, 0.003921569
        %v2318 = vmul.f32 %v2294, 0.003921569
        %v2319 = vmul.f32 %v2297, 0.003921569
        %v2320 = vmul.f32 %v2300, 0.003921569
        %v2321 = vmul.f32 %v2303, 0.003921569
        %v2322 = vmul.f32 %v2306, 0.003921569
        %v2323 = vrsqrt.pop %v2307
        %v2324 = vrsqrt.pop %v2308
        %v2325 = vrsqrt.pop %v2309
        %v2326 = vrsqrt.pop %v2310
        %v2327 = vrsqrt.pop %v2311
        %v2328 = vrsqrt.pop %v2312
        %v2329 = vrsqrt.pop %v2313
        %v2330 = vrsqrt.pop %v2314
        %v2331 = vrsqrt.pop %v2315
        %v2332 = vrsqrt.pop %v2316
        %v2333 = vrsqrt.pop %v2317
        %v2334 = vrsqrt.pop %v2318
        %v2335 = vrsqrt.pop %v2319
        %v2336 = vrsqrt.pop %v2320
        %v2337 = vrsqrt.pop %v2321
        %v2338 = vrsqrt.pop %v2322
        %v2339 = vmul.f32 %v2195, %v2323
        %v2340 = vmul.f32 %v2196, %v2323
        %v2341 = vmul.f32 %v2197, %v2324
        %v2342 = vmul.f32 %v2198, %v2324
        %v2343 = vmul.f32 %v2199, %v2325
        %v2344 = vmul.f32 %v2200, %v2325
        %v2345 = vmul.f32 %v2201, %v2326
        %v2346 = vmul.f32 %v2202, %v2326
        %v2347 = vmul.f32 %v2203, %v2327
        %v2348 = vmul.f32 %v2204, %v2327
        %v2349 = vmul.f32 %v2205, %v2328
        %v2350 = vmul.f32 %v2206, %v2328
        %v2351 = vmul.f32 %v2207, %v2329
        %v2352 = vmul.f32 %v2208, %v2329
        %v2353 = vmul.f32 %v2209, %v2330
        %v2354 = vmul.f32 %v2210, %v2330
        %v2355 = vmul.f32 %v2211, %v2331
        %v2356 = vmul.f32 %v2212, %v2331
        %v2357 = vmul.f32 %v2213, %v2332
        %v2358 = vmul.f32 %v2214, %v2332
        %v2359 = vmul.f32 %v2215, %v2333
        %v2360 = vmul.f32 %v2216, %v2333
        %v2361 = vmul.f32 %v2217, %v2334
        %v2362 = vmul.f32 %v2218, %v2334
        %v2363 = vmul.f32 %v2219, %v2335
        %v2364 = vmul.f32 %v2220, %v2335
        %v2365 = vmul.f32 %v2221, %v2336
        %v2366 = vmul.f32 %v2222, %v2336
        %v2367 = vmul.f32 %v2223, %v2337
        %v2368 = vmul.f32 %v2224, %v2337
        %v2369 = vmul.f32 %v2225, %v2338
        %v2370 = vmul.f32 %v2226, %v2338
        %v2371 = vld [vmem:[%s551] sm:$0xff]
        %v2372 = vld [vmem:[%s551 + $0x8] sm:$0xff]
        %v2373 = vld [vmem:[%s551 + $0x10] sm:$0xff]
        %v2374 = vld [vmem:[%s551 + $0x18] sm:$0xff]
        %v2375 = vld [vmem:[%s551 + $0x20] sm:$0xff]
        %v2376 = vld [vmem:[%s551 + $0x28] sm:$0xff]
        %v2377 = vld [vmem:[%s551 + $0x30] sm:$0xff]
        %v2378 = vld [vmem:[%s551 + $0x38] sm:$0xff]
        %v2379 = vld [vmem:[%s551 + $0x40] sm:$0xff]
        %v2380 = vld [vmem:[%s551 + $0x48] sm:$0xff]
        %v2381 = vld [vmem:[%s551 + $0x50] sm:$0xff]
        %v2382 = vld [vmem:[%s551 + $0x58] sm:$0xff]
        %v2383 = vld [vmem:[%s551 + $0x60] sm:$0xff]
        %v2384 = vld [vmem:[%s551 + $0x68] sm:$0xff]
        %v2385 = vld [vmem:[%s551 + $0x70] sm:$0xff]
        %v2386 = vld [vmem:[%s551 + $0x78] sm:$0xff]
        %v2387 = vunpack.c.l.bf16 %v2371
        %v2388 = vunpack.c.h.bf16 %v2371
        %v2389 = vunpack.c.l.bf16 %v2372
        %v2390 = vunpack.c.h.bf16 %v2372
        %v2391 = vunpack.c.l.bf16 %v2373
        %v2392 = vunpack.c.h.bf16 %v2373
        %v2393 = vunpack.c.l.bf16 %v2374
        %v2394 = vunpack.c.h.bf16 %v2374
        %v2395 = vunpack.c.l.bf16 %v2375
        %v2396 = vunpack.c.h.bf16 %v2375
        %v2397 = vunpack.c.l.bf16 %v2376
        %v2398 = vunpack.c.h.bf16 %v2376
        %v2399 = vunpack.c.l.bf16 %v2377
        %v2400 = vunpack.c.h.bf16 %v2377
        %v2401 = vunpack.c.l.bf16 %v2378
        %v2402 = vunpack.c.h.bf16 %v2378
        %v2403 = vunpack.c.l.bf16 %v2379
        %v2404 = vunpack.c.h.bf16 %v2379
        %v2405 = vunpack.c.l.bf16 %v2380
        %v2406 = vunpack.c.h.bf16 %v2380
        %v2407 = vunpack.c.l.bf16 %v2381
        %v2408 = vunpack.c.h.bf16 %v2381
        %v2409 = vunpack.c.l.bf16 %v2382
        %v2410 = vunpack.c.h.bf16 %v2382
        %v2411 = vunpack.c.l.bf16 %v2383
        %v2412 = vunpack.c.h.bf16 %v2383
        %v2413 = vunpack.c.l.bf16 %v2384
        %v2414 = vunpack.c.h.bf16 %v2384
        %v2415 = vunpack.c.l.bf16 %v2385
        %v2416 = vunpack.c.h.bf16 %v2385
        %v2417 = vunpack.c.l.bf16 %v2386
        %v2418 = vunpack.c.h.bf16 %v2386
        %v2419 = vmul.f32 %v2387, %v2018
        %v2420 = vmul.f32 %v2388, %v2019
        %v2421 = vmul.f32 %v2389, %v2020
        %v2422 = vmul.f32 %v2390, %v2021
        %v2423 = vmul.f32 %v2391, %v2022
        %v2424 = vmul.f32 %v2392, %v2023
        %v2425 = vmul.f32 %v2393, %v2024
        %v2426 = vmul.f32 %v2394, %v2025
        %v2427 = vmul.f32 %v2395, %v2026
        %v2428 = vmul.f32 %v2396, %v2027
        %v2429 = vmul.f32 %v2397, %v2028
        %v2430 = vmul.f32 %v2398, %v2029
        %v2431 = vmul.f32 %v2399, %v2030
        %v2432 = vmul.f32 %v2400, %v2031
        %v2433 = vmul.f32 %v2401, %v2032
        %v2434 = vmul.f32 %v2402, %v2033
        %v2435 = vmul.f32 %v2403, %v2034
        %v2436 = vmul.f32 %v2404, %v2035
        %v2437 = vmul.f32 %v2405, %v2036
        %v2438 = vmul.f32 %v2406, %v2037
        %v2439 = vmul.f32 %v2407, %v2038
        %v2440 = vmul.f32 %v2408, %v2039
        %v2441 = vmul.f32 %v2409, %v2040
        %v2442 = vmul.f32 %v2410, %v2041
        %v2443 = vmul.f32 %v2411, %v2042
        %v2444 = vmul.f32 %v2412, %v2043
        %v2445 = vmul.f32 %v2413, %v2044
        %v2446 = vmul.f32 %v2414, %v2045
        %v2447 = vmul.f32 %v2415, %v2046
        %v2448 = vmul.f32 %v2416, %v2047
        %v2449 = vmul.f32 %v2417, %v2048
        %v2450 = vmul.f32 %v2418, %v2049
        %v2451 = vadd.f32 %v2419, %v2420
        %2452 = vadd.xlane.f32.xlu0 %v2451
        %v2453 = vpop.xlane.xlu0 %2452
        %v2454 = vadd.f32 %v2421, %v2422
        %2455 = vadd.xlane.f32.xlu0 %v2454
        %v2456 = vpop.xlane.xlu0 %2455
        %v2457 = vadd.f32 %v2423, %v2424
        %2458 = vadd.xlane.f32.xlu0 %v2457
        %v2459 = vpop.xlane.xlu0 %2458
        %v2460 = vadd.f32 %v2425, %v2426
        %2461 = vadd.xlane.f32.xlu0 %v2460
        %v2462 = vpop.xlane.xlu0 %2461
        %v2463 = vadd.f32 %v2427, %v2428
        %2464 = vadd.xlane.f32.xlu0 %v2463
        %v2465 = vpop.xlane.xlu0 %2464
        %v2466 = vadd.f32 %v2429, %v2430
        %2467 = vadd.xlane.f32.xlu0 %v2466
        %v2468 = vpop.xlane.xlu0 %2467
        %v2469 = vadd.f32 %v2431, %v2432
        %2470 = vadd.xlane.f32.xlu0 %v2469
        %v2471 = vpop.xlane.xlu0 %2470
        %v2472 = vadd.f32 %v2433, %v2434
        %2473 = vadd.xlane.f32.xlu0 %v2472
        %v2474 = vpop.xlane.xlu0 %2473
        %v2475 = vadd.f32 %v2435, %v2436
        %2476 = vadd.xlane.f32.xlu0 %v2475
        %v2477 = vpop.xlane.xlu0 %2476
        %v2478 = vadd.f32 %v2437, %v2438
        %2479 = vadd.xlane.f32.xlu0 %v2478
        %v2480 = vpop.xlane.xlu0 %2479
        %v2481 = vadd.f32 %v2439, %v2440
        %2482 = vadd.xlane.f32.xlu0 %v2481
        %v2483 = vpop.xlane.xlu0 %2482
        %v2484 = vadd.f32 %v2441, %v2442
        %2485 = vadd.xlane.f32.xlu0 %v2484
        %v2486 = vpop.xlane.xlu0 %2485
        %v2487 = vadd.f32 %v2443, %v2444
        %2488 = vadd.xlane.f32.xlu0 %v2487
        %v2489 = vpop.xlane.xlu0 %2488
        %v2490 = vadd.f32 %v2445, %v2446
        %2491 = vadd.xlane.f32.xlu0 %v2490
        %v2492 = vpop.xlane.xlu0 %2491
        %v2493 = vadd.f32 %v2447, %v2448
        %2494 = vadd.xlane.f32.xlu0 %v2493
        %v2495 = vpop.xlane.xlu0 %2494
        %v2496 = vadd.f32 %v2449, %v2450
        %2497 = vadd.xlane.f32.xlu0 %v2496
        %v2498 = vpop.xlane.xlu0 %2497
        %v2499 = vmul.f32 %v2453, %v2178
        %v2500 = vmul.f32 %v2456, %v2178
        %v2501 = vmul.f32 %v2459, %v2178
        %v2502 = vmul.f32 %v2462, %v2178
        %v2503 = vmul.f32 %v2465, %v2178
        %v2504 = vmul.f32 %v2468, %v2178
        %v2505 = vmul.f32 %v2471, %v2178
        %v2506 = vmul.f32 %v2474, %v2178
        %v2507 = vmul.f32 %v2477, %v2178
        %v2508 = vmul.f32 %v2480, %v2178
        %v2509 = vmul.f32 %v2483, %v2178
        %v2510 = vmul.f32 %v2486, %v2178
        %v2511 = vmul.f32 %v2489, %v2178
        %v2512 = vmul.f32 %v2492, %v2178
        %v2513 = vmul.f32 %v2495, %v2178
        %v2514 = vmul.f32 %v2498, %v2178
        %v2515 = vsub.f32 %v2419, %v2499
        %v2516 = vsub.f32 %v2420, %v2499
        %v2517 = vsub.f32 %v2421, %v2500
        %v2518 = vsub.f32 %v2422, %v2500
        %v2519 = vsub.f32 %v2423, %v2501
        %v2520 = vsub.f32 %v2424, %v2501
        %v2521 = vsub.f32 %v2425, %v2502
        %v2522 = vsub.f32 %v2426, %v2502
        %v2523 = vsub.f32 %v2427, %v2503
        %v2524 = vsub.f32 %v2428, %v2503
        %v2525 = vsub.f32 %v2429, %v2504
        %v2526 = vsub.f32 %v2430, %v2504
        %v2527 = vsub.f32 %v2431, %v2505
        %v2528 = vsub.f32 %v2432, %v2505
        %v2529 = vsub.f32 %v2433, %v2506
        %v2530 = vsub.f32 %v2434, %v2506
        %v2531 = vsub.f32 %v2435, %v2507
        %v2532 = vsub.f32 %v2436, %v2507
        %v2533 = vsub.f32 %v2437, %v2508
        %v2534 = vsub.f32 %v2438, %v2508
        %v2535 = vsub.f32 %v2439, %v2509
        %v2536 = vsub.f32 %v2440, %v2509
        %v2537 = vsub.f32 %v2441, %v2510
        %v2538 = vsub.f32 %v2442, %v2510
        %v2539 = vsub.f32 %v2443, %v2511
        %v2540 = vsub.f32 %v2444, %v2511
        %v2541 = vsub.f32 %v2445, %v2512
        %v2542 = vsub.f32 %v2446, %v2512
        %v2543 = vsub.f32 %v2447, %v2513
        %v2544 = vsub.f32 %v2448, %v2513
        %v2545 = vsub.f32 %v2449, %v2514
        %v2546 = vsub.f32 %v2450, %v2514
        %v2547 = vmul.f32 %v2515, %v2515
        %v2548 = vmul.f32 %v2516, %v2516
        %v2549 = vmul.f32 %v2517, %v2517
        %v2550 = vmul.f32 %v2518, %v2518
        %v2551 = vmul.f32 %v2519, %v2519
        %v2552 = vmul.f32 %v2520, %v2520
        %v2553 = vmul.f32 %v2521, %v2521
        %v2554 = vmul.f32 %v2522, %v2522
        %v2555 = vmul.f32 %v2523, %v2523
        %v2556 = vmul.f32 %v2524, %v2524
        %v2557 = vmul.f32 %v2525, %v2525
        %v2558 = vmul.f32 %v2526, %v2526
        %v2559 = vmul.f32 %v2527, %v2527
        %v2560 = vmul.f32 %v2528, %v2528
        %v2561 = vmul.f32 %v2529, %v2529
        %v2562 = vmul.f32 %v2530, %v2530
        %v2563 = vmul.f32 %v2531, %v2531
        %v2564 = vmul.f32 %v2532, %v2532
        %v2565 = vmul.f32 %v2533, %v2533
        %v2566 = vmul.f32 %v2534, %v2534
        %v2567 = vmul.f32 %v2535, %v2535
        %v2568 = vmul.f32 %v2536, %v2536
        %v2569 = vmul.f32 %v2537, %v2537
        %v2570 = vmul.f32 %v2538, %v2538
        %v2571 = vmul.f32 %v2539, %v2539
        %v2572 = vmul.f32 %v2540, %v2540
        %v2573 = vmul.f32 %v2541, %v2541
        %v2574 = vmul.f32 %v2542, %v2542
        %v2575 = vmul.f32 %v2543, %v2543
        %v2576 = vmul.f32 %v2544, %v2544
        %v2577 = vmul.f32 %v2545, %v2545
        %v2578 = vmul.f32 %v2546, %v2546
        %v2579 = vadd.f32 %v2547, %v2548
        %2580 = vadd.xlane.f32.xlu0 %v2579
        %v2581 = vpop.xlane.xlu0 %2580
        %v2582 = vadd.f32 %v2549, %v2550
        %2583 = vadd.xlane.f32.xlu0 %v2582
        %v2584 = vpop.xlane.xlu0 %2583
        %v2585 = vadd.f32 %v2551, %v2552
        %2586 = vadd.xlane.f32.xlu0 %v2585
        %v2587 = vpop.xlane.xlu0 %2586
        %v2588 = vadd.f32 %v2553, %v2554
        %2589 = vadd.xlane.f32.xlu0 %v2588
        %v2590 = vpop.xlane.xlu0 %2589
        %v2591 = vadd.f32 %v2555, %v2556
        %2592 = vadd.xlane.f32.xlu0 %v2591
        %v2593 = vpop.xlane.xlu0 %2592
        %v2594 = vadd.f32 %v2557, %v2558
        %2595 = vadd.xlane.f32.xlu0 %v2594
        %v2596 = vpop.xlane.xlu0 %2595
        %v2597 = vadd.f32 %v2559, %v2560
        %2598 = vadd.xlane.f32.xlu0 %v2597
        %v2599 = vpop.xlane.xlu0 %2598
        %v2600 = vadd.f32 %v2561, %v2562
        %2601 = vadd.xlane.f32.xlu0 %v2600
        %v2602 = vpop.xlane.xlu0 %2601
        %v2603 = vadd.f32 %v2563, %v2564
        %2604 = vadd.xlane.f32.xlu0 %v2603
        %v2605 = vpop.xlane.xlu0 %2604
        %v2606 = vadd.f32 %v2565, %v2566
        %2607 = vadd.xlane.f32.xlu0 %v2606
        %v2608 = vpop.xlane.xlu0 %2607
        %v2609 = vadd.f32 %v2567, %v2568
        %2610 = vadd.xlane.f32.xlu0 %v2609
        %v2611 = vpop.xlane.xlu0 %2610
        %v2612 = vadd.f32 %v2569, %v2570
        %2613 = vadd.xlane.f32.xlu0 %v2612
        %v2614 = vpop.xlane.xlu0 %2613
        %v2615 = vadd.f32 %v2571, %v2572
        %2616 = vadd.xlane.f32.xlu0 %v2615
        %v2617 = vpop.xlane.xlu0 %2616
        %v2618 = vadd.f32 %v2573, %v2574
        %2619 = vadd.xlane.f32.xlu0 %v2618
        %v2620 = vpop.xlane.xlu0 %2619
        %v2621 = vadd.f32 %v2575, %v2576
        %2622 = vadd.xlane.f32.xlu0 %v2621
        %v2623 = vpop.xlane.xlu0 %2622
        %v2624 = vadd.f32 %v2577, %v2578
        %2625 = vadd.xlane.f32.xlu0 %v2624
        %v2626 = vpop.xlane.xlu0 %2625
        %v2627 = vmul.f32 %v2581, 0.003921569
        %v2628 = vmul.f32 %v2584, 0.003921569
        %v2629 = vmul.f32 %v2587, 0.003921569
        %v2630 = vmul.f32 %v2590, 0.003921569
        %v2631 = vmul.f32 %v2593, 0.003921569
        %v2632 = vmul.f32 %v2596, 0.003921569
        %v2633 = vmul.f32 %v2599, 0.003921569
        %v2634 = vmul.f32 %v2602, 0.003921569
        %v2635 = vmul.f32 %v2605, 0.003921569
        %v2636 = vmul.f32 %v2608, 0.003921569
        %v2637 = vmul.f32 %v2611, 0.003921569
        %v2638 = vmul.f32 %v2614, 0.003921569
        %v2639 = vmul.f32 %v2617, 0.003921569
        %v2640 = vmul.f32 %v2620, 0.003921569
        %v2641 = vmul.f32 %v2623, 0.003921569
        %v2642 = vmul.f32 %v2626, 0.003921569
        %v2643 = vrsqrt.pop %v2627
        %v2644 = vrsqrt.pop %v2628
        %v2645 = vrsqrt.pop %v2629
        %v2646 = vrsqrt.pop %v2630
        %v2647 = vrsqrt.pop %v2631
        %v2648 = vrsqrt.pop %v2632
        %v2649 = vrsqrt.pop %v2633
        %v2650 = vrsqrt.pop %v2634
        %v2651 = vrsqrt.pop %v2635
        %v2652 = vrsqrt.pop %v2636
        %v2653 = vrsqrt.pop %v2637
        %v2654 = vrsqrt.pop %v2638
        %v2655 = vrsqrt.pop %v2639
        %v2656 = vrsqrt.pop %v2640
        %v2657 = vrsqrt.pop %v2641
        %v2658 = vrsqrt.pop %v2642
        %v2659 = vmul.f32 %v2515, %v2643
        %v2660 = vmul.f32 %v2516, %v2643
        %v2661 = vmul.f32 %v2517, %v2644
        %v2662 = vmul.f32 %v2518, %v2644
        %v2663 = vmul.f32 %v2519, %v2645
        %v2664 = vmul.f32 %v2520, %v2645
        %v2665 = vmul.f32 %v2521, %v2646
        %v2666 = vmul.f32 %v2522, %v2646
        %v2667 = vmul.f32 %v2523, %v2647
        %v2668 = vmul.f32 %v2524, %v2647
        %v2669 = vmul.f32 %v2525, %v2648
        %v2670 = vmul.f32 %v2526, %v2648
        %v2671 = vmul.f32 %v2527, %v2649
        %v2672 = vmul.f32 %v2528, %v2649
        %v2673 = vmul.f32 %v2529, %v2650
        %v2674 = vmul.f32 %v2530, %v2650
        %v2675 = vmul.f32 %v2531, %v2651
        %v2676 = vmul.f32 %v2532, %v2651
        %v2677 = vmul.f32 %v2533, %v2652
        %v2678 = vmul.f32 %v2534, %v2652
        %v2679 = vmul.f32 %v2535, %v2653
        %v2680 = vmul.f32 %v2536, %v2653
        %v2681 = vmul.f32 %v2537, %v2654
        %v2682 = vmul.f32 %v2538, %v2654
        %v2683 = vmul.f32 %v2539, %v2655
        %v2684 = vmul.f32 %v2540, %v2655
        %v2685 = vmul.f32 %v2541, %v2656
        %v2686 = vmul.f32 %v2542, %v2656
        %v2687 = vmul.f32 %v2543, %v2657
        %v2688 = vmul.f32 %v2544, %v2657
        %v2689 = vmul.f32 %v2545, %v2658
        %v2690 = vmul.f32 %v2546, %v2658
        %v2691 = vpack.c.bf16 %v2341, %v2339
        %v2692 = vpack.c.bf16 %v2342, %v2340
        %v2693 = vpack.c.bf16 %v2345, %v2343
        %v2694 = vpack.c.bf16 %v2346, %v2344
        %v2695 = vpack.c.bf16 %v2349, %v2347
        %v2696 = vpack.c.bf16 %v2350, %v2348
        %v2697 = vpack.c.bf16 %v2353, %v2351
        %v2698 = vpack.c.bf16 %v2354, %v2352
        %v2699 = vpack.c.bf16 %v2357, %v2355
        %v2700 = vpack.c.bf16 %v2358, %v2356
        %v2701 = vpack.c.bf16 %v2361, %v2359
        %v2702 = vpack.c.bf16 %v2362, %v2360
        %v2703 = vpack.c.bf16 %v2365, %v2363
        %v2704 = vpack.c.bf16 %v2366, %v2364
        %v2705 = vpack.c.bf16 %v2369, %v2367
        %v2706 = vpack.c.bf16 %v2370, %v2368
        %v2707 = vld [vmem:[#allocation13] sm:$0xf]
        %v2708 = vld [vmem:[#allocation13 + $0x4] sm:$0xf]
        %v2709 = vld [vmem:[#allocation13 + $0x8] sm:$0xf]
        %v2710 = vld [vmem:[#allocation13 + $0xc] sm:$0xf]
        %v2711 = vld [vmem:[#allocation13 + $0x10] sm:$0xf]
        %v2712 = vld [vmem:[#allocation13 + $0x14] sm:$0xf]
        %v2713 = vld [vmem:[#allocation13 + $0x18] sm:$0xf]
        %v2714 = vld [vmem:[#allocation13 + $0x1c] sm:$0xf]
        %v2715 = vld [vmem:[#allocation13 + $0x20] sm:$0xf]
        %v2716 = vld [vmem:[#allocation13 + $0x24] sm:$0xf]
        %v2717 = vld [vmem:[#allocation13 + $0x28] sm:$0xf]
        %v2718 = vld [vmem:[#allocation13 + $0x2c] sm:$0xf]
        %v2719 = vld [vmem:[#allocation13 + $0x30] sm:$0xf]
        %v2720 = vld [vmem:[#allocation13 + $0x34] sm:$0xf]
        %v2721 = vld [vmem:[#allocation13 + $0x38] sm:$0xf]
        %v2722 = vld [vmem:[#allocation13 + $0x3c] sm:$0xf]
        %v2723 = vld [vmem:[#allocation13 + $0x40] sm:$0xf]
        %v2724 = vld [vmem:[#allocation13 + $0x44] sm:$0xf]
        %v2725 = vld [vmem:[#allocation13 + $0x48] sm:$0xf]
        %v2726 = vld [vmem:[#allocation13 + $0x4c] sm:$0xf]
        %v2727 = vld [vmem:[#allocation13 + $0x50] sm:$0xf]
        %v2728 = vld [vmem:[#allocation13 + $0x54] sm:$0xf]
        %v2729 = vld [vmem:[#allocation13 + $0x58] sm:$0xf]
        %v2730 = vld [vmem:[#allocation13 + $0x5c] sm:$0xf]
        %v2731 = vld [vmem:[#allocation13 + $0x60] sm:$0xf]
        %v2732 = vld [vmem:[#allocation13 + $0x64] sm:$0xf]
        %v2733 = vld [vmem:[#allocation13 + $0x68] sm:$0xf]
        %v2734 = vld [vmem:[#allocation13 + $0x6c] sm:$0xf]
        %v2735 = vld [vmem:[#allocation13 + $0x70] sm:$0xf]
        %v2736 = vld [vmem:[#allocation13 + $0x74] sm:$0xf]
        %v2737 = vld [vmem:[#allocation13 + $0x78] sm:$0xf]
        %v2738 = vld [vmem:[#allocation13 + $0x7c] sm:$0xf]
        %v2739 = vpack.c.bf16 %v2661, %v2659
        %v2740 = vpack.c.bf16 %v2662, %v2660
        %v2741 = vpack.c.bf16 %v2665, %v2663
        %v2742 = vpack.c.bf16 %v2666, %v2664
        %v2743 = vpack.c.bf16 %v2669, %v2667
        %v2744 = vpack.c.bf16 %v2670, %v2668
        %v2745 = vpack.c.bf16 %v2673, %v2671
        %v2746 = vpack.c.bf16 %v2674, %v2672
        %v2747 = vpack.c.bf16 %v2677, %v2675
        %v2748 = vpack.c.bf16 %v2678, %v2676
        %v2749 = vpack.c.bf16 %v2681, %v2679
        %v2750 = vpack.c.bf16 %v2682, %v2680
        %v2751 = vpack.c.bf16 %v2685, %v2683
        %v2752 = vpack.c.bf16 %v2686, %v2684
        %v2753 = vpack.c.bf16 %v2689, %v2687
        %v2754 = vpack.c.bf16 %v2690, %v2688
        %v2755 = vld [vmem:[#allocation14] sm:$0xf]
        %v2756 = vld [vmem:[#allocation14 + $0x4] sm:$0xf]
        %v2757 = vld [vmem:[#allocation14 + $0x8] sm:$0xf]
        %v2758 = vld [vmem:[#allocation14 + $0xc] sm:$0xf]
        %v2759 = vld [vmem:[#allocation14 + $0x10] sm:$0xf]
        %v2760 = vld [vmem:[#allocation14 + $0x14] sm:$0xf]
        %v2761 = vld [vmem:[#allocation14 + $0x18] sm:$0xf]
        %v2762 = vld [vmem:[#allocation14 + $0x1c] sm:$0xf]
        %v2763 = vld [vmem:[#allocation14 + $0x20] sm:$0xf]
        %v2764 = vld [vmem:[#allocation14 + $0x24] sm:$0xf]
        %v2765 = vld [vmem:[#allocation14 + $0x28] sm:$0xf]
        %v2766 = vld [vmem:[#allocation14 + $0x2c] sm:$0xf]
        %v2767 = vld [vmem:[#allocation14 + $0x30] sm:$0xf]
        %v2768 = vld [vmem:[#allocation14 + $0x34] sm:$0xf]
        %v2769 = vld [vmem:[#allocation14 + $0x38] sm:$0xf]
        %v2770 = vld [vmem:[#allocation14 + $0x3c] sm:$0xf]
        %v2771 = vld [vmem:[#allocation14 + $0x40] sm:$0xf]
        %v2772 = vld [vmem:[#allocation14 + $0x44] sm:$0xf]
        %v2773 = vld [vmem:[#allocation14 + $0x48] sm:$0xf]
        %v2774 = vld [vmem:[#allocation14 + $0x4c] sm:$0xf]
        %v2775 = vld [vmem:[#allocation14 + $0x50] sm:$0xf]
        %v2776 = vld [vmem:[#allocation14 + $0x54] sm:$0xf]
        %v2777 = vld [vmem:[#allocation14 + $0x58] sm:$0xf]
        %v2778 = vld [vmem:[#allocation14 + $0x5c] sm:$0xf]
        %v2779 = vld [vmem:[#allocation14 + $0x60] sm:$0xf]
        %v2780 = vld [vmem:[#allocation14 + $0x64] sm:$0xf]
        %v2781 = vld [vmem:[#allocation14 + $0x68] sm:$0xf]
        %v2782 = vld [vmem:[#allocation14 + $0x6c] sm:$0xf]
        %v2783 = vld [vmem:[#allocation14 + $0x70] sm:$0xf]
        %v2784 = vld [vmem:[#allocation14 + $0x74] sm:$0xf]
        %v2785 = vld [vmem:[#allocation14 + $0x78] sm:$0xf]
        %v2786 = vld [vmem:[#allocation14 + $0x7c] sm:$0xf]
        %v2819 = vunpack.c.l.b16 %v2755
        %v2820 = vunpack.c.l.b16 %v2756
        %v2821 = vunpack.c.l.b16 %v2757
        %v2822 = vunpack.c.l.b16 %v2758
        %v2823 = vunpack.c.l.b16 %v2759
        %v2824 = vunpack.c.l.b16 %v2760
        %v2825 = vunpack.c.l.b16 %v2761
        %v2826 = vunpack.c.l.b16 %v2762
        %v2827 = vunpack.c.l.b16 %v2763
        %v2828 = vunpack.c.l.b16 %v2764
        %v2829 = vunpack.c.l.b16 %v2765
        %v2830 = vunpack.c.l.b16 %v2766
        %v2831 = vunpack.c.l.b16 %v2767
        %v2832 = vunpack.c.l.b16 %v2768
        %v2833 = vunpack.c.l.b16 %v2769
        %v2834 = vunpack.c.l.b16 %v2770
        %v2835 = vunpack.c.l.b16 %v2771
        %v2836 = vunpack.c.l.b16 %v2772
        %v2837 = vunpack.c.l.b16 %v2773
        %v2838 = vunpack.c.l.b16 %v2774
        %v2839 = vunpack.c.l.b16 %v2775
        %v2840 = vunpack.c.l.b16 %v2776
        %v2841 = vunpack.c.l.b16 %v2777
        %v2842 = vunpack.c.l.b16 %v2778
        %v2843 = vunpack.c.l.b16 %v2779
        %v2844 = vunpack.c.l.b16 %v2780
        %v2845 = vunpack.c.l.b16 %v2781
        %v2846 = vunpack.c.l.b16 %v2782
        %v2847 = vunpack.c.l.b16 %v2783
        %v2848 = vunpack.c.l.b16 %v2784
        %v2849 = vunpack.c.l.b16 %v2785
        %v2850 = vunpack.c.l.b16 %v2786
        %v2851 = vpack.c.b16 %v2820, %v2819
        %v2852 = vpack.c.b16 %v2822, %v2821
        %v2853 = vpack.c.b16 %v2824, %v2823
        %v2854 = vpack.c.b16 %v2826, %v2825
        %v2855 = vpack.c.b16 %v2828, %v2827
        %v2856 = vpack.c.b16 %v2830, %v2829
        %v2857 = vpack.c.b16 %v2832, %v2831
        %v2858 = vpack.c.b16 %v2834, %v2833
        %v2859 = vpack.c.b16 %v2836, %v2835
        %v2860 = vpack.c.b16 %v2838, %v2837
        %v2861 = vpack.c.b16 %v2840, %v2839
        %v2862 = vpack.c.b16 %v2842, %v2841
        %v2863 = vpack.c.b16 %v2844, %v2843
        %v2864 = vpack.c.b16 %v2846, %v2845
        %v2865 = vpack.c.b16 %v2848, %v2847
        %v2866 = vpack.c.b16 %v2850, %v2849
        %2883 = vmatprep.subr.bf16.mxu0 0
        %2884 = vmatpush1.bf16.msra.mxu0 %v2851
        %2885 = vmatprep.subr.bf16.mxu0 0
        %2886 = vmatpush1.bf16.msra.mxu0 %v2852
        %2887 = vmatprep.subr.bf16.mxu0 0
        %2888 = vmatpush1.bf16.msra.mxu0 %v2853
        %2889 = vmatprep.subr.bf16.mxu0 0
        %2890 = vmatpush1.bf16.msra.mxu0 %v2854
        %2891 = vmatprep.subr.bf16.mxu0 0
        %2892 = vmatpush1.bf16.msra.mxu0 %v2855
        %2893 = vmatprep.subr.bf16.mxu0 0
        %2894 = vmatpush1.bf16.msra.mxu0 %v2856
        %2895 = vmatprep.subr.bf16.mxu0 0
        %2896 = vmatpush1.bf16.msra.mxu0 %v2857
        %2897 = vmatprep.subr.bf16.mxu0 0
        %2898 = vmatpush1.bf16.msra.mxu0 %v2858
        %2899 = vmatprep.subr.bf16.mxu0 0
        %2900 = vmatpush1.bf16.msra.mxu0 %v2859
        %2901 = vmatprep.subr.bf16.mxu0 0
        %2902 = vmatpush1.bf16.msra.mxu0 %v2860
        %2903 = vmatprep.subr.bf16.mxu0 0
        %2904 = vmatpush1.bf16.msra.mxu0 %v2861
        %2905 = vmatprep.subr.bf16.mxu0 0
        %2906 = vmatpush1.bf16.msra.mxu0 %v2862
        %2907 = vmatprep.subr.bf16.mxu0 0
        %2908 = vmatpush1.bf16.msra.mxu0 %v2863
        %2909 = vmatprep.subr.bf16.mxu0 0
        %2910 = vmatpush1.bf16.msra.mxu0 %v2864
        %2911 = vmatprep.subr.bf16.mxu0 0
        %2912 = vmatpush1.bf16.msra.mxu0 %v2865
        %2913 = vmatprep.subr.bf16.mxu0 0
        %2914 = vmatpush1.bf16.msra.mxu0 %v2866
        %2915 = vmatprep.mubr.bf16.mxu0 %v2740
        %2916 = vmatmul.mubr.bf16.gmra.mrb[0].mxu0 %v2739
        %v2917 = vpop.f32.mrb[0].mxu0
        %v2918 = vadd.f32 0.0, %v2917
        %v2919 = vpop.f32.mrb[0].mxu0
        %v2920 = vpop.f32.mrb[0].mxu0
        %v2921 = vadd.f32 0.0, %v2920
        %v2922 = vpop.f32.mrb[0].mxu0
        %2923 = vmatprep.mubr.bf16.mxu0 %v2742
        %2924 = vmatmul.mubr.bf16.gmra.mrb[0].mxu0 %v2741
        %v2925 = vpop.f32.mrb[0].mxu0
        %v2926 = vadd.f32 0.0, %v2925
        %v2927 = vpop.f32.mrb[0].mxu0
        %v2928 = vpop.f32.mrb[0].mxu0
        %v2929 = vadd.f32 0.0, %v2928
        %v2930 = vpop.f32.mrb[0].mxu0
        %2931 = vmatprep.mubr.bf16.mxu0 %v2744
        %2932 = vmatmul.mubr.bf16.gmra.mrb[0].mxu0 %v2743
        %v2933 = vpop.f32.mrb[0].mxu0
        %v2934 = vadd.f32 0.0, %v2933
        %v2935 = vpop.f32.mrb[0].mxu0
        %v2936 = vpop.f32.mrb[0].mxu0
        %v2937 = vadd.f32 0.0, %v2936
        %v2938 = vpop.f32.mrb[0].mxu0
        %2939 = vmatprep.mubr.bf16.mxu0 %v2746
        %2940 = vmatmul.mubr.bf16.gmra.mrb[0].mxu0 %v2745
        %v2941 = vpop.f32.mrb[0].mxu0
        %v2942 = vadd.f32 0.0, %v2941
        %v2943 = vpop.f32.mrb[0].mxu0
        %v2944 = vpop.f32.mrb[0].mxu0
        %v2945 = vadd.f32 0.0, %v2944
        %v2946 = vpop.f32.mrb[0].mxu0
        %2947 = vmatprep.mubr.bf16.mxu0 %v2748
        %2948 = vmatmul.mubr.bf16.gmra.mrb[0].mxu0 %v2747
        %v2949 = vpop.f32.mrb[0].mxu0
        %v2950 = vadd.f32 0.0, %v2949
        %v2951 = vpop.f32.mrb[0].mxu0
        %v2952 = vpop.f32.mrb[0].mxu0
        %v2953 = vadd.f32 0.0, %v2952
        %v2954 = vpop.f32.mrb[0].mxu0
        %2955 = vmatprep.mubr.bf16.mxu0 %v2750
        %2956 = vmatmul.mubr.bf16.gmra.mrb[0].mxu0 %v2749
        %v2957 = vpop.f32.mrb[0].mxu0
        %v2958 = vadd.f32 0.0, %v2957
        %v2959 = vpop.f32.mrb[0].mxu0
        %v2960 = vpop.f32.mrb[0].mxu0
        %v2961 = vadd.f32 0.0, %v2960
        %v2962 = vpop.f32.mrb[0].mxu0
        %2963 = vmatprep.mubr.bf16.mxu0 %v2752
        %2964 = vmatmul.mubr.bf16.gmra.mrb[0].mxu0 %v2751
        %v2965 = vpop.f32.mrb[0].mxu0
        %v2966 = vadd.f32 0.0, %v2965
        %v2967 = vpop.f32.mrb[0].mxu0
        %v2968 = vpop.f32.mrb[0].mxu0
        %v2969 = vadd.f32 0.0, %v2968
        %v2970 = vpop.f32.mrb[0].mxu0
        %2971 = vmatprep.mubr.bf16.mxu0 %v2754
        %2972 = vmatmul.mubr.bf16.gmra.mrb[0].mxu0 %v2753
        %v2973 = vpop.f32.mrb[0].mxu0
        %v2974 = vadd.f32 0.0, %v2973
        %v2975 = vpop.f32.mrb[0].mxu0
        %v2976 = vpop.f32.mrb[0].mxu0
        %v2977 = vadd.f32 0.0, %v2976
        %v2978 = vpop.f32.mrb[0].mxu0
        %2979 = vdwg.mxu0
        %v3012 = vunpack.c.l.b16 %v2707
        %v3013 = vunpack.c.l.b16 %v2708
        %v3014 = vunpack.c.l.b16 %v2709
        %v3015 = vunpack.c.l.b16 %v2710
        %v3016 = vunpack.c.l.b16 %v2711
        %v3017 = vunpack.c.l.b16 %v2712
        %v3018 = vunpack.c.l.b16 %v2713
        %v3019 = vunpack.c.l.b16 %v2714
        %v3020 = vunpack.c.l.b16 %v2715
        %v3021 = vunpack.c.l.b16 %v2716
        %v3022 = vunpack.c.l.b16 %v2717
        %v3023 = vunpack.c.l.b16 %v2718
        %v3024 = vunpack.c.l.b16 %v2719
        %v3025 = vunpack.c.l.b16 %v2720
        %v3026 = vunpack.c.l.b16 %v2721
        %v3027 = vunpack.c.l.b16 %v2722
        %v3028 = vunpack.c.l.b16 %v2723
        %v3029 = vunpack.c.l.b16 %v2724
        %v3030 = vunpack.c.l.b16 %v2725
        %v3031 = vunpack.c.l.b16 %v2726
        %v3032 = vunpack.c.l.b16 %v2727
        %v3033 = vunpack.c.l.b16 %v2728
        %v3034 = vunpack.c.l.b16 %v2729
        %v3035 = vunpack.c.l.b16 %v2730
        %v3036 = vunpack.c.l.b16 %v2731
        %v3037 = vunpack.c.l.b16 %v2732
        %v3038 = vunpack.c.l.b16 %v2733
        %v3039 = vunpack.c.l.b16 %v2734
        %v3040 = vunpack.c.l.b16 %v2735
        %v3041 = vunpack.c.l.b16 %v2736
        %v3042 = vunpack.c.l.b16 %v2737
        %v3043 = vunpack.c.l.b16 %v2738
        %v3044 = vpack.c.b16 %v3013, %v3012
        %v3045 = vpack.c.b16 %v3015, %v3014
        %v3046 = vpack.c.b16 %v3017, %v3016
        %v3047 = vpack.c.b16 %v3019, %v3018
        %v3048 = vpack.c.b16 %v3021, %v3020
        %v3049 = vpack.c.b16 %v3023, %v3022
        %v3050 = vpack.c.b16 %v3025, %v3024
        %v3051 = vpack.c.b16 %v3027, %v3026
        %v3052 = vpack.c.b16 %v3029, %v3028
        %v3053 = vpack.c.b16 %v3031, %v3030
        %v3054 = vpack.c.b16 %v3033, %v3032
        %v3055 = vpack.c.b16 %v3035, %v3034
        %v3056 = vpack.c.b16 %v3037, %v3036
        %v3057 = vpack.c.b16 %v3039, %v3038
        %v3058 = vpack.c.b16 %v3041, %v3040
        %v3059 = vpack.c.b16 %v3043, %v3042
        %3076 = vmatprep.subr.bf16.mxu0 0
        %3077 = vmatpush1.bf16.msra.mxu0 %v3044
        %3078 = vmatprep.subr.bf16.mxu0 0
        %3079 = vmatpush1.bf16.msra.mxu0 %v3045
        %3080 = vmatprep.subr.bf16.mxu0 0
        %3081 = vmatpush1.bf16.msra.mxu0 %v3046
        %3082 = vmatprep.subr.bf16.mxu0 0
        %3083 = vmatpush1.bf16.msra.mxu0 %v3047
        %3084 = vmatprep.subr.bf16.mxu0 0
        %3085 = vmatpush1.bf16.msra.mxu0 %v3048
        %3086 = vmatprep.subr.bf16.mxu0 0
        %3087 = vmatpush1.bf16.msra.mxu0 %v3049
        %3088 = vmatprep.subr.bf16.mxu0 0
        %3089 = vmatpush1.bf16.msra.mxu0 %v3050
        %3090 = vmatprep.subr.bf16.mxu0 0
        %3091 = vmatpush1.bf16.msra.mxu0 %v3051
        %3092 = vmatprep.subr.bf16.mxu0 0
        %3093 = vmatpush1.bf16.msra.mxu0 %v3052
        %3094 = vmatprep.subr.bf16.mxu0 0
        %3095 = vmatpush1.bf16.msra.mxu0 %v3053
        %3096 = vmatprep.subr.bf16.mxu0 0
        %3097 = vmatpush1.bf16.msra.mxu0 %v3054
        %3098 = vmatprep.subr.bf16.mxu0 0
        %3099 = vmatpush1.bf16.msra.mxu0 %v3055
        %3100 = vmatprep.subr.bf16.mxu0 0
        %3101 = vmatpush1.bf16.msra.mxu0 %v3056
        %3102 = vmatprep.subr.bf16.mxu0 0
        %3103 = vmatpush1.bf16.msra.mxu0 %v3057
        %3104 = vmatprep.subr.bf16.mxu0 0
        %3105 = vmatpush1.bf16.msra.mxu0 %v3058
        %3106 = vmatprep.subr.bf16.mxu0 0
        %3107 = vmatpush1.bf16.msra.mxu0 %v3059
        %3108 = vmatprep.mubr.bf16.mxu0 %v2692
        %3109 = vmatmul.mubr.bf16.gmra.mrb[0].mxu0 %v2691
        %v3110 = vpop.f32.mrb[0].mxu0
        %v3111 = vadd.f32 %v2918, %v3110
        %v3112 = vpop.f32.mrb[0].mxu0
        %v3113 = vpop.f32.mrb[0].mxu0
        %v3114 = vadd.f32 %v2921, %v3113
        %v3115 = vpop.f32.mrb[0].mxu0
        %3116 = vmatprep.mubr.bf16.mxu0 %v2694
        %3117 = vmatmul.mubr.bf16.gmra.mrb[0].mxu0 %v2693
        %v3118 = vpop.f32.mrb[0].mxu0
        %v3119 = vadd.f32 %v2926, %v3118
        %v3120 = vpop.f32.mrb[0].mxu0
        %v3121 = vpop.f32.mrb[0].mxu0
        %v3122 = vadd.f32 %v2929, %v3121
        %v3123 = vpop.f32.mrb[0].mxu0
        %3124 = vmatprep.mubr.bf16.mxu0 %v2696
        %3125 = vmatmul.mubr.bf16.gmra.mrb[0].mxu0 %v2695
        %v3126 = vpop.f32.mrb[0].mxu0
        %v3127 = vadd.f32 %v2934, %v3126
        %v3128 = vpop.f32.mrb[0].mxu0
        %v3129 = vpop.f32.mrb[0].mxu0
        %v3130 = vadd.f32 %v2937, %v3129
        %v3131 = vpop.f32.mrb[0].mxu0
        %3132 = vmatprep.mubr.bf16.mxu0 %v2698
        %3133 = vmatmul.mubr.bf16.gmra.mrb[0].mxu0 %v2697
        %v3134 = vpop.f32.mrb[0].mxu0
        %v3135 = vadd.f32 %v2942, %v3134
        %v3136 = vpop.f32.mrb[0].mxu0
        %v3137 = vpop.f32.mrb[0].mxu0
        %v3138 = vadd.f32 %v2945, %v3137
        %v3139 = vpop.f32.mrb[0].mxu0
        %3140 = vmatprep.mubr.bf16.mxu0 %v2700
        %3141 = vmatmul.mubr.bf16.gmra.mrb[0].mxu0 %v2699
        %v3142 = vpop.f32.mrb[0].mxu0
        %v3143 = vadd.f32 %v2950, %v3142
        %v3144 = vpop.f32.mrb[0].mxu0
        %v3145 = vpop.f32.mrb[0].mxu0
        %v3146 = vadd.f32 %v2953, %v3145
        %v3147 = vpop.f32.mrb[0].mxu0
        %3148 = vmatprep.mubr.bf16.mxu0 %v2702
        %3149 = vmatmul.mubr.bf16.gmra.mrb[0].mxu0 %v2701
        %v3150 = vpop.f32.mrb[0].mxu0
        %v3151 = vadd.f32 %v2958, %v3150
        %v3152 = vpop.f32.mrb[0].mxu0
        %v3153 = vpop.f32.mrb[0].mxu0
        %v3154 = vadd.f32 %v2961, %v3153
        %v3155 = vpop.f32.mrb[0].mxu0
        %3156 = vmatprep.mubr.bf16.mxu0 %v2704
        %3157 = vmatmul.mubr.bf16.gmra.mrb[0].mxu0 %v2703
        %v3158 = vpop.f32.mrb[0].mxu0
        %v3159 = vadd.f32 %v2966, %v3158
        %v3160 = vpop.f32.mrb[0].mxu0
        %v3161 = vpop.f32.mrb[0].mxu0
        %v3162 = vadd.f32 %v2969, %v3161
        %v3163 = vpop.f32.mrb[0].mxu0
        %3164 = vmatprep.mubr.bf16.mxu0 %v2706
        %3165 = vmatmul.mubr.bf16.gmra.mrb[0].mxu0 %v2705
        %v3166 = vpop.f32.mrb[0].mxu0
        %v3167 = vadd.f32 %v2974, %v3166
        %v3168 = vpop.f32.mrb[0].mxu0
        %v3169 = vpop.f32.mrb[0].mxu0
        %v3170 = vadd.f32 %v2977, %v3169
        %v3171 = vpop.f32.mrb[0].mxu0
        %3172 = vdwg.mxu0
        %v3173 = vld [vmem:[%s8] sm:$0x1]
        %v3175 = vlaneseq
        %v3176 = vshrl.u32 %v3175, 7
        %v3177 = vsub.s32 0, %v3176
        %v3178 = vrot.slane %v3173, %v3177
        %v3180 = vadd.f32 %v3111, %v3178
        %v3181 = vadd.f32 %v3114, %v3178
        %v3182 = vadd.f32 %v3119, %v3178
        %v3183 = vadd.f32 %v3122, %v3178
        %v3184 = vadd.f32 %v3127, %v3178
        %v3185 = vadd.f32 %v3130, %v3178
        %v3186 = vadd.f32 %v3135, %v3178
        %v3187 = vadd.f32 %v3138, %v3178
        %v3188 = vadd.f32 %v3143, %v3178
        %v3189 = vadd.f32 %v3146, %v3178
        %v3190 = vadd.f32 %v3151, %v3178
        %v3191 = vadd.f32 %v3154, %v3178
        %v3192 = vadd.f32 %v3159, %v3178
        %v3193 = vadd.f32 %v3162, %v3178
        %v3194 = vadd.f32 %v3167, %v3178
        %v3195 = vadd.f32 %v3170, %v3178
        %v3196 = vmax.f32 %v3180, 0.0
        %v3197 = vmax.f32 %v3181, 0.0
        %v3198 = vmax.f32 %v3182, 0.0
        %v3199 = vmax.f32 %v3183, 0.0
        %v3200 = vmax.f32 %v3184, 0.0
        %v3201 = vmax.f32 %v3185, 0.0
        %v3202 = vmax.f32 %v3186, 0.0
        %v3203 = vmax.f32 %v3187, 0.0
        %v3204 = vmax.f32 %v3188, 0.0
        %v3205 = vmax.f32 %v3189, 0.0
        %v3206 = vmax.f32 %v3190, 0.0
        %v3207 = vmax.f32 %v3191, 0.0
        %v3208 = vmax.f32 %v3192, 0.0
        %v3209 = vmax.f32 %v3193, 0.0
        %v3210 = vmax.f32 %v3194, 0.0
        %v3211 = vmax.f32 %v3195, 0.0
        %v3212 = vpack.c.bf16 %v3197, %v3196
        %v3213 = vpack.c.bf16 %v3199, %v3198
        %v3214 = vpack.c.bf16 %v3201, %v3200
        %v3215 = vpack.c.bf16 %v3203, %v3202
        %v3216 = vpack.c.bf16 %v3205, %v3204
        %v3217 = vpack.c.bf16 %v3207, %v3206
        %v3218 = vpack.c.bf16 %v3209, %v3208
        %v3219 = vpack.c.bf16 %v3211, %v3210
        %v3220 = vld [vmem:[#allocation16] sm:$0xf]
        %v3221 = vld [vmem:[#allocation16 + $0x4] sm:$0xf]
        %v3222 = vld [vmem:[#allocation16 + $0x8] sm:$0xf]
        %v3223 = vld [vmem:[#allocation16 + $0xc] sm:$0xf]
        %v3224 = vld [vmem:[#allocation16 + $0x10] sm:$0xf]
        %v3225 = vld [vmem:[#allocation16 + $0x14] sm:$0xf]
        %v3226 = vld [vmem:[#allocation16 + $0x18] sm:$0xf]
        %v3227 = vld [vmem:[#allocation16 + $0x1c] sm:$0xf]
        %v3228 = vld [vmem:[#allocation16 + $0x20] sm:$0xf]
        %v3229 = vld [vmem:[#allocation16 + $0x24] sm:$0xf]
        %v3230 = vld [vmem:[#allocation16 + $0x28] sm:$0xf]
        %v3231 = vld [vmem:[#allocation16 + $0x2c] sm:$0xf]
        %v3232 = vld [vmem:[#allocation16 + $0x30] sm:$0xf]
        %v3233 = vld [vmem:[#allocation16 + $0x34] sm:$0xf]
        %v3234 = vld [vmem:[#allocation16 + $0x38] sm:$0xf]
        %v3235 = vld [vmem:[#allocation16 + $0x3c] sm:$0xf]
        %v3236 = vld [vmem:[%s10] sm:$0x1]
        %v3238 = vlaneseq
        %v3239 = vshrl.u32 %v3238, 7
        %v3240 = vsub.s32 0, %v3239
        %v3241 = vrot.slane %v3236, %v3240
        %v3259 = vunpack.c.l.b16 %v3220
        %v3260 = vunpack.c.l.b16 %v3221
        %v3261 = vunpack.c.l.b16 %v3222
        %v3262 = vunpack.c.l.b16 %v3223
        %v3263 = vunpack.c.l.b16 %v3224
        %v3264 = vunpack.c.l.b16 %v3225
        %v3265 = vunpack.c.l.b16 %v3226
        %v3266 = vunpack.c.l.b16 %v3227
        %v3267 = vunpack.c.l.b16 %v3228
        %v3268 = vunpack.c.l.b16 %v3229
        %v3269 = vunpack.c.l.b16 %v3230
        %v3270 = vunpack.c.l.b16 %v3231
        %v3271 = vunpack.c.l.b16 %v3232
        %v3272 = vunpack.c.l.b16 %v3233
        %v3273 = vunpack.c.l.b16 %v3234
        %v3274 = vunpack.c.l.b16 %v3235
        %v3275 = vpack.c.b16 %v3260, %v3259
        %v3276 = vpack.c.b16 %v3262, %v3261
        %v3277 = vpack.c.b16 %v3264, %v3263
        %v3278 = vpack.c.b16 %v3266, %v3265
        %v3279 = vpack.c.b16 %v3268, %v3267
        %v3280 = vpack.c.b16 %v3270, %v3269
        %v3281 = vpack.c.b16 %v3272, %v3271
        %v3282 = vpack.c.b16 %v3274, %v3273
        %3291 = vmatprep.subr.bf16.mxu0 0
        %3292 = vmatpush1.bf16.msra.mxu0 %v3275
        %3293 = vmatprep.subr.bf16.mxu0 0
        %3294 = vmatpush1.bf16.msra.mxu0 %v3276
        %3295 = vmatprep.subr.bf16.mxu0 0
        %3296 = vmatpush1.bf16.msra.mxu0 %v3277
        %3297 = vmatprep.subr.bf16.mxu0 0
        %3298 = vmatpush1.bf16.msra.mxu0 %v3278
        %3299 = vmatprep.subr.bf16.mxu0 0
        %3300 = vmatpush1.bf16.msra.mxu0 %v3279
        %3301 = vmatprep.subr.bf16.mxu0 0
        %3302 = vmatpush1.bf16.msra.mxu0 %v3280
        %3303 = vmatprep.subr.bf16.mxu0 0
        %3304 = vmatpush1.bf16.msra.mxu0 %v3281
        %3305 = vmatprep.subr.bf16.mxu0 0
        %3306 = vmatpush1.bf16.msra.mxu0 %v3282
        %3307 = vmatprep.subr.bf16.mxu0 0
        %3308 = vmatpush1.bf16.msra.mxu0 0
        %3309 = vmatprep.subr.bf16.mxu0 0
        %3310 = vmatpush1.bf16.msra.mxu0 0
        %3311 = vmatprep.subr.bf16.mxu0 0
        %3312 = vmatpush1.bf16.msra.mxu0 0
        %3313 = vmatprep.subr.bf16.mxu0 0
        %3314 = vmatpush1.bf16.msra.mxu0 0
        %3315 = vmatprep.subr.bf16.mxu0 0
        %3316 = vmatpush1.bf16.msra.mxu0 0
        %3317 = vmatprep.subr.bf16.mxu0 0
        %3318 = vmatpush1.bf16.msra.mxu0 0
        %3319 = vmatprep.subr.bf16.mxu0 0
        %3320 = vmatpush1.bf16.msra.mxu0 0
        %3321 = vmatprep.subr.bf16.mxu0 0
        %3322 = vmatpush1.bf16.msra.mxu0 0
        %3323 = vmatprep.mubr.bf16.mxu0 0
        %3324 = vmatmul.mubr.bf16.gmra.mrb[0].mxu0 %v3212
        %v3325 = vpop.f32.mrb[0].mxu0
        %v3326 = vadd.f32 %v3241, %v3325
        %v3327 = vpop.f32.mrb[0].mxu0
        %v3328 = vpop.f32.mrb[0].mxu0
        %v3329 = vadd.f32 %v3241, %v3328
        %v3330 = vpop.f32.mrb[0].mxu0
        %3331 = vmatprep.mubr.bf16.mxu0 0
        %3332 = vmatmul.mubr.bf16.gmra.mrb[0].mxu0 %v3213
        %v3333 = vpop.f32.mrb[0].mxu0
        %v3334 = vadd.f32 %v3241, %v3333
        %v3335 = vpop.f32.mrb[0].mxu0
        %v3336 = vpop.f32.mrb[0].mxu0
        %v3337 = vadd.f32 %v3241, %v3336
        %v3338 = vpop.f32.mrb[0].mxu0
        %3339 = vmatprep.mubr.bf16.mxu0 0
        %3340 = vmatmul.mubr.bf16.gmra.mrb[0].mxu0 %v3214
        %v3341 = vpop.f32.mrb[0].mxu0
        %v3342 = vadd.f32 %v3241, %v3341
        %v3343 = vpop.f32.mrb[0].mxu0
        %v3344 = vpop.f32.mrb[0].mxu0
        %v3345 = vadd.f32 %v3241, %v3344
        %v3346 = vpop.f32.mrb[0].mxu0
        %3347 = vmatprep.mubr.bf16.mxu0 0
        %3348 = vmatmul.mubr.bf16.gmra.mrb[0].mxu0 %v3215
        %v3349 = vpop.f32.mrb[0].mxu0
        %v3350 = vadd.f32 %v3241, %v3349
        %v3351 = vpop.f32.mrb[0].mxu0
        %v3352 = vpop.f32.mrb[0].mxu0
        %v3353 = vadd.f32 %v3241, %v3352
        %v3354 = vpop.f32.mrb[0].mxu0
        %3355 = vmatprep.mubr.bf16.mxu0 0
        %3356 = vmatmul.mubr.bf16.gmra.mrb[0].mxu0 %v3216
        %v3357 = vpop.f32.mrb[0].mxu0
        %v3358 = vadd.f32 %v3241, %v3357
        %v3359 = vpop.f32.mrb[0].mxu0
        %v3360 = vpop.f32.mrb[0].mxu0
        %v3361 = vadd.f32 %v3241, %v3360
        %v3362 = vpop.f32.mrb[0].mxu0
        %3363 = vmatprep.mubr.bf16.mxu0 0
        %3364 = vmatmul.mubr.bf16.gmra.mrb[0].mxu0 %v3217
        %v3365 = vpop.f32.mrb[0].mxu0
        %v3366 = vadd.f32 %v3241, %v3365
        %v3367 = vpop.f32.mrb[0].mxu0
        %v3368 = vpop.f32.mrb[0].mxu0
        %v3369 = vadd.f32 %v3241, %v3368
        %v3370 = vpop.f32.mrb[0].mxu0
        %3371 = vmatprep.mubr.bf16.mxu0 0
        %3372 = vmatmul.mubr.bf16.gmra.mrb[0].mxu0 %v3218
        %v3373 = vpop.f32.mrb[0].mxu0
        %v3374 = vadd.f32 %v3241, %v3373
        %v3375 = vpop.f32.mrb[0].mxu0
        %v3376 = vpop.f32.mrb[0].mxu0
        %v3377 = vadd.f32 %v3241, %v3376
        %v3378 = vpop.f32.mrb[0].mxu0
        %3379 = vmatprep.mubr.bf16.mxu0 0
        %3380 = vmatmul.mubr.bf16.gmra.mrb[0].mxu0 %v3219
        %v3381 = vpop.f32.mrb[0].mxu0
        %v3382 = vadd.f32 %v3241, %v3381
        %v3383 = vpop.f32.mrb[0].mxu0
        %v3384 = vpop.f32.mrb[0].mxu0
        %v3385 = vadd.f32 %v3241, %v3384
        %v3386 = vpop.f32.mrb[0].mxu0
        %3387 = vdwg.mxu0
        %v3388 = vmax.f32 %v3326, 0.0
        %v3389 = vmax.f32 %v3329, 0.0
        %v3390 = vmax.f32 %v3334, 0.0
        %v3391 = vmax.f32 %v3337, 0.0
        %v3392 = vmax.f32 %v3342, 0.0
        %v3393 = vmax.f32 %v3345, 0.0
        %v3394 = vmax.f32 %v3350, 0.0
        %v3395 = vmax.f32 %v3353, 0.0
        %v3396 = vmax.f32 %v3358, 0.0
        %v3397 = vmax.f32 %v3361, 0.0
        %v3398 = vmax.f32 %v3366, 0.0
        %v3399 = vmax.f32 %v3369, 0.0
        %v3400 = vmax.f32 %v3374, 0.0
        %v3401 = vmax.f32 %v3377, 0.0
        %v3402 = vmax.f32 %v3382, 0.0
        %v3403 = vmax.f32 %v3385, 0.0
        %v3404 = vpack.c.bf16 %v3389, %v3388
        %v3405 = vpack.c.bf16 %v3391, %v3390
        %v3406 = vpack.c.bf16 %v3393, %v3392
        %v3407 = vpack.c.bf16 %v3395, %v3394
        %v3408 = vpack.c.bf16 %v3397, %v3396
        %v3409 = vpack.c.bf16 %v3399, %v3398
        %v3410 = vpack.c.bf16 %v3401, %v3400
        %v3411 = vpack.c.bf16 %v3403, %v3402
        %v3412 = vld [vmem:[#allocation17] sm:$0xf]
        %v3413 = vld [vmem:[#allocation17 + $0x4] sm:$0xf]
        %v3414 = vld [vmem:[#allocation17 + $0x8] sm:$0xf]
        %v3415 = vld [vmem:[#allocation17 + $0xc] sm:$0xf]
        %v3416 = vld [vmem:[#allocation17 + $0x10] sm:$0xf]
        %v3417 = vld [vmem:[#allocation17 + $0x14] sm:$0xf]
        %v3418 = vld [vmem:[#allocation17 + $0x18] sm:$0xf]
        %v3419 = vld [vmem:[#allocation17 + $0x1c] sm:$0xf]
        %v3420 = vld [vmem:[#allocation17 + $0x20] sm:$0xf]
        %v3421 = vld [vmem:[#allocation17 + $0x24] sm:$0xf]
        %v3422 = vld [vmem:[#allocation17 + $0x28] sm:$0xf]
        %v3423 = vld [vmem:[#allocation17 + $0x2c] sm:$0xf]
        %v3424 = vld [vmem:[#allocation17 + $0x30] sm:$0xf]
        %v3425 = vld [vmem:[#allocation17 + $0x34] sm:$0xf]
        %v3426 = vld [vmem:[#allocation17 + $0x38] sm:$0xf]
        %v3427 = vld [vmem:[#allocation17 + $0x3c] sm:$0xf]
        %v3428 = vld [vmem:[%s12] sm:$0x1]
        %v3430 = vlaneseq
        %v3431 = vshrl.u32 %v3430, 7
        %v3432 = vsub.s32 0, %v3431
        %v3433 = vrot.slane %v3428, %v3432
        %v3451 = vunpack.c.l.b16 %v3412
        %v3452 = vunpack.c.l.b16 %v3413
        %v3453 = vunpack.c.l.b16 %v3414
        %v3454 = vunpack.c.l.b16 %v3415
        %v3455 = vunpack.c.l.b16 %v3416
        %v3456 = vunpack.c.l.b16 %v3417
        %v3457 = vunpack.c.l.b16 %v3418
        %v3458 = vunpack.c.l.b16 %v3419
        %v3459 = vunpack.c.l.b16 %v3420
        %v3460 = vunpack.c.l.b16 %v3421
        %v3461 = vunpack.c.l.b16 %v3422
        %v3462 = vunpack.c.l.b16 %v3423
        %v3463 = vunpack.c.l.b16 %v3424
        %v3464 = vunpack.c.l.b16 %v3425
        %v3465 = vunpack.c.l.b16 %v3426
        %v3466 = vunpack.c.l.b16 %v3427
        %v3467 = vpack.c.b16 %v3452, %v3451
        %v3468 = vpack.c.b16 %v3454, %v3453
        %v3469 = vpack.c.b16 %v3456, %v3455
        %v3470 = vpack.c.b16 %v3458, %v3457
        %v3471 = vpack.c.b16 %v3460, %v3459
        %v3472 = vpack.c.b16 %v3462, %v3461
        %v3473 = vpack.c.b16 %v3464, %v3463
        %v3474 = vpack.c.b16 %v3466, %v3465
        %3483 = vmatprep.subr.bf16.mxu0 0
        %3484 = vmatpush1.bf16.msra.mxu0 %v3467
        %3485 = vmatprep.subr.bf16.mxu0 0
        %3486 = vmatpush1.bf16.msra.mxu0 %v3468
        %3487 = vmatprep.subr.bf16.mxu0 0
        %3488 = vmatpush1.bf16.msra.mxu0 %v3469
        %3489 = vmatprep.subr.bf16.mxu0 0
        %3490 = vmatpush1.bf16.msra.mxu0 %v3470
        %3491 = vmatprep.subr.bf16.mxu0 0
        %3492 = vmatpush1.bf16.msra.mxu0 %v3471
        %3493 = vmatprep.subr.bf16.mxu0 0
        %3494 = vmatpush1.bf16.msra.mxu0 %v3472
        %3495 = vmatprep.subr.bf16.mxu0 0
        %3496 = vmatpush1.bf16.msra.mxu0 %v3473
        %3497 = vmatprep.subr.bf16.mxu0 0
        %3498 = vmatpush1.bf16.msra.mxu0 %v3474
        %3499 = vmatprep.subr.bf16.mxu0 0
        %3500 = vmatpush1.bf16.msra.mxu0 0
        %3501 = vmatprep.subr.bf16.mxu0 0
        %3502 = vmatpush1.bf16.msra.mxu0 0
        %3503 = vmatprep.subr.bf16.mxu0 0
        %3504 = vmatpush1.bf16.msra.mxu0 0
        %3505 = vmatprep.subr.bf16.mxu0 0
        %3506 = vmatpush1.bf16.msra.mxu0 0
        %3507 = vmatprep.subr.bf16.mxu0 0
        %3508 = vmatpush1.bf16.msra.mxu0 0
        %3509 = vmatprep.subr.bf16.mxu0 0
        %3510 = vmatpush1.bf16.msra.mxu0 0
        %3511 = vmatprep.subr.bf16.mxu0 0
        %3512 = vmatpush1.bf16.msra.mxu0 0
        %3513 = vmatprep.subr.bf16.mxu0 0
        %3514 = vmatpush1.bf16.msra.mxu0 0
        %3515 = vmatprep.mubr.bf16.mxu0 0
        %3516 = vmatmul.mubr.bf16.gmra.mrb[0].mxu0 %v3404
        %v3517 = vpop.f32.mrb[0].mxu0
        %v3518 = vadd.f32 %v3433, %v3517
        %v3519 = vpop.f32.mrb[0].mxu0
        %v3520 = vpop.f32.mrb[0].mxu0
        %v3521 = vadd.f32 %v3433, %v3520
        %v3522 = vpop.f32.mrb[0].mxu0
        %3523 = vmatprep.mubr.bf16.mxu0 0
        %3524 = vmatmul.mubr.bf16.gmra.mrb[0].mxu0 %v3405
        %v3525 = vpop.f32.mrb[0].mxu0
        %v3526 = vadd.f32 %v3433, %v3525
        %v3527 = vpop.f32.mrb[0].mxu0
        %v3528 = vpop.f32.mrb[0].mxu0
        %v3529 = vadd.f32 %v3433, %v3528
        %v3530 = vpop.f32.mrb[0].mxu0
        %3531 = vmatprep.mubr.bf16.mxu0 0
        %3532 = vmatmul.mubr.bf16.gmra.mrb[0].mxu0 %v3406
        %v3533 = vpop.f32.mrb[0].mxu0
        %v3534 = vadd.f32 %v3433, %v3533
        %v3535 = vpop.f32.mrb[0].mxu0
        %v3536 = vpop.f32.mrb[0].mxu0
        %v3537 = vadd.f32 %v3433, %v3536
        %v3538 = vpop.f32.mrb[0].mxu0
        %3539 = vmatprep.mubr.bf16.mxu0 0
        %3540 = vmatmul.mubr.bf16.gmra.mrb[0].mxu0 %v3407
        %v3541 = vpop.f32.mrb[0].mxu0
        %v3542 = vadd.f32 %v3433, %v3541
        %v3543 = vpop.f32.mrb[0].mxu0
        %v3544 = vpop.f32.mrb[0].mxu0
        %v3545 = vadd.f32 %v3433, %v3544
        %v3546 = vpop.f32.mrb[0].mxu0
        %3547 = vmatprep.mubr.bf16.mxu0 0
        %3548 = vmatmul.mubr.bf16.gmra.mrb[0].mxu0 %v3408
        %v3549 = vpop.f32.mrb[0].mxu0
        %v3550 = vadd.f32 %v3433, %v3549
        %v3551 = vpop.f32.mrb[0].mxu0
        %v3552 = vpop.f32.mrb[0].mxu0
        %v3553 = vadd.f32 %v3433, %v3552
        %v3554 = vpop.f32.mrb[0].mxu0
        %3555 = vmatprep.mubr.bf16.mxu0 0
        %3556 = vmatmul.mubr.bf16.gmra.mrb[0].mxu0 %v3409
        %v3557 = vpop.f32.mrb[0].mxu0
        %v3558 = vadd.f32 %v3433, %v3557
        %v3559 = vpop.f32.mrb[0].mxu0
        %v3560 = vpop.f32.mrb[0].mxu0
        %v3561 = vadd.f32 %v3433, %v3560
        %v3562 = vpop.f32.mrb[0].mxu0
        %3563 = vmatprep.mubr.bf16.mxu0 0
        %3564 = vmatmul.mubr.bf16.gmra.mrb[0].mxu0 %v3410
        %v3565 = vpop.f32.mrb[0].mxu0
        %v3566 = vadd.f32 %v3433, %v3565
        %v3567 = vpop.f32.mrb[0].mxu0
        %v3568 = vpop.f32.mrb[0].mxu0
        %v3569 = vadd.f32 %v3433, %v3568
        %v3570 = vpop.f32.mrb[0].mxu0
        %3571 = vmatprep.mubr.bf16.mxu0 0
        %3572 = vmatmul.mubr.bf16.gmra.mrb[0].mxu0 %v3411
        %v3573 = vpop.f32.mrb[0].mxu0
        %v3574 = vadd.f32 %v3433, %v3573
        %v3575 = vpop.f32.mrb[0].mxu0
        %v3576 = vpop.f32.mrb[0].mxu0
        %v3577 = vadd.f32 %v3433, %v3576
        %v3578 = vpop.f32.mrb[0].mxu0
        %3579 = vdwg.mxu0
        %v3580 = vsub.f32 0.0, %v3518
        %v3581 = vsub.f32 0.0, %v3521
        %v3582 = vsub.f32 0.0, %v3526
        %v3583 = vsub.f32 0.0, %v3529
        %v3584 = vsub.f32 0.0, %v3534
        %v3585 = vsub.f32 0.0, %v3537
        %v3586 = vsub.f32 0.0, %v3542
        %v3587 = vsub.f32 0.0, %v3545
        %v3588 = vsub.f32 0.0, %v3550
        %v3589 = vsub.f32 0.0, %v3553
        %v3590 = vsub.f32 0.0, %v3558
        %v3591 = vsub.f32 0.0, %v3561
        %v3592 = vsub.f32 0.0, %v3566
        %v3593 = vsub.f32 0.0, %v3569
        %v3594 = vsub.f32 0.0, %v3574
        %v3595 = vsub.f32 0.0, %v3577
        %v3596 = vmul.f32 %v3580, 1.442695
        %v3597 = vpow.pop %v3596
        %v3598 = vmul.f32 %v3581, 1.442695
        %v3599 = vpow.pop %v3598
        %v3600 = vmul.f32 %v3582, 1.442695
        %v3601 = vpow.pop %v3600
        %v3602 = vmul.f32 %v3583, 1.442695
        %v3603 = vpow.pop %v3602
        %v3604 = vmul.f32 %v3584, 1.442695
        %v3605 = vpow.pop %v3604
        %v3606 = vmul.f32 %v3585, 1.442695
        %v3607 = vpow.pop %v3606
        %v3608 = vmul.f32 %v3586, 1.442695
        %v3609 = vpow.pop %v3608
        %v3610 = vmul.f32 %v3587, 1.442695
        %v3611 = vpow.pop %v3610
        %v3612 = vmul.f32 %v3588, 1.442695
        %v3613 = vpow.pop %v3612
        %v3614 = vmul.f32 %v3589, 1.442695
        %v3615 = vpow.pop %v3614
        %v3616 = vmul.f32 %v3590, 1.442695
        %v3617 = vpow.pop %v3616
        %v3618 = vmul.f32 %v3591, 1.442695
        %v3619 = vpow.pop %v3618
        %v3620 = vmul.f32 %v3592, 1.442695
        %v3621 = vpow.pop %v3620
        %v3622 = vmul.f32 %v3593, 1.442695
        %v3623 = vpow.pop %v3622
        %v3624 = vmul.f32 %v3594, 1.442695
        %v3625 = vpow.pop %v3624
        %v3626 = vmul.f32 %v3595, 1.442695
        %v3627 = vpow.pop %v3626
        %v3628 = vadd.f32 %v3597, 1.0
        %v3629 = vadd.f32 %v3599, 1.0
        %v3630 = vadd.f32 %v3601, 1.0
        %v3631 = vadd.f32 %v3603, 1.0
        %v3632 = vadd.f32 %v3605, 1.0
        %v3633 = vadd.f32 %v3607, 1.0
        %v3634 = vadd.f32 %v3609, 1.0
        %v3635 = vadd.f32 %v3611, 1.0
        %v3636 = vadd.f32 %v3613, 1.0
        %v3637 = vadd.f32 %v3615, 1.0
        %v3638 = vadd.f32 %v3617, 1.0
        %v3639 = vadd.f32 %v3619, 1.0
        %v3640 = vadd.f32 %v3621, 1.0
        %v3641 = vadd.f32 %v3623, 1.0
        %v3642 = vadd.f32 %v3625, 1.0
        %v3643 = vadd.f32 %v3627, 1.0
        %v3644 = vrcp.pop %v3628
        %v3645 = vrcp.pop %v3629
        %v3646 = vrcp.pop %v3630
        %v3647 = vrcp.pop %v3631
        %v3648 = vrcp.pop %v3632
        %v3649 = vrcp.pop %v3633
        %v3650 = vrcp.pop %v3634
        %v3651 = vrcp.pop %v3635
        %v3652 = vrcp.pop %v3636
        %v3653 = vrcp.pop %v3637
        %v3654 = vrcp.pop %v3638
        %v3655 = vrcp.pop %v3639
        %v3656 = vrcp.pop %v3640
        %v3657 = vrcp.pop %v3641
        %v3658 = vrcp.pop %v3642
        %v3659 = vrcp.pop %v3643
        %3660 = vst [vmem:[%s640] sm:$0xff] %v3644
        %3661 = vst [vmem:[%s640 + $0x8] sm:$0xff] %v3645
        %3662 = vst [vmem:[%s640 + $0x10] sm:$0xff] %v3646
        %3663 = vst [vmem:[%s640 + $0x18] sm:$0xff] %v3647
        %3664 = vst [vmem:[%s640 + $0x20] sm:$0xff] %v3648
        %3665 = vst [vmem:[%s640 + $0x28] sm:$0xff] %v3649
        %3666 = vst [vmem:[%s640 + $0x30] sm:$0xff] %v3650
        %3667 = vst [vmem:[%s640 + $0x38] sm:$0xff] %v3651
        %3668 = vst [vmem:[%s640 + $0x40] sm:$0xff] %v3652
        %3669 = vst [vmem:[%s640 + $0x48] sm:$0xff] %v3653
        %3670 = vst [vmem:[%s640 + $0x50] sm:$0xff] %v3654
        %3671 = vst [vmem:[%s640 + $0x58] sm:$0xff] %v3655
        %3672 = vst [vmem:[%s640 + $0x60] sm:$0xff] %v3656
        %3673 = vst [vmem:[%s640 + $0x68] sm:$0xff] %v3657
        %3674 = vst [vmem:[%s640 + $0x70] sm:$0xff] %v3658
        %3675 = vst [vmem:[%s640 + $0x78] sm:$0xff] %v3659
        %s3676 = sand.u32 %s333, 1
        %s3677 = scalar_lea.sflag [#allocation4], %s3676
        %s3678 = sand.u32 %s333, 1
        %s3679 = smul.addr %s3678, 128
        %s3680 = scalar_lea.vmem [#allocation19], %s3679
        // Predicated region
        $region113: #{tpu_custom_call.1} parent=71 // pred_check
          %p3681 = pneg %p343
        $region114: #{tpu_custom_call.1} parent=71 // pred_check_branch
          %3683 = sbr.rel (%p3681) target = $region116
        $region115: #{tpu_custom_call.1} parent=71 // pred_region
          %s3684 = smul.u32 16, %s37
          %s3686 = ssub.s32 2048, 2048
          %3687 = vsyncadd %s3677, %s3686
          %s3688 = smul.addr %s3684, 128
          %s3689 = scalar_lea.hbm %s13, %s3688
          %s3690 = sshll.u32 %s3680, 4
          %s3691 = int_to_ptr.vmem [resolvable:$true] %s3690
          %3696 = dma.vmem_to_hbm [thread:$0]  %s3691, 2048, %s3689, %s3677, 128, 128, 8
        $region116: #{tpu_custom_call.1} parent=71 // pred_fallthru
          _
      $region72: #{tpu_custom_call.1} parent=5 // pred_fallthru
        _
      %p3697 = scmp.le.s32.totalorder 2, %s32
      // Predicated region
      $region117: #{tpu_custom_call.1} parent=5 // pred_check
        %p3698 = pneg %p3697
      $region118: #{tpu_custom_call.1} parent=5 // pred_check_branch
        %3700 = sbr.rel (%p3698) target = $region120
      $region119: #{tpu_custom_call.1} parent=5 // pred_region
        %s3701 = ssub.s32 %s32, 2
        // Predicated region
        $region121: #{tpu_custom_call.1} parent=119 // pred_check
          %p3702 = pneg %p349
        $region122: #{tpu_custom_call.1} parent=119 // pred_check_branch
          %3704 = sbr.rel (%p3702) target = $region124
        $region123: #{tpu_custom_call.1} parent=119 // pred_region
          %s3705 = sand.u32 %s334, 1
          %s3706 = scalar_lea.sflag [#allocation4], %s3705
          %s3707 = sand.u32 %s334, 1
          %s3708 = smul.addr %s3707, 128
          %s3709 = scalar_lea.vmem [#allocation19], %s3708
          %3710 = dma.done %s3706, 2048
        $region124: #{tpu_custom_call.1} parent=119 // pred_fallthru
          _
      $region120: #{tpu_custom_call.1} parent=5 // pred_fallthru
        _
    $region6: #{tpu_custom_call.1} parent=1 // loop_footer
      %s36 = sadd.s32 1, %s32
    $region7: #{tpu_custom_call.1} parent=1 // loop_footer_branch
      %31 = sbr.rel target = $region3
    $region8: #{tpu_custom_call.1} parent=1 // loop_exit
      _
    %3711 = vsyncpa [#allocation3], 1
    %s3712 = scalar_lea.sflag [#allocation3], 1
    %3713 = vsyncpa %s3712, 1
    %3714 = vsyncpa [#allocation6], 1
    %s3715 = scalar_lea.sflag [#allocation6], 1
    %3716 = vsyncpa %s3715, 1
    %3717 = vsyncpa [#allocation9], 1
    %3718 = vsyncpa [#allocation12], 1
    %3719 = vsyncpa [#allocation15], 1
    %3720 = vsyncpa [#allocation18], 1
    %3721 = vsyncpa [#allocation4], 1
    %s3722 = scalar_lea.sflag [#allocation4], 1
    %3723 = vsyncpa %s3722, 1

</llo_original>
